<compile_context>
chip_gen: v7x
topology: tpu7x:2x2x1
jax: 0.10.0
libtpu: 0.0.40
codegen_flags: <defaults>
</compile_context>

<pallas_src>
import functools

import jax
import jax.numpy as jnp
from jax import lax
from jax.experimental import pallas as pl
from jax.experimental.pallas import tpu as pltpu

F32 = jnp.float32
EPS = 1e-5


def _ln(z, g, b):
    mu = jnp.mean(z, axis=-1, keepdims=True)
    var = jnp.mean((z - mu) ** 2, axis=-1, keepdims=True)
    return (z - mu) * lax.rsqrt(var + EPS) * g + b


# ------------------------------- fused kernel --------------------------------------
def _fused_kernel(xcol1_ref, w1c_ref, b1c_ref, w2c_ref, b2c_ref,
                  ln1g_ref, ln1b_ref, ln2g_ref, ln2b_ref,
                  wkvr_ref, wo_ref, wc_ref, wvc_ref,
                  lng_ref, lnb_ref, hw1_ref, hb1_ref, hw2_ref, hb2_ref,
                  hw3_ref, hb3_ref,
                  out_ref,
                  *, T, C, L, dff, K2, H2):
    M = out_ref.shape[0]                       # rows = GB * T, batch-major (b*T + t)

    # per-row time index (hoisted once; masks are derived from it)
    ti = lax.broadcasted_iota(jnp.int32, (M, 1), 0)
    row_t = (ti & (T - 1)) if (T & (T - 1)) == 0 else (ti % T)
    row0 = row_t == 0

    def tshift_down(v, d, fill):
        # out[i] = v[i - d] within the same batch block, else `fill`
        return jnp.where(row_t >= d, pltpu.roll(v, shift=d, axis=0), fill)

    def tshift_up(v, d, fill):
        # out[i] = v[i + d] within the same batch block, else `fill`
        return jnp.where(row_t < T - d, pltpu.roll(v, shift=(M - d) % M, axis=0), fill)

    # ---- conv1 (BN folded) + ReLU: one MXU push on the wrapper-built im2col -------
    y1 = jnp.dot(xcol1_ref[...], w1c_ref[...], preferred_element_type=F32) + b1c_ref[...]
    y1 = jnp.maximum(y1, 0.0)                                          # (M, H2)

    # ---- conv2 (BN folded) + ReLU: im2col built in-register via sublane rolls -----
    pad2 = (K2 - 1) // 2
    cols = []
    for k in range(K2):
        off = k - pad2
        if off == 0:
            cols.append(y1)
        elif off < 0:
            cols.append(tshift_down(y1, -off, 0.0))
        else:
            cols.append(tshift_up(y1, off, 0.0))
    xcol2 = jnp.concatenate(cols, axis=-1)                             # (M, K2*H2)
    x = jnp.dot(xcol2, w2c_ref[...], preferred_element_type=F32) + b2c_ref[...]
    x = jnp.maximum(x, 0.0)                                            # (M, C)

    # layer-boundary shift state: only rows with row_t==0 are ever read from it
    state_rows = jnp.zeros((M, C), F32)

    n_scan = max(1, (T - 1).bit_length())      # ceil(log2(T)) scan stages

    for l in range(L):                         # static layer unroll
        # ----------------------------- time mixing --------------------------------
        x_tm = _ln(x, ln1g_ref[l], ln1b_ref[l])
        x_sh = jnp.where(row0, state_rows, pltpu.roll(x_tm, shift=1, axis=0))
        # [k|v|r] = mix(x_tm, x_sh, m) @ [wk|wv|wr]  -> ONE K=2C MXU push
        kvr = jnp.dot(jnp.concatenate([x_sh, x_tm], axis=-1), wkvr_ref[l],
                      preferred_element_type=F32)                      # (M, 3C)
        k = kvr[:, :C]
        v = kvr[:, C:2 * C]
        r = kvr[:, 2 * C:]

        # WKV recurrence ws_t = a_t * ws_{t-1} + b_t  as a log2(T) associative scan.
        a = jax.nn.sigmoid(k)                  # decay (EUP on full blocks, hoisted)
        b = (1.0 - a) * v
        d = 1
        for s in range(n_scan):
            b = a * tshift_down(b, d, 0.0) + b
            if s + 1 < n_scan:                 # `a` is dead after the last stage
                a = a * tshift_down(a, d, 1.0)
            d *= 2
        wkv = jax.nn.sigmoid(r) * b + 0.1 * v

        mu = jnp.mean(wkv, axis=-1, keepdims=True)
        var = jnp.mean((wkv - mu) ** 2, axis=-1, keepdims=True)
        wkv = (wkv - mu) * lax.rsqrt(var + EPS)                        # F.layer_norm (no affine)
        x = x + jnp.dot(wkv, wo_ref[l], preferred_element_type=F32)    # time-mix residual

        # ---------------------------- channel mixing ------------------------------
        x_cm = _ln(x, ln2g_ref[l], ln2b_ref[l])
        x_shc = jnp.where(row0, state_rows, pltpu.roll(x_cm, shift=1, axis=0))
        # [k_c|r_c] = mix(...) @ [wkc|wrc]  -> ONE K=2C MXU push
        krc = jnp.dot(jnp.concatenate([x_shc, x_cm], axis=-1), wc_ref[l],
                      preferred_element_type=F32)                      # (M, dff + C)
        kk = jnp.maximum(krc[:, :dff], 0.0)
        vk = jnp.dot(kk * kk, wvc_ref[l], preferred_element_type=F32)  # (M, C)
        x = x + jax.nn.sigmoid(krc[:, dff:]) * vk                      # channel-mix residual

        # new state: row b*T picks up x[b*T + T - 1] (this layer's last timestep)
        state_rows = x if T == 1 else pltpu.roll(x, shift=M - (T - 1), axis=0)

    # ---- LayerNorm + MLP head (final N=1 matmul done as a VPU lane-reduce) --------
    xh = _ln(x, lng_ref[...], lnb_ref[...])
    h = jnp.maximum(jnp.dot(xh, hw1_ref[...], preferred_element_type=F32) + hb1_ref[...], 0.0)
    h = jnp.maximum(jnp.dot(h, hw2_ref[...], preferred_element_type=F32) + hb2_ref[...], 0.0)
    out_ref[...] = jnp.sum(h * hw3_ref[...], axis=-1, keepdims=True) + hb3_ref[...]


# ------------------------- one-time parameter packing --------------------------------
def pack_params(params):
    """BN folding + weight concatenation, done ONCE outside the per-call path."""
    c1, c2, hp = params["conv1"], params["conv2"], params["head"]
    blocks = params["blocks"]

    def fold(cp):  # fold eval-mode BatchNorm into the conv weight/bias
        s = cp["gamma"] * lax.rsqrt(cp["var"] + EPS)                   # (1, Cout)
        wf = (cp["w"] * s).reshape(-1, cp["w"].shape[-1])              # (K*Cin, Cout)
        bf = (cp["b"] - cp["mean"]) * s + cp["beta"]                   # (1, Cout)
        return wf, bf

    w1c, b1c = fold(c1)
    w2c, b2c = fold(c2)

    def mixcat(ws, ms):
        # [x_sh | x] @ [[ (1-m)*W ],[ m*W ]]  ==  mix(x, x_sh, m) @ W   (stacked along K)
        top = jnp.concatenate([(1.0 - m).T * w for w, m in zip(ws, ms)], axis=1)
        bot = jnp.concatenate([m.T * w for w, m in zip(ws, ms)], axis=1)
        return jnp.concatenate([top, bot], axis=0)                     # (2C, sum Nout)

    stk = lambda fn: jnp.stack([fn(p) for p in blocks], axis=0)
    return dict(
        w1c=w1c, b1c=b1c, w2c=w2c, b2c=b2c,
        ln1g=stk(lambda p: p["ln1g"]), ln1b=stk(lambda p: p["ln1b"]),
        ln2g=stk(lambda p: p["ln2g"]), ln2b=stk(lambda p: p["ln2b"]),
        wkvr=stk(lambda p: mixcat([p["wk"], p["wv"], p["wr"]],
                                  [p["tmk"], p["tmv"], p["tmr"]])),    # (L, 2C, 3C)
        wo=stk(lambda p: p["wo"]),
        wc=stk(lambda p: mixcat([p["wkc"], p["wrc"]],
                                [p["cmk"], p["cmr"]])),                # (L, 2C, dff+C)
        wvc=stk(lambda p: p["wvc"]),
        lng=hp["lng"], lnb=hp["lnb"],
        hw1=hp["w1"], hb1=hp["b1"], hw2=hp["w2"], hb2=hp["b2"],
        hw3=hp["w3"].reshape(1, -1), hb3=hp["b3"])


# --------------------------------- Full forward -------------------------------------
def rwkv_forward(x_b1t, packed, *, num_groups=1):
    """x_b1t: (B, 1, T) PPG signal. `num_groups=2` splits the batch over v7x's 2 cores."""
    B, _, T = x_b1t.shape
    L = packed["ln1g"].shape[0]
    C = packed["ln1g"].shape[-1]
    dff = packed["wvc"].shape[1]
    K1 = packed["w1c"].shape[0]            # Cin == 1
    H2 = packed["w1c"].shape[1]
    K2 = packed["w2c"].shape[0] // H2

    if num_groups < 1 or B % num_groups != 0:
        num_groups = 1
    GB = B // num_groups
    M = GB * T

    # conv1 im2col (per-batch zero padding; Cin == 1), laid out batch-major (B*T, K1)
    pad1 = (K1 - 1) // 2
    xp = jnp.pad(x_b1t[:, 0, :], ((0, 0), (pad1, pad1)))
    xcol1 = jnp.stack([xp[:, k:k + T] for k in range(K1)], axis=-1).reshape(B * T, K1)

    args = (xcol1, packed["w1c"], packed["b1c"], packed["w2c"], packed["b2c"],
            packed["ln1g"], packed["ln1b"], packed["ln2g"], packed["ln2b"],
            packed["wkvr"], packed["wo"], packed["wc"], packed["wvc"],
            packed["lng"], packed["lnb"], packed["hw1"], packed["hb1"],
            packed["hw2"], packed["hb2"], packed["hw3"], packed["hb3"])

    def full_spec(a):
        zeros = (0,) * a.ndim
        return pl.BlockSpec(a.shape, lambda g, _z=zeros: _z)

    in_specs = ([pl.BlockSpec((M, K1), lambda g: (g, 0))]
                + [full_spec(a) for a in args[1:]])
    out_specs = pl.BlockSpec((M, 1), lambda g: (g, 0))

    kernel = functools.partial(_fused_kernel, T=T, C=C, L=L, dff=dff, K2=K2, H2=H2)
    out = pl.pallas_call(
        kernel,
        out_shape=jax.ShapeDtypeStruct((B * T, 1), F32),
        grid=(num_groups,),
        in_specs=in_specs,
        out_specs=out_specs,
        compiler_params=pltpu.CompilerParams(
            dimension_semantics=("parallel",)),          # batch groups -> v7x 2 cores
    )(*args)

    return out.reshape(B, T)[:, None, :]                 # (B, 1, T)


# ------------------------------- Parameter init --------------------------------------
def init_params(key, hidden=32, num_layers=2):
    d_ff = 4 * hidden
    h2, h4 = hidden // 2, hidden // 4
    keys = iter(jax.random.split(key, 512))
    nk = lambda: next(keys)
    w = lambda shape, s=0.05: jax.random.normal(nk(), shape, F32) * s
    u = lambda shape, lo, hi: jax.random.uniform(nk(), shape, F32, lo, hi)

    def conv_p(K, cin, cout):
        return dict(w=w((K, cin, cout), 0.1), b=w((1, cout)),
                    gamma=1.0 + w((1, cout)), beta=w((1, cout)),
                    mean=w((1, cout), 0.1), var=u((1, cout), 0.5, 1.5))

    def block_p(C):
        return dict(
            ln1g=1.0 + w((1, C)), ln1b=w((1, C)),
            ln2g=1.0 + w((1, C)), ln2b=w((1, C)),
            tmk=u((1, C), 0.2, 0.8), tmv=u((1, C), 0.2, 0.8), tmr=u((1, C), 0.2, 0.8),
            cmk=u((1, C), 0.2, 0.8), cmr=u((1, C), 0.2, 0.8),
            wk=w((C, C)), wv=w((C, C)), wr=w((C, C)), wo=w((C, C)),
            wkc=w((C, d_ff)), wrc=w((C, C)), wvc=w((d_ff, C)))

    head_p = dict(lng=1.0 + w((1, hidden)), lnb=w((1, hidden)),
                  w1=w((hidden, h2)), b1=w((1, h2)),
                  w2=w((h2, h4)), b2=w((1, h4)),
                  w3=w((h4, 1)), b3=w((1, 1)))

    return dict(conv1=conv_p(7, 1, h2), conv2=conv_p(5, h2, hidden),
                blocks=[block_p(hidden) for _ in range(num_layers)], head=head_p)


# ------------------------------ Pure-JAX reference -----------------------------------
def ref_forward(x_b1t, params):
    B, _, T = x_b1t.shape
    HI = lax.Precision.HIGHEST
    x = jnp.transpose(x_b1t, (0, 2, 1))

    def conv_ref(z, cp):
        K = cp["w"].shape[0]
        pad = (K - 1) // 2
        zp = jnp.pad(z, ((0, 0), (pad, pad), (0, 0)))
        acc = sum(jnp.einsum("btc,cd->btd", zp[:, k:k + T, :], cp["w"][k], precision=HI)
                  for k in range(K)) + cp["b"]
        y = (acc - cp["mean"]) * lax.rsqrt(cp["var"] + EPS) * cp["gamma"] + cp["beta"]
        return jnp.maximum(y, 0.0)

    x = conv_ref(x, params["conv1"])
    x = conv_ref(x, params["conv2"])
    H = x.shape[-1]

    def ln(z, g, b):
        mu = z.mean(-1, keepdims=True)
        var = ((z - mu) ** 2).mean(-1, keepdims=True)
        return (z - mu) * lax.rsqrt(var + EPS) * g + b

    mm = lambda z, w: jnp.dot(z, w, precision=HI)
    mix = lambda a, s, m: a * m + s * (1.0 - m)

    state = jnp.zeros((B, H), F32)
    for p in params["blocks"]:
        x_tm = ln(x, p["ln1g"], p["ln1b"])
        x_sh = jnp.concatenate([state[:, None], x_tm[:, :-1]], axis=1)
        k = mm(mix(x_tm, x_sh, p["tmk"]), p["wk"])
        v = mm(mix(x_tm, x_sh, p["tmv"]), p["wv"])
        r = mm(mix(x_tm, x_sh, p["tmr"]), p["wr"])

        def step(ws, kvr):
            kt, vt, rt = kvr
            d = jax.nn.sigmoid(kt)
            ws = d * ws + (1 - d) * vt
            return ws, jax.nn.sigmoid(rt) * ws + 0.1 * vt

        _, wkv = lax.scan(step, jnp.zeros((B, H), F32),
                          (k.transpose(1, 0, 2), v.transpose(1, 0, 2), r.transpose(1, 0, 2)))
        wkv = wkv.transpose(1, 0, 2)
        mu = wkv.mean(-1, keepdims=True)
        var = ((wkv - mu) ** 2).mean(-1, keepdims=True)
        wkv = (wkv - mu) * lax.rsqrt(var + EPS)
        x = x + mm(wkv, p["wo"])
        x_cm = ln(x, p["ln2g"], p["ln2b"])
        x_sh_c = jnp.concatenate([state[:, None], x_cm[:, :-1]], axis=1)
        k_c = mm(mix(x_cm, x_sh_c, p["cmk"]), p["wkc"])
        r_c = mm(mix(x_cm, x_sh_c, p["cmr"]), p["wrc"])
        vk = mm(jnp.maximum(k_c, 0.0) ** 2, p["wvc"])
        x = x + jax.nn.sigmoid(r_c) * vk
        state = x[:, -1]

    hp = params["head"]
    x = ln(x, hp["lng"], hp["lnb"])
    h = jnp.maximum(mm(x, hp["w1"]) + hp["b1"], 0.0)
    h = jnp.maximum(mm(h, hp["w2"]) + hp["b2"], 0.0)
    o = mm(h, hp["w3"]) + hp["b3"]
    return jnp.transpose(o, (0, 2, 1))


if __name__ == "__main__":
    key = jax.random.PRNGKey(0)
    pkey, xkey = jax.random.split(key)
    B, T, hidden, num_layers = 2, 16, 32, 2
    params = init_params(pkey, hidden=hidden, num_layers=num_layers)
    x = jax.random.normal(xkey, (B, 1, T), F32)          # PyTorch-style (B, C=1, L)

    packed = pack_params(params)                         # once, off the per-call path
    fwd = jax.jit(rwkv_forward)
    out = jax.block_until_ready(fwd(x, packed))

    assert out.shape == (B, 1, T), out.shape
    assert bool(jnp.all(jnp.isfinite(out)))

    ref = ref_forward(x, params)
    max_err = float(jnp.max(jnp.abs(out - ref)))
    assert max_err < 2e-3, f"mismatch vs reference: max_err={max_err}"

    print("KERNEL_OK")
</pallas_src>

<mosaic_0001>
module attributes {stable_mosaic.version = 11 : i64} {
  func.func @_fused_kernel(%arg0: i32, %arg1: memref<32x7xf32, #tpu.memory_space<vmem>>, %arg2: memref<7x16xf32, #tpu.memory_space<vmem>>, %arg3: memref<1x16xf32, #tpu.memory_space<vmem>>, %arg4: memref<80x32xf32, #tpu.memory_space<vmem>>, %arg5: memref<1x32xf32, #tpu.memory_space<vmem>>, %arg6: memref<2x1x32xf32, #tpu.memory_space<vmem>>, %arg7: memref<2x1x32xf32, #tpu.memory_space<vmem>>, %arg8: memref<2x1x32xf32, #tpu.memory_space<vmem>>, %arg9: memref<2x1x32xf32, #tpu.memory_space<vmem>>, %arg10: memref<2x64x96xf32, #tpu.memory_space<vmem>>, %arg11: memref<2x32x32xf32, #tpu.memory_space<vmem>>, %arg12: memref<2x64x160xf32, #tpu.memory_space<vmem>>, %arg13: memref<2x128x32xf32, #tpu.memory_space<vmem>>, %arg14: memref<1x32xf32, #tpu.memory_space<vmem>>, %arg15: memref<1x32xf32, #tpu.memory_space<vmem>>, %arg16: memref<32x16xf32, #tpu.memory_space<vmem>>, %arg17: memref<1x16xf32, #tpu.memory_space<vmem>>, %arg18: memref<16x8xf32, #tpu.memory_space<vmem>>, %arg19: memref<1x8xf32, #tpu.memory_space<vmem>>, %arg20: memref<1x8xf32, #tpu.memory_space<vmem>>, %arg21: memref<1x1xf32, #tpu.memory_space<vmem>>, %arg22: memref<32x1xf32, #tpu.memory_space<vmem>>) attributes {dimension_semantics = [#tpu.dimension_semantics<parallel>], iteration_bounds = array<i64: 1>, scalar_prefetch = 0 : i64, scratch_operands = 0 : i64, tpu.core_type = #tpu.core_type<tc>, window_params = [{transform_indices = @transform_0, window_bounds = array<i64: 32, 7>}, {pipeline_mode = #tpu.pipeline_mode<synchronous>, transform_indices = @transform_1, window_bounds = array<i64: 7, 16>}, {pipeline_mode = #tpu.pipeline_mode<synchronous>, transform_indices = @transform_2, window_bounds = array<i64: 1, 16>}, {pipeline_mode = #tpu.pipeline_mode<synchronous>, transform_indices = @transform_3, window_bounds = array<i64: 80, 32>}, {pipeline_mode = #tpu.pipeline_mode<synchronous>, transform_indices = @transform_4, window_bounds = array<i64: 1, 32>}, {pipeline_mode = #tpu.pipeline_mode<synchronous>, transform_indices = @transform_5, window_bounds = array<i64: 2, 1, 32>}, {pipeline_mode = #tpu.pipeline_mode<synchronous>, transform_indices = @transform_6, window_bounds = array<i64: 2, 1, 32>}, {pipeline_mode = #tpu.pipeline_mode<synchronous>, transform_indices = @transform_7, window_bounds = array<i64: 2, 1, 32>}, {pipeline_mode = #tpu.pipeline_mode<synchronous>, transform_indices = @transform_8, window_bounds = array<i64: 2, 1, 32>}, {pipeline_mode = #tpu.pipeline_mode<synchronous>, transform_indices = @transform_9, window_bounds = array<i64: 2, 64, 96>}, {pipeline_mode = #tpu.pipeline_mode<synchronous>, transform_indices = @transform_10, window_bounds = array<i64: 2, 32, 32>}, {pipeline_mode = #tpu.pipeline_mode<synchronous>, transform_indices = @transform_11, window_bounds = array<i64: 2, 64, 160>}, {pipeline_mode = #tpu.pipeline_mode<synchronous>, transform_indices = @transform_12, window_bounds = array<i64: 2, 128, 32>}, {pipeline_mode = #tpu.pipeline_mode<synchronous>, transform_indices = @transform_13, window_bounds = array<i64: 1, 32>}, {pipeline_mode = #tpu.pipeline_mode<synchronous>, transform_indices = @transform_14, window_bounds = array<i64: 1, 32>}, {pipeline_mode = #tpu.pipeline_mode<synchronous>, transform_indices = @transform_15, window_bounds = array<i64: 32, 16>}, {pipeline_mode = #tpu.pipeline_mode<synchronous>, transform_indices = @transform_16, window_bounds = array<i64: 1, 16>}, {pipeline_mode = #tpu.pipeline_mode<synchronous>, transform_indices = @transform_17, window_bounds = array<i64: 16, 8>}, {pipeline_mode = #tpu.pipeline_mode<synchronous>, transform_indices = @transform_18, window_bounds = array<i64: 1, 8>}, {pipeline_mode = #tpu.pipeline_mode<synchronous>, transform_indices = @transform_19, window_bounds = array<i64: 1, 8>}, {pipeline_mode = #tpu.pipeline_mode<synchronous>, transform_indices = @transform_20, window_bounds = array<i64: 1, 1>}, {transform_indices = @transform_21, window_bounds = array<i64: 32, 1>}]} {
    %0 = tpu.iota {dimensions = array<i32: 0>} : vector<32x1xi32>
    %c15_i32 = arith.constant 15 : i32
    %1 = vector.broadcast %c15_i32 : i32 to vector<32x1xi32>
    %2 = arith.andi %0, %1 : vector<32x1xi32>
    %c0_i32 = arith.constant 0 : i32
    %3 = vector.broadcast %c0_i32 : i32 to vector<32x1xi32>
    %4 = arith.cmpi eq, %2, %3 : vector<32x1xi32>
    %c0 = arith.constant 0 : index
    %c0_0 = arith.constant 0 : index
    %5 = vector.load %arg1[%c0, %c0_0] : memref<32x7xf32, #tpu.memory_space<vmem>>, vector<32x7xf32>
    %c0_1 = arith.constant 0 : index
    %c0_2 = arith.constant 0 : index
    %6 = vector.load %arg2[%c0_1, %c0_2] : memref<7x16xf32, #tpu.memory_space<vmem>>, vector<7x16xf32>
    %cst = arith.constant dense<0.000000e+00> : vector<32x16xf32>
    %7 = tpu.matmul %5, %6, %cst {dimension_numbers = #tpu.dot_dimension_numbers<[1], [0], [0], [1], [0, 0, 1, 1], [], []>} : vector<32x7xf32>, vector<7x16xf32>, vector<32x16xf32> -> vector<32x16xf32>
    %c0_3 = arith.constant 0 : index
    %c0_4 = arith.constant 0 : index
    %8 = vector.load %arg3[%c0_3, %c0_4] : memref<1x16xf32, #tpu.memory_space<vmem>>, vector<1x16xf32>
    %9 = vector.broadcast %8 : vector<1x16xf32> to vector<32x16xf32>
    %10 = arith.addf %7, %9 : vector<32x16xf32>
    %cst_5 = arith.constant 0.000000e+00 : f32
    %11 = vector.broadcast %cst_5 : f32 to vector<32x16xf32>
    %12 = arith.maximumf %10, %11 : vector<32x16xf32>
    %c2_i32 = arith.constant 2 : i32
    %13 = vector.broadcast %c2_i32 : i32 to vector<32x1xi32>
    %14 = arith.cmpi sge, %2, %13 : vector<32x1xi32>
    %c2_i32_6 = arith.constant 2 : i32
    %15 = tpu.dynamic_rotate %12 by %c2_i32_6 dim 0 : vector<32x16xf32>, i32 -> vector<32x16xf32>
    %cst_7 = arith.constant 0.000000e+00 : f32
    %16 = vector.shape_cast %14 : vector<32x1xi1> to vector<32x1xi1>
    %17 = vector.broadcast %16 : vector<32x1xi1> to vector<32x16xi1>
    %18 = vector.broadcast %cst_7 : f32 to vector<32x16xf32>
    %19 = arith.select %17, %15, %18 : vector<32x16xi1>, vector<32x16xf32>
    %c1_i32 = arith.constant 1 : i32
    %20 = vector.broadcast %c1_i32 : i32 to vector<32x1xi32>
    %21 = arith.cmpi sge, %2, %20 : vector<32x1xi32>
    %c1_i32_8 = arith.constant 1 : i32
    %22 = tpu.dynamic_rotate %12 by %c1_i32_8 dim 0 : vector<32x16xf32>, i32 -> vector<32x16xf32>
    %cst_9 = arith.constant 0.000000e+00 : f32
    %23 = vector.shape_cast %21 : vector<32x1xi1> to vector<32x1xi1>
    %24 = vector.broadcast %23 : vector<32x1xi1> to vector<32x16xi1>
    %25 = vector.broadcast %cst_9 : f32 to vector<32x16xf32>
    %26 = arith.select %24, %22, %25 : vector<32x16xi1>, vector<32x16xf32>
    %c15_i32_10 = arith.constant 15 : i32
    %27 = vector.broadcast %c15_i32_10 : i32 to vector<32x1xi32>
    %28 = arith.cmpi slt, %2, %27 : vector<32x1xi32>
    %c31_i32 = arith.constant 31 : i32
    %29 = tpu.dynamic_rotate %12 by %c31_i32 dim 0 : vector<32x16xf32>, i32 -> vector<32x16xf32>
    %cst_11 = arith.constant 0.000000e+00 : f32
    %30 = vector.shape_cast %28 : vector<32x1xi1> to vector<32x1xi1>
    %31 = vector.broadcast %30 : vector<32x1xi1> to vector<32x16xi1>
    %32 = vector.broadcast %cst_11 : f32 to vector<32x16xf32>
    %33 = arith.select %31, %29, %32 : vector<32x16xi1>, vector<32x16xf32>
    %c14_i32 = arith.constant 14 : i32
    %34 = vector.broadcast %c14_i32 : i32 to vector<32x1xi32>
    %35 = arith.cmpi slt, %2, %34 : vector<32x1xi32>
    %c30_i32 = arith.constant 30 : i32
    %36 = tpu.dynamic_rotate %12 by %c30_i32 dim 0 : vector<32x16xf32>, i32 -> vector<32x16xf32>
    %cst_12 = arith.constant 0.000000e+00 : f32
    %37 = vector.shape_cast %35 : vector<32x1xi1> to vector<32x1xi1>
    %38 = vector.broadcast %37 : vector<32x1xi1> to vector<32x16xi1>
    %39 = vector.broadcast %cst_12 : f32 to vector<32x16xf32>
    %40 = arith.select %38, %36, %39 : vector<32x16xi1>, vector<32x16xf32>
    %41 = tpu.concatenate %19, %26, %12, %33, %40 in 1 : vector<32x16xf32>, vector<32x16xf32>, vector<32x16xf32>, vector<32x16xf32>, vector<32x16xf32> -> vector<32x80xf32>
    %c0_13 = arith.constant 0 : index
    %c0_14 = arith.constant 0 : index
    %42 = vector.load %arg4[%c0_13, %c0_14] : memref<80x32xf32, #tpu.memory_space<vmem>>, vector<80x32xf32>
    %cst_15 = arith.constant dense<0.000000e+00> : vector<32x32xf32>
    %43 = tpu.matmul %41, %42, %cst_15 {dimension_numbers = #tpu.dot_dimension_numbers<[1], [0], [0], [1], [0, 0, 1, 1], [], []>} : vector<32x80xf32>, vector<80x32xf32>, vector<32x32xf32> -> vector<32x32xf32>
    %c0_16 = arith.constant 0 : index
    %c0_17 = arith.constant 0 : index
    %44 = vector.load %arg5[%c0_16, %c0_17] : memref<1x32xf32, #tpu.memory_space<vmem>>, vector<1x32xf32>
    %45 = vector.broadcast %44 : vector<1x32xf32> to vector<32x32xf32>
    %46 = arith.addf %43, %45 : vector<32x32xf32>
    %cst_18 = arith.constant 0.000000e+00 : f32
    %47 = vector.broadcast %cst_18 : f32 to vector<32x32xf32>
    %48 = arith.maximumf %46, %47 : vector<32x32xf32>
    %cst_19 = arith.constant 0.000000e+00 : f32
    %49 = vector.broadcast %cst_19 : f32 to vector<32x32xf32>
    %c0_20 = arith.constant 0 : index
    %c0_21 = arith.constant 0 : index
    %c0_22 = arith.constant 0 : index
    %50 = vector.load %arg6[%c0_20, %c0_21, %c0_22] : memref<2x1x32xf32, #tpu.memory_space<vmem>>, vector<1x1x32xf32>
    %51 = vector.shape_cast %50 : vector<1x1x32xf32> to vector<1x32xf32>
    %c0_23 = arith.constant 0 : index
    %c0_24 = arith.constant 0 : index
    %c0_25 = arith.constant 0 : index
    %52 = vector.load %arg7[%c0_23, %c0_24, %c0_25] : memref<2x1x32xf32, #tpu.memory_space<vmem>>, vector<1x1x32xf32>
    %53 = vector.shape_cast %52 : vector<1x1x32xf32> to vector<1x32xf32>
    %cst_26 = arith.constant dense<0.000000e+00> : vector<32xf32>
    %54 = vector.multi_reduction <add>, %48, %cst_26 [1] : vector<32x32xf32> to vector<32xf32>
    %55 = vector.shape_cast %54 : vector<32xf32> to vector<32x1xf32>
    %cst_27 = arith.constant 3.200000e+01 : f32
    %56 = vector.broadcast %cst_27 : f32 to vector<32x1xf32>
    %57 = arith.divf %55, %56 : vector<32x1xf32>
    %58 = vector.broadcast %57 : vector<32x1xf32> to vector<32x32xf32>
    %59 = arith.subf %48, %58 : vector<32x32xf32>
    %60 = arith.mulf %59, %59 : vector<32x32xf32>
    %cst_28 = arith.constant dense<0.000000e+00> : vector<32xf32>
    %61 = vector.multi_reduction <add>, %60, %cst_28 [1] : vector<32x32xf32> to vector<32xf32>
    %62 = vector.shape_cast %61 : vector<32xf32> to vector<32x1xf32>
    %cst_29 = arith.constant 3.200000e+01 : f32
    %63 = vector.broadcast %cst_29 : f32 to vector<32x1xf32>
    %64 = arith.divf %62, %63 : vector<32x1xf32>
    %65 = vector.broadcast %57 : vector<32x1xf32> to vector<32x32xf32>
    %66 = arith.subf %48, %65 : vector<32x32xf32>
    %cst_30 = arith.constant 9.99999974E-6 : f32
    %67 = vector.broadcast %cst_30 : f32 to vector<32x1xf32>
    %68 = arith.addf %64, %67 : vector<32x1xf32>
    %69 = math.rsqrt %68 : vector<32x1xf32>
    %70 = vector.broadcast %69 : vector<32x1xf32> to vector<32x32xf32>
    %71 = arith.mulf %66, %70 : vector<32x32xf32>
    %72 = vector.broadcast %51 : vector<1x32xf32> to vector<32x32xf32>
    %73 = arith.mulf %71, %72 : vector<32x32xf32>
    %74 = vector.broadcast %53 : vector<1x32xf32> to vector<32x32xf32>
    %75 = arith.addf %73, %74 : vector<32x32xf32>
    %c1_i32_31 = arith.constant 1 : i32
    %76 = tpu.dynamic_rotate %75 by %c1_i32_31 dim 0 : vector<32x32xf32>, i32 -> vector<32x32xf32>
    %77 = vector.shape_cast %4 : vector<32x1xi1> to vector<32x1xi1>
    %78 = vector.broadcast %77 : vector<32x1xi1> to vector<32x32xi1>
    %79 = arith.select %78, %49, %76 : vector<32x32xi1>, vector<32x32xf32>
    %80 = tpu.concatenate %79, %75 in 1 : vector<32x32xf32>, vector<32x32xf32> -> vector<32x64xf32>
    %c0_32 = arith.constant 0 : index
    %c0_33 = arith.constant 0 : index
    %c0_34 = arith.constant 0 : index
    %81 = vector.load %arg10[%c0_32, %c0_33, %c0_34] : memref<2x64x96xf32, #tpu.memory_space<vmem>>, vector<1x64x96xf32>
    %82 = vector.shape_cast %81 : vector<1x64x96xf32> to vector<64x96xf32>
    %cst_35 = arith.constant dense<0.000000e+00> : vector<32x96xf32>
    %83 = tpu.matmul %80, %82, %cst_35 {dimension_numbers = #tpu.dot_dimension_numbers<[1], [0], [0], [1], [0, 0, 1, 1], [], []>} : vector<32x64xf32>, vector<64x96xf32>, vector<32x96xf32> -> vector<32x96xf32>
    %84 = vector.extract_strided_slice %83 {offsets = [0, 0], sizes = [32, 32], strides = [1, 1]} : vector<32x96xf32> to vector<32x32xf32>
    %85 = vector.extract_strided_slice %83 {offsets = [0, 32], sizes = [32, 32], strides = [1, 1]} : vector<32x96xf32> to vector<32x32xf32>
    %86 = vector.extract_strided_slice %83 {offsets = [0, 64], sizes = [32, 32], strides = [1, 1]} : vector<32x96xf32> to vector<32x32xf32>
    %87 = arith.negf %84 : vector<32x32xf32>
    %88 = math.exp %87 : vector<32x32xf32>
    %cst_36 = arith.constant 1.000000e+00 : f32
    %89 = vector.broadcast %cst_36 : f32 to vector<32x32xf32>
    %90 = arith.addf %89, %88 : vector<32x32xf32>
    %91 = arith.divf %89, %90 : vector<32x32xf32>
    %cst_37 = arith.constant 1.000000e+00 : f32
    %92 = vector.broadcast %cst_37 : f32 to vector<32x32xf32>
    %93 = arith.subf %92, %91 : vector<32x32xf32>
    %94 = arith.mulf %93, %85 : vector<32x32xf32>
    %c1_i32_38 = arith.constant 1 : i32
    %95 = vector.broadcast %c1_i32_38 : i32 to vector<32x1xi32>
    %96 = arith.cmpi sge, %2, %95 : vector<32x1xi32>
    %c1_i32_39 = arith.constant 1 : i32
    %97 = tpu.dynamic_rotate %94 by %c1_i32_39 dim 0 : vector<32x32xf32>, i32 -> vector<32x32xf32>
    %cst_40 = arith.constant 0.000000e+00 : f32
    %98 = vector.shape_cast %96 : vector<32x1xi1> to vector<32x1xi1>
    %99 = vector.broadcast %98 : vector<32x1xi1> to vector<32x32xi1>
    %100 = vector.broadcast %cst_40 : f32 to vector<32x32xf32>
    %101 = arith.select %99, %97, %100 : vector<32x32xi1>, vector<32x32xf32>
    %102 = arith.mulf %91, %101 : vector<32x32xf32>
    %103 = arith.addf %102, %94 : vector<32x32xf32>
    %c1_i32_41 = arith.constant 1 : i32
    %104 = vector.broadcast %c1_i32_41 : i32 to vector<32x1xi32>
    %105 = arith.cmpi sge, %2, %104 : vector<32x1xi32>
    %c1_i32_42 = arith.constant 1 : i32
    %106 = tpu.dynamic_rotate %91 by %c1_i32_42 dim 0 : vector<32x32xf32>, i32 -> vector<32x32xf32>
    %cst_43 = arith.constant 1.000000e+00 : f32
    %107 = vector.shape_cast %105 : vector<32x1xi1> to vector<32x1xi1>
    %108 = vector.broadcast %107 : vector<32x1xi1> to vector<32x32xi1>
    %109 = vector.broadcast %cst_43 : f32 to vector<32x32xf32>
    %110 = arith.select %108, %106, %109 : vector<32x32xi1>, vector<32x32xf32>
    %111 = arith.mulf %91, %110 : vector<32x32xf32>
    %c2_i32_44 = arith.constant 2 : i32
    %112 = vector.broadcast %c2_i32_44 : i32 to vector<32x1xi32>
    %113 = arith.cmpi sge, %2, %112 : vector<32x1xi32>
    %c2_i32_45 = arith.constant 2 : i32
    %114 = tpu.dynamic_rotate %103 by %c2_i32_45 dim 0 : vector<32x32xf32>, i32 -> vector<32x32xf32>
    %cst_46 = arith.constant 0.000000e+00 : f32
    %115 = vector.shape_cast %113 : vector<32x1xi1> to vector<32x1xi1>
    %116 = vector.broadcast %115 : vector<32x1xi1> to vector<32x32xi1>
    %117 = vector.broadcast %cst_46 : f32 to vector<32x32xf32>
    %118 = arith.select %116, %114, %117 : vector<32x32xi1>, vector<32x32xf32>
    %119 = arith.mulf %111, %118 : vector<32x32xf32>
    %120 = arith.addf %119, %103 : vector<32x32xf32>
    %c2_i32_47 = arith.constant 2 : i32
    %121 = vector.broadcast %c2_i32_47 : i32 to vector<32x1xi32>
    %122 = arith.cmpi sge, %2, %121 : vector<32x1xi32>
    %c2_i32_48 = arith.constant 2 : i32
    %123 = tpu.dynamic_rotate %111 by %c2_i32_48 dim 0 : vector<32x32xf32>, i32 -> vector<32x32xf32>
    %cst_49 = arith.constant 1.000000e+00 : f32
    %124 = vector.shape_cast %122 : vector<32x1xi1> to vector<32x1xi1>
    %125 = vector.broadcast %124 : vector<32x1xi1> to vector<32x32xi1>
    %126 = vector.broadcast %cst_49 : f32 to vector<32x32xf32>
    %127 = arith.select %125, %123, %126 : vector<32x32xi1>, vector<32x32xf32>
    %128 = arith.mulf %111, %127 : vector<32x32xf32>
    %c4_i32 = arith.constant 4 : i32
    %129 = vector.broadcast %c4_i32 : i32 to vector<32x1xi32>
    %130 = arith.cmpi sge, %2, %129 : vector<32x1xi32>
    %c4_i32_50 = arith.constant 4 : i32
    %131 = tpu.dynamic_rotate %120 by %c4_i32_50 dim 0 : vector<32x32xf32>, i32 -> vector<32x32xf32>
    %cst_51 = arith.constant 0.000000e+00 : f32
    %132 = vector.shape_cast %130 : vector<32x1xi1> to vector<32x1xi1>
    %133 = vector.broadcast %132 : vector<32x1xi1> to vector<32x32xi1>
    %134 = vector.broadcast %cst_51 : f32 to vector<32x32xf32>
    %135 = arith.select %133, %131, %134 : vector<32x32xi1>, vector<32x32xf32>
    %136 = arith.mulf %128, %135 : vector<32x32xf32>
    %137 = arith.addf %136, %120 : vector<32x32xf32>
    %c4_i32_52 = arith.constant 4 : i32
    %138 = vector.broadcast %c4_i32_52 : i32 to vector<32x1xi32>
    %139 = arith.cmpi sge, %2, %138 : vector<32x1xi32>
    %c4_i32_53 = arith.constant 4 : i32
    %140 = tpu.dynamic_rotate %128 by %c4_i32_53 dim 0 : vector<32x32xf32>, i32 -> vector<32x32xf32>
    %cst_54 = arith.constant 1.000000e+00 : f32
    %141 = vector.shape_cast %139 : vector<32x1xi1> to vector<32x1xi1>
    %142 = vector.broadcast %141 : vector<32x1xi1> to vector<32x32xi1>
    %143 = vector.broadcast %cst_54 : f32 to vector<32x32xf32>
    %144 = arith.select %142, %140, %143 : vector<32x32xi1>, vector<32x32xf32>
    %145 = arith.mulf %128, %144 : vector<32x32xf32>
    %c8_i32 = arith.constant 8 : i32
    %146 = vector.broadcast %c8_i32 : i32 to vector<32x1xi32>
    %147 = arith.cmpi sge, %2, %146 : vector<32x1xi32>
    %c8_i32_55 = arith.constant 8 : i32
    %148 = tpu.dynamic_rotate %137 by %c8_i32_55 dim 0 : vector<32x32xf32>, i32 -> vector<32x32xf32>
    %cst_56 = arith.constant 0.000000e+00 : f32
    %149 = vector.shape_cast %147 : vector<32x1xi1> to vector<32x1xi1>
    %150 = vector.broadcast %149 : vector<32x1xi1> to vector<32x32xi1>
    %151 = vector.broadcast %cst_56 : f32 to vector<32x32xf32>
    %152 = arith.select %150, %148, %151 : vector<32x32xi1>, vector<32x32xf32>
    %153 = arith.mulf %145, %152 : vector<32x32xf32>
    %154 = arith.addf %153, %137 : vector<32x32xf32>
    %155 = arith.negf %86 : vector<32x32xf32>
    %156 = math.exp %155 : vector<32x32xf32>
    %cst_57 = arith.constant 1.000000e+00 : f32
    %157 = vector.broadcast %cst_57 : f32 to vector<32x32xf32>
    %158 = arith.addf %157, %156 : vector<32x32xf32>
    %159 = arith.divf %157, %158 : vector<32x32xf32>
    %160 = arith.mulf %159, %154 : vector<32x32xf32>
    %cst_58 = arith.constant 1.000000e-01 : f32
    %161 = vector.broadcast %cst_58 : f32 to vector<32x32xf32>
    %162 = arith.mulf %161, %85 : vector<32x32xf32>
    %163 = arith.addf %160, %162 : vector<32x32xf32>
    %cst_59 = arith.constant dense<0.000000e+00> : vector<32xf32>
    %164 = vector.multi_reduction <add>, %163, %cst_59 [1] : vector<32x32xf32> to vector<32xf32>
    %165 = vector.shape_cast %164 : vector<32xf32> to vector<32x1xf32>
    %cst_60 = arith.constant 3.200000e+01 : f32
    %166 = vector.broadcast %cst_60 : f32 to vector<32x1xf32>
    %167 = arith.divf %165, %166 : vector<32x1xf32>
    %168 = vector.broadcast %167 : vector<32x1xf32> to vector<32x32xf32>
    %169 = arith.subf %163, %168 : vector<32x32xf32>
    %170 = arith.mulf %169, %169 : vector<32x32xf32>
    %cst_61 = arith.constant dense<0.000000e+00> : vector<32xf32>
    %171 = vector.multi_reduction <add>, %170, %cst_61 [1] : vector<32x32xf32> to vector<32xf32>
    %172 = vector.shape_cast %171 : vector<32xf32> to vector<32x1xf32>
    %cst_62 = arith.constant 3.200000e+01 : f32
    %173 = vector.broadcast %cst_62 : f32 to vector<32x1xf32>
    %174 = arith.divf %172, %173 : vector<32x1xf32>
    %175 = vector.broadcast %167 : vector<32x1xf32> to vector<32x32xf32>
    %176 = arith.subf %163, %175 : vector<32x32xf32>
    %cst_63 = arith.constant 9.99999974E-6 : f32
    %177 = vector.broadcast %cst_63 : f32 to vector<32x1xf32>
    %178 = arith.addf %174, %177 : vector<32x1xf32>
    %179 = math.rsqrt %178 : vector<32x1xf32>
    %180 = vector.broadcast %179 : vector<32x1xf32> to vector<32x32xf32>
    %181 = arith.mulf %176, %180 : vector<32x32xf32>
    %c0_64 = arith.constant 0 : index
    %c0_65 = arith.constant 0 : index
    %c0_66 = arith.constant 0 : index
    %182 = vector.load %arg11[%c0_64, %c0_65, %c0_66] : memref<2x32x32xf32, #tpu.memory_space<vmem>>, vector<1x32x32xf32>
    %183 = vector.shape_cast %182 : vector<1x32x32xf32> to vector<32x32xf32>
    %cst_67 = arith.constant dense<0.000000e+00> : vector<32x32xf32>
    %184 = tpu.matmul %181, %183, %cst_67 {dimension_numbers = #tpu.dot_dimension_numbers<[1], [0], [0], [1], [0, 0, 1, 1], [], []>} : vector<32x32xf32>, vector<32x32xf32>, vector<32x32xf32> -> vector<32x32xf32>
    %185 = arith.addf %48, %184 : vector<32x32xf32>
    %c0_68 = arith.constant 0 : index
    %c0_69 = arith.constant 0 : index
    %c0_70 = arith.constant 0 : index
    %186 = vector.load %arg8[%c0_68, %c0_69, %c0_70] : memref<2x1x32xf32, #tpu.memory_space<vmem>>, vector<1x1x32xf32>
    %187 = vector.shape_cast %186 : vector<1x1x32xf32> to vector<1x32xf32>
    %c0_71 = arith.constant 0 : index
    %c0_72 = arith.constant 0 : index
    %c0_73 = arith.constant 0 : index
    %188 = vector.load %arg9[%c0_71, %c0_72, %c0_73] : memref<2x1x32xf32, #tpu.memory_space<vmem>>, vector<1x1x32xf32>
    %189 = vector.shape_cast %188 : vector<1x1x32xf32> to vector<1x32xf32>
    %cst_74 = arith.constant dense<0.000000e+00> : vector<32xf32>
    %190 = vector.multi_reduction <add>, %185, %cst_74 [1] : vector<32x32xf32> to vector<32xf32>
    %191 = vector.shape_cast %190 : vector<32xf32> to vector<32x1xf32>
    %cst_75 = arith.constant 3.200000e+01 : f32
    %192 = vector.broadcast %cst_75 : f32 to vector<32x1xf32>
    %193 = arith.divf %191, %192 : vector<32x1xf32>
    %194 = vector.broadcast %193 : vector<32x1xf32> to vector<32x32xf32>
    %195 = arith.subf %185, %194 : vector<32x32xf32>
    %196 = arith.mulf %195, %195 : vector<32x32xf32>
    %cst_76 = arith.constant dense<0.000000e+00> : vector<32xf32>
    %197 = vector.multi_reduction <add>, %196, %cst_76 [1] : vector<32x32xf32> to vector<32xf32>
    %198 = vector.shape_cast %197 : vector<32xf32> to vector<32x1xf32>
    %cst_77 = arith.constant 3.200000e+01 : f32
    %199 = vector.broadcast %cst_77 : f32 to vector<32x1xf32>
    %200 = arith.divf %198, %199 : vector<32x1xf32>
    %201 = vector.broadcast %193 : vector<32x1xf32> to vector<32x32xf32>
    %202 = arith.subf %185, %201 : vector<32x32xf32>
    %cst_78 = arith.constant 9.99999974E-6 : f32
    %203 = vector.broadcast %cst_78 : f32 to vector<32x1xf32>
    %204 = arith.addf %200, %203 : vector<32x1xf32>
    %205 = math.rsqrt %204 : vector<32x1xf32>
    %206 = vector.broadcast %205 : vector<32x1xf32> to vector<32x32xf32>
    %207 = arith.mulf %202, %206 : vector<32x32xf32>
    %208 = vector.broadcast %187 : vector<1x32xf32> to vector<32x32xf32>
    %209 = arith.mulf %207, %208 : vector<32x32xf32>
    %210 = vector.broadcast %189 : vector<1x32xf32> to vector<32x32xf32>
    %211 = arith.addf %209, %210 : vector<32x32xf32>
    %c1_i32_79 = arith.constant 1 : i32
    %212 = tpu.dynamic_rotate %211 by %c1_i32_79 dim 0 : vector<32x32xf32>, i32 -> vector<32x32xf32>
    %213 = vector.shape_cast %4 : vector<32x1xi1> to vector<32x1xi1>
    %214 = vector.broadcast %213 : vector<32x1xi1> to vector<32x32xi1>
    %215 = arith.select %214, %49, %212 : vector<32x32xi1>, vector<32x32xf32>
    %216 = tpu.concatenate %215, %211 in 1 : vector<32x32xf32>, vector<32x32xf32> -> vector<32x64xf32>
    %c0_80 = arith.constant 0 : index
    %c0_81 = arith.constant 0 : index
    %c0_82 = arith.constant 0 : index
    %217 = vector.load %arg12[%c0_80, %c0_81, %c0_82] : memref<2x64x160xf32, #tpu.memory_space<vmem>>, vector<1x64x160xf32>
    %218 = vector.shape_cast %217 : vector<1x64x160xf32> to vector<64x160xf32>
    %cst_83 = arith.constant dense<0.000000e+00> : vector<32x160xf32>
    %219 = tpu.matmul %216, %218, %cst_83 {dimension_numbers = #tpu.dot_dimension_numbers<[1], [0], [0], [1], [0, 0, 1, 1], [], []>} : vector<32x64xf32>, vector<64x160xf32>, vector<32x160xf32> -> vector<32x160xf32>
    %220 = vector.extract_strided_slice %219 {offsets = [0, 0], sizes = [32, 128], strides = [1, 1]} : vector<32x160xf32> to vector<32x128xf32>
    %cst_84 = arith.constant 0.000000e+00 : f32
    %221 = vector.broadcast %cst_84 : f32 to vector<32x128xf32>
    %222 = arith.maximumf %220, %221 : vector<32x128xf32>
    %223 = arith.mulf %222, %222 : vector<32x128xf32>
    %c0_85 = arith.constant 0 : index
    %c0_86 = arith.constant 0 : index
    %c0_87 = arith.constant 0 : index
    %224 = vector.load %arg13[%c0_85, %c0_86, %c0_87] : memref<2x128x32xf32, #tpu.memory_space<vmem>>, vector<1x128x32xf32>
    %225 = vector.shape_cast %224 : vector<1x128x32xf32> to vector<128x32xf32>
    %cst_88 = arith.constant dense<0.000000e+00> : vector<32x32xf32>
    %226 = tpu.matmul %223, %225, %cst_88 {dimension_numbers = #tpu.dot_dimension_numbers<[1], [0], [0], [1], [0, 0, 1, 1], [], []>} : vector<32x128xf32>, vector<128x32xf32>, vector<32x32xf32> -> vector<32x32xf32>
    %227 = vector.extract_strided_slice %219 {offsets = [0, 128], sizes = [32, 32], strides = [1, 1]} : vector<32x160xf32> to vector<32x32xf32>
    %228 = arith.negf %227 : vector<32x32xf32>
    %229 = math.exp %228 : vector<32x32xf32>
    %cst_89 = arith.constant 1.000000e+00 : f32
    %230 = vector.broadcast %cst_89 : f32 to vector<32x32xf32>
    %231 = arith.addf %230, %229 : vector<32x32xf32>
    %232 = arith.divf %230, %231 : vector<32x32xf32>
    %233 = arith.mulf %232, %226 : vector<32x32xf32>
    %234 = arith.addf %185, %233 : vector<32x32xf32>
    %c17_i32 = arith.constant 17 : i32
    %235 = tpu.dynamic_rotate %234 by %c17_i32 dim 0 : vector<32x32xf32>, i32 -> vector<32x32xf32>
    %c1 = arith.constant 1 : index
    %c0_90 = arith.constant 0 : index
    %c0_91 = arith.constant 0 : index
    %236 = vector.load %arg6[%c1, %c0_90, %c0_91] : memref<2x1x32xf32, #tpu.memory_space<vmem>>, vector<1x1x32xf32>
    %237 = vector.shape_cast %236 : vector<1x1x32xf32> to vector<1x32xf32>
    %c1_92 = arith.constant 1 : index
    %c0_93 = arith.constant 0 : index
    %c0_94 = arith.constant 0 : index
    %238 = vector.load %arg7[%c1_92, %c0_93, %c0_94] : memref<2x1x32xf32, #tpu.memory_space<vmem>>, vector<1x1x32xf32>
    %239 = vector.shape_cast %238 : vector<1x1x32xf32> to vector<1x32xf32>
    %cst_95 = arith.constant dense<0.000000e+00> : vector<32xf32>
    %240 = vector.multi_reduction <add>, %234, %cst_95 [1] : vector<32x32xf32> to vector<32xf32>
    %241 = vector.shape_cast %240 : vector<32xf32> to vector<32x1xf32>
    %cst_96 = arith.constant 3.200000e+01 : f32
    %242 = vector.broadcast %cst_96 : f32 to vector<32x1xf32>
    %243 = arith.divf %241, %242 : vector<32x1xf32>
    %244 = vector.broadcast %243 : vector<32x1xf32> to vector<32x32xf32>
    %245 = arith.subf %234, %244 : vector<32x32xf32>
    %246 = arith.mulf %245, %245 : vector<32x32xf32>
    %cst_97 = arith.constant dense<0.000000e+00> : vector<32xf32>
    %247 = vector.multi_reduction <add>, %246, %cst_97 [1] : vector<32x32xf32> to vector<32xf32>
    %248 = vector.shape_cast %247 : vector<32xf32> to vector<32x1xf32>
    %cst_98 = arith.constant 3.200000e+01 : f32
    %249 = vector.broadcast %cst_98 : f32 to vector<32x1xf32>
    %250 = arith.divf %248, %249 : vector<32x1xf32>
    %251 = vector.broadcast %243 : vector<32x1xf32> to vector<32x32xf32>
    %252 = arith.subf %234, %251 : vector<32x32xf32>
    %cst_99 = arith.constant 9.99999974E-6 : f32
    %253 = vector.broadcast %cst_99 : f32 to vector<32x1xf32>
    %254 = arith.addf %250, %253 : vector<32x1xf32>
    %255 = math.rsqrt %254 : vector<32x1xf32>
    %256 = vector.broadcast %255 : vector<32x1xf32> to vector<32x32xf32>
    %257 = arith.mulf %252, %256 : vector<32x32xf32>
    %258 = vector.broadcast %237 : vector<1x32xf32> to vector<32x32xf32>
    %259 = arith.mulf %257, %258 : vector<32x32xf32>
    %260 = vector.broadcast %239 : vector<1x32xf32> to vector<32x32xf32>
    %261 = arith.addf %259, %260 : vector<32x32xf32>
    %c1_i32_100 = arith.constant 1 : i32
    %262 = tpu.dynamic_rotate %261 by %c1_i32_100 dim 0 : vector<32x32xf32>, i32 -> vector<32x32xf32>
    %263 = vector.shape_cast %4 : vector<32x1xi1> to vector<32x1xi1>
    %264 = vector.broadcast %263 : vector<32x1xi1> to vector<32x32xi1>
    %265 = arith.select %264, %235, %262 : vector<32x32xi1>, vector<32x32xf32>
    %266 = tpu.concatenate %265, %261 in 1 : vector<32x32xf32>, vector<32x32xf32> -> vector<32x64xf32>
    %c1_101 = arith.constant 1 : index
    %c0_102 = arith.constant 0 : index
    %c0_103 = arith.constant 0 : index
    %267 = vector.load %arg10[%c1_101, %c0_102, %c0_103] : memref<2x64x96xf32, #tpu.memory_space<vmem>>, vector<1x64x96xf32>
    %268 = vector.shape_cast %267 : vector<1x64x96xf32> to vector<64x96xf32>
    %cst_104 = arith.constant dense<0.000000e+00> : vector<32x96xf32>
    %269 = tpu.matmul %266, %268, %cst_104 {dimension_numbers = #tpu.dot_dimension_numbers<[1], [0], [0], [1], [0, 0, 1, 1], [], []>} : vector<32x64xf32>, vector<64x96xf32>, vector<32x96xf32> -> vector<32x96xf32>
    %270 = vector.extract_strided_slice %269 {offsets = [0, 0], sizes = [32, 32], strides = [1, 1]} : vector<32x96xf32> to vector<32x32xf32>
    %271 = vector.extract_strided_slice %269 {offsets = [0, 32], sizes = [32, 32], strides = [1, 1]} : vector<32x96xf32> to vector<32x32xf32>
    %272 = vector.extract_strided_slice %269 {offsets = [0, 64], sizes = [32, 32], strides = [1, 1]} : vector<32x96xf32> to vector<32x32xf32>
    %273 = arith.negf %270 : vector<32x32xf32>
    %274 = math.exp %273 : vector<32x32xf32>
    %cst_105 = arith.constant 1.000000e+00 : f32
    %275 = vector.broadcast %cst_105 : f32 to vector<32x32xf32>
    %276 = arith.addf %275, %274 : vector<32x32xf32>
    %277 = arith.divf %275, %276 : vector<32x32xf32>
    %cst_106 = arith.constant 1.000000e+00 : f32
    %278 = vector.broadcast %cst_106 : f32 to vector<32x32xf32>
    %279 = arith.subf %278, %277 : vector<32x32xf32>
    %280 = arith.mulf %279, %271 : vector<32x32xf32>
    %c1_i32_107 = arith.constant 1 : i32
    %281 = vector.broadcast %c1_i32_107 : i32 to vector<32x1xi32>
    %282 = arith.cmpi sge, %2, %281 : vector<32x1xi32>
    %c1_i32_108 = arith.constant 1 : i32
    %283 = tpu.dynamic_rotate %280 by %c1_i32_108 dim 0 : vector<32x32xf32>, i32 -> vector<32x32xf32>
    %cst_109 = arith.constant 0.000000e+00 : f32
    %284 = vector.shape_cast %282 : vector<32x1xi1> to vector<32x1xi1>
    %285 = vector.broadcast %284 : vector<32x1xi1> to vector<32x32xi1>
    %286 = vector.broadcast %cst_109 : f32 to vector<32x32xf32>
    %287 = arith.select %285, %283, %286 : vector<32x32xi1>, vector<32x32xf32>
    %288 = arith.mulf %277, %287 : vector<32x32xf32>
    %289 = arith.addf %288, %280 : vector<32x32xf32>
    %c1_i32_110 = arith.constant 1 : i32
    %290 = vector.broadcast %c1_i32_110 : i32 to vector<32x1xi32>
    %291 = arith.cmpi sge, %2, %290 : vector<32x1xi32>
    %c1_i32_111 = arith.constant 1 : i32
    %292 = tpu.dynamic_rotate %277 by %c1_i32_111 dim 0 : vector<32x32xf32>, i32 -> vector<32x32xf32>
    %cst_112 = arith.constant 1.000000e+00 : f32
    %293 = vector.shape_cast %291 : vector<32x1xi1> to vector<32x1xi1>
    %294 = vector.broadcast %293 : vector<32x1xi1> to vector<32x32xi1>
    %295 = vector.broadcast %cst_112 : f32 to vector<32x32xf32>
    %296 = arith.select %294, %292, %295 : vector<32x32xi1>, vector<32x32xf32>
    %297 = arith.mulf %277, %296 : vector<32x32xf32>
    %c2_i32_113 = arith.constant 2 : i32
    %298 = vector.broadcast %c2_i32_113 : i32 to vector<32x1xi32>
    %299 = arith.cmpi sge, %2, %298 : vector<32x1xi32>
    %c2_i32_114 = arith.constant 2 : i32
    %300 = tpu.dynamic_rotate %289 by %c2_i32_114 dim 0 : vector<32x32xf32>, i32 -> vector<32x32xf32>
    %cst_115 = arith.constant 0.000000e+00 : f32
    %301 = vector.shape_cast %299 : vector<32x1xi1> to vector<32x1xi1>
    %302 = vector.broadcast %301 : vector<32x1xi1> to vector<32x32xi1>
    %303 = vector.broadcast %cst_115 : f32 to vector<32x32xf32>
    %304 = arith.select %302, %300, %303 : vector<32x32xi1>, vector<32x32xf32>
    %305 = arith.mulf %297, %304 : vector<32x32xf32>
    %306 = arith.addf %305, %289 : vector<32x32xf32>
    %c2_i32_116 = arith.constant 2 : i32
    %307 = vector.broadcast %c2_i32_116 : i32 to vector<32x1xi32>
    %308 = arith.cmpi sge, %2, %307 : vector<32x1xi32>
    %c2_i32_117 = arith.constant 2 : i32
    %309 = tpu.dynamic_rotate %297 by %c2_i32_117 dim 0 : vector<32x32xf32>, i32 -> vector<32x32xf32>
    %cst_118 = arith.constant 1.000000e+00 : f32
    %310 = vector.shape_cast %308 : vector<32x1xi1> to vector<32x1xi1>
    %311 = vector.broadcast %310 : vector<32x1xi1> to vector<32x32xi1>
    %312 = vector.broadcast %cst_118 : f32 to vector<32x32xf32>
    %313 = arith.select %311, %309, %312 : vector<32x32xi1>, vector<32x32xf32>
    %314 = arith.mulf %297, %313 : vector<32x32xf32>
    %c4_i32_119 = arith.constant 4 : i32
    %315 = vector.broadcast %c4_i32_119 : i32 to vector<32x1xi32>
    %316 = arith.cmpi sge, %2, %315 : vector<32x1xi32>
    %c4_i32_120 = arith.constant 4 : i32
    %317 = tpu.dynamic_rotate %306 by %c4_i32_120 dim 0 : vector<32x32xf32>, i32 -> vector<32x32xf32>
    %cst_121 = arith.constant 0.000000e+00 : f32
    %318 = vector.shape_cast %316 : vector<32x1xi1> to vector<32x1xi1>
    %319 = vector.broadcast %318 : vector<32x1xi1> to vector<32x32xi1>
    %320 = vector.broadcast %cst_121 : f32 to vector<32x32xf32>
    %321 = arith.select %319, %317, %320 : vector<32x32xi1>, vector<32x32xf32>
    %322 = arith.mulf %314, %321 : vector<32x32xf32>
    %323 = arith.addf %322, %306 : vector<32x32xf32>
    %c4_i32_122 = arith.constant 4 : i32
    %324 = vector.broadcast %c4_i32_122 : i32 to vector<32x1xi32>
    %325 = arith.cmpi sge, %2, %324 : vector<32x1xi32>
    %c4_i32_123 = arith.constant 4 : i32
    %326 = tpu.dynamic_rotate %314 by %c4_i32_123 dim 0 : vector<32x32xf32>, i32 -> vector<32x32xf32>
    %cst_124 = arith.constant 1.000000e+00 : f32
    %327 = vector.shape_cast %325 : vector<32x1xi1> to vector<32x1xi1>
    %328 = vector.broadcast %327 : vector<32x1xi1> to vector<32x32xi1>
    %329 = vector.broadcast %cst_124 : f32 to vector<32x32xf32>
    %330 = arith.select %328, %326, %329 : vector<32x32xi1>, vector<32x32xf32>
    %331 = arith.mulf %314, %330 : vector<32x32xf32>
    %c8_i32_125 = arith.constant 8 : i32
    %332 = vector.broadcast %c8_i32_125 : i32 to vector<32x1xi32>
    %333 = arith.cmpi sge, %2, %332 : vector<32x1xi32>
    %c8_i32_126 = arith.constant 8 : i32
    %334 = tpu.dynamic_rotate %323 by %c8_i32_126 dim 0 : vector<32x32xf32>, i32 -> vector<32x32xf32>
    %cst_127 = arith.constant 0.000000e+00 : f32
    %335 = vector.shape_cast %333 : vector<32x1xi1> to vector<32x1xi1>
    %336 = vector.broadcast %335 : vector<32x1xi1> to vector<32x32xi1>
    %337 = vector.broadcast %cst_127 : f32 to vector<32x32xf32>
    %338 = arith.select %336, %334, %337 : vector<32x32xi1>, vector<32x32xf32>
    %339 = arith.mulf %331, %338 : vector<32x32xf32>
    %340 = arith.addf %339, %323 : vector<32x32xf32>
    %341 = arith.negf %272 : vector<32x32xf32>
    %342 = math.exp %341 : vector<32x32xf32>
    %cst_128 = arith.constant 1.000000e+00 : f32
    %343 = vector.broadcast %cst_128 : f32 to vector<32x32xf32>
    %344 = arith.addf %343, %342 : vector<32x32xf32>
    %345 = arith.divf %343, %344 : vector<32x32xf32>
    %346 = arith.mulf %345, %340 : vector<32x32xf32>
    %cst_129 = arith.constant 1.000000e-01 : f32
    %347 = vector.broadcast %cst_129 : f32 to vector<32x32xf32>
    %348 = arith.mulf %347, %271 : vector<32x32xf32>
    %349 = arith.addf %346, %348 : vector<32x32xf32>
    %cst_130 = arith.constant dense<0.000000e+00> : vector<32xf32>
    %350 = vector.multi_reduction <add>, %349, %cst_130 [1] : vector<32x32xf32> to vector<32xf32>
    %351 = vector.shape_cast %350 : vector<32xf32> to vector<32x1xf32>
    %cst_131 = arith.constant 3.200000e+01 : f32
    %352 = vector.broadcast %cst_131 : f32 to vector<32x1xf32>
    %353 = arith.divf %351, %352 : vector<32x1xf32>
    %354 = vector.broadcast %353 : vector<32x1xf32> to vector<32x32xf32>
    %355 = arith.subf %349, %354 : vector<32x32xf32>
    %356 = arith.mulf %355, %355 : vector<32x32xf32>
    %cst_132 = arith.constant dense<0.000000e+00> : vector<32xf32>
    %357 = vector.multi_reduction <add>, %356, %cst_132 [1] : vector<32x32xf32> to vector<32xf32>
    %358 = vector.shape_cast %357 : vector<32xf32> to vector<32x1xf32>
    %cst_133 = arith.constant 3.200000e+01 : f32
    %359 = vector.broadcast %cst_133 : f32 to vector<32x1xf32>
    %360 = arith.divf %358, %359 : vector<32x1xf32>
    %361 = vector.broadcast %353 : vector<32x1xf32> to vector<32x32xf32>
    %362 = arith.subf %349, %361 : vector<32x32xf32>
    %cst_134 = arith.constant 9.99999974E-6 : f32
    %363 = vector.broadcast %cst_134 : f32 to vector<32x1xf32>
    %364 = arith.addf %360, %363 : vector<32x1xf32>
    %365 = math.rsqrt %364 : vector<32x1xf32>
    %366 = vector.broadcast %365 : vector<32x1xf32> to vector<32x32xf32>
    %367 = arith.mulf %362, %366 : vector<32x32xf32>
    %c1_135 = arith.constant 1 : index
    %c0_136 = arith.constant 0 : index
    %c0_137 = arith.constant 0 : index
    %368 = vector.load %arg11[%c1_135, %c0_136, %c0_137] : memref<2x32x32xf32, #tpu.memory_space<vmem>>, vector<1x32x32xf32>
    %369 = vector.shape_cast %368 : vector<1x32x32xf32> to vector<32x32xf32>
    %cst_138 = arith.constant dense<0.000000e+00> : vector<32x32xf32>
    %370 = tpu.matmul %367, %369, %cst_138 {dimension_numbers = #tpu.dot_dimension_numbers<[1], [0], [0], [1], [0, 0, 1, 1], [], []>} : vector<32x32xf32>, vector<32x32xf32>, vector<32x32xf32> -> vector<32x32xf32>
    %371 = arith.addf %234, %370 : vector<32x32xf32>
    %c1_139 = arith.constant 1 : index
    %c0_140 = arith.constant 0 : index
    %c0_141 = arith.constant 0 : index
    %372 = vector.load %arg8[%c1_139, %c0_140, %c0_141] : memref<2x1x32xf32, #tpu.memory_space<vmem>>, vector<1x1x32xf32>
    %373 = vector.shape_cast %372 : vector<1x1x32xf32> to vector<1x32xf32>
    %c1_142 = arith.constant 1 : index
    %c0_143 = arith.constant 0 : index
    %c0_144 = arith.constant 0 : index
    %374 = vector.load %arg9[%c1_142, %c0_143, %c0_144] : memref<2x1x32xf32, #tpu.memory_space<vmem>>, vector<1x1x32xf32>
    %375 = vector.shape_cast %374 : vector<1x1x32xf32> to vector<1x32xf32>
    %cst_145 = arith.constant dense<0.000000e+00> : vector<32xf32>
    %376 = vector.multi_reduction <add>, %371, %cst_145 [1] : vector<32x32xf32> to vector<32xf32>
    %377 = vector.shape_cast %376 : vector<32xf32> to vector<32x1xf32>
    %cst_146 = arith.constant 3.200000e+01 : f32
    %378 = vector.broadcast %cst_146 : f32 to vector<32x1xf32>
    %379 = arith.divf %377, %378 : vector<32x1xf32>
    %380 = vector.broadcast %379 : vector<32x1xf32> to vector<32x32xf32>
    %381 = arith.subf %371, %380 : vector<32x32xf32>
    %382 = arith.mulf %381, %381 : vector<32x32xf32>
    %cst_147 = arith.constant dense<0.000000e+00> : vector<32xf32>
    %383 = vector.multi_reduction <add>, %382, %cst_147 [1] : vector<32x32xf32> to vector<32xf32>
    %384 = vector.shape_cast %383 : vector<32xf32> to vector<32x1xf32>
    %cst_148 = arith.constant 3.200000e+01 : f32
    %385 = vector.broadcast %cst_148 : f32 to vector<32x1xf32>
    %386 = arith.divf %384, %385 : vector<32x1xf32>
    %387 = vector.broadcast %379 : vector<32x1xf32> to vector<32x32xf32>
    %388 = arith.subf %371, %387 : vector<32x32xf32>
    %cst_149 = arith.constant 9.99999974E-6 : f32
    %389 = vector.broadcast %cst_149 : f32 to vector<32x1xf32>
    %390 = arith.addf %386, %389 : vector<32x1xf32>
    %391 = math.rsqrt %390 : vector<32x1xf32>
    %392 = vector.broadcast %391 : vector<32x1xf32> to vector<32x32xf32>
    %393 = arith.mulf %388, %392 : vector<32x32xf32>
    %394 = vector.broadcast %373 : vector<1x32xf32> to vector<32x32xf32>
    %395 = arith.mulf %393, %394 : vector<32x32xf32>
    %396 = vector.broadcast %375 : vector<1x32xf32> to vector<32x32xf32>
    %397 = arith.addf %395, %396 : vector<32x32xf32>
    %c1_i32_150 = arith.constant 1 : i32
    %398 = tpu.dynamic_rotate %397 by %c1_i32_150 dim 0 : vector<32x32xf32>, i32 -> vector<32x32xf32>
    %399 = vector.shape_cast %4 : vector<32x1xi1> to vector<32x1xi1>
    %400 = vector.broadcast %399 : vector<32x1xi1> to vector<32x32xi1>
    %401 = arith.select %400, %235, %398 : vector<32x32xi1>, vector<32x32xf32>
    %402 = tpu.concatenate %401, %397 in 1 : vector<32x32xf32>, vector<32x32xf32> -> vector<32x64xf32>
    %c1_151 = arith.constant 1 : index
    %c0_152 = arith.constant 0 : index
    %c0_153 = arith.constant 0 : index
    %403 = vector.load %arg12[%c1_151, %c0_152, %c0_153] : memref<2x64x160xf32, #tpu.memory_space<vmem>>, vector<1x64x160xf32>
    %404 = vector.shape_cast %403 : vector<1x64x160xf32> to vector<64x160xf32>
    %cst_154 = arith.constant dense<0.000000e+00> : vector<32x160xf32>
    %405 = tpu.matmul %402, %404, %cst_154 {dimension_numbers = #tpu.dot_dimension_numbers<[1], [0], [0], [1], [0, 0, 1, 1], [], []>} : vector<32x64xf32>, vector<64x160xf32>, vector<32x160xf32> -> vector<32x160xf32>
    %406 = vector.extract_strided_slice %405 {offsets = [0, 0], sizes = [32, 128], strides = [1, 1]} : vector<32x160xf32> to vector<32x128xf32>
    %cst_155 = arith.constant 0.000000e+00 : f32
    %407 = vector.broadcast %cst_155 : f32 to vector<32x128xf32>
    %408 = arith.maximumf %406, %407 : vector<32x128xf32>
    %409 = arith.mulf %408, %408 : vector<32x128xf32>
    %c1_156 = arith.constant 1 : index
    %c0_157 = arith.constant 0 : index
    %c0_158 = arith.constant 0 : index
    %410 = vector.load %arg13[%c1_156, %c0_157, %c0_158] : memref<2x128x32xf32, #tpu.memory_space<vmem>>, vector<1x128x32xf32>
    %411 = vector.shape_cast %410 : vector<1x128x32xf32> to vector<128x32xf32>
    %cst_159 = arith.constant dense<0.000000e+00> : vector<32x32xf32>
    %412 = tpu.matmul %409, %411, %cst_159 {dimension_numbers = #tpu.dot_dimension_numbers<[1], [0], [0], [1], [0, 0, 1, 1], [], []>} : vector<32x128xf32>, vector<128x32xf32>, vector<32x32xf32> -> vector<32x32xf32>
    %413 = vector.extract_strided_slice %405 {offsets = [0, 128], sizes = [32, 32], strides = [1, 1]} : vector<32x160xf32> to vector<32x32xf32>
    %414 = arith.negf %413 : vector<32x32xf32>
    %415 = math.exp %414 : vector<32x32xf32>
    %cst_160 = arith.constant 1.000000e+00 : f32
    %416 = vector.broadcast %cst_160 : f32 to vector<32x32xf32>
    %417 = arith.addf %416, %415 : vector<32x32xf32>
    %418 = arith.divf %416, %417 : vector<32x32xf32>
    %419 = arith.mulf %418, %412 : vector<32x32xf32>
    %420 = arith.addf %371, %419 : vector<32x32xf32>
    %c0_161 = arith.constant 0 : index
    %c0_162 = arith.constant 0 : index
    %421 = vector.load %arg14[%c0_161, %c0_162] : memref<1x32xf32, #tpu.memory_space<vmem>>, vector<1x32xf32>
    %c0_163 = arith.constant 0 : index
    %c0_164 = arith.constant 0 : index
    %422 = vector.load %arg15[%c0_163, %c0_164] : memref<1x32xf32, #tpu.memory_space<vmem>>, vector<1x32xf32>
    %cst_165 = arith.constant dense<0.000000e+00> : vector<32xf32>
    %423 = vector.multi_reduction <add>, %420, %cst_165 [1] : vector<32x32xf32> to vector<32xf32>
    %424 = vector.shape_cast %423 : vector<32xf32> to vector<32x1xf32>
    %cst_166 = arith.constant 3.200000e+01 : f32
    %425 = vector.broadcast %cst_166 : f32 to vector<32x1xf32>
    %426 = arith.divf %424, %425 : vector<32x1xf32>
    %427 = vector.broadcast %426 : vector<32x1xf32> to vector<32x32xf32>
    %428 = arith.subf %420, %427 : vector<32x32xf32>
    %429 = arith.mulf %428, %428 : vector<32x32xf32>
    %cst_167 = arith.constant dense<0.000000e+00> : vector<32xf32>
    %430 = vector.multi_reduction <add>, %429, %cst_167 [1] : vector<32x32xf32> to vector<32xf32>
    %431 = vector.shape_cast %430 : vector<32xf32> to vector<32x1xf32>
    %cst_168 = arith.constant 3.200000e+01 : f32
    %432 = vector.broadcast %cst_168 : f32 to vector<32x1xf32>
    %433 = arith.divf %431, %432 : vector<32x1xf32>
    %434 = vector.broadcast %426 : vector<32x1xf32> to vector<32x32xf32>
    %435 = arith.subf %420, %434 : vector<32x32xf32>
    %cst_169 = arith.constant 9.99999974E-6 : f32
    %436 = vector.broadcast %cst_169 : f32 to vector<32x1xf32>
    %437 = arith.addf %433, %436 : vector<32x1xf32>
    %438 = math.rsqrt %437 : vector<32x1xf32>
    %439 = vector.broadcast %438 : vector<32x1xf32> to vector<32x32xf32>
    %440 = arith.mulf %435, %439 : vector<32x32xf32>
    %441 = vector.broadcast %421 : vector<1x32xf32> to vector<32x32xf32>
    %442 = arith.mulf %440, %441 : vector<32x32xf32>
    %443 = vector.broadcast %422 : vector<1x32xf32> to vector<32x32xf32>
    %444 = arith.addf %442, %443 : vector<32x32xf32>
    %c0_170 = arith.constant 0 : index
    %c0_171 = arith.constant 0 : index
    %445 = vector.load %arg16[%c0_170, %c0_171] : memref<32x16xf32, #tpu.memory_space<vmem>>, vector<32x16xf32>
    %cst_172 = arith.constant dense<0.000000e+00> : vector<32x16xf32>
    %446 = tpu.matmul %444, %445, %cst_172 {dimension_numbers = #tpu.dot_dimension_numbers<[1], [0], [0], [1], [0, 0, 1, 1], [], []>} : vector<32x32xf32>, vector<32x16xf32>, vector<32x16xf32> -> vector<32x16xf32>
    %c0_173 = arith.constant 0 : index
    %c0_174 = arith.constant 0 : index
    %447 = vector.load %arg17[%c0_173, %c0_174] : memref<1x16xf32, #tpu.memory_space<vmem>>, vector<1x16xf32>
    %448 = vector.broadcast %447 : vector<1x16xf32> to vector<32x16xf32>
    %449 = arith.addf %446, %448 : vector<32x16xf32>
    %cst_175 = arith.constant 0.000000e+00 : f32
    %450 = vector.broadcast %cst_175 : f32 to vector<32x16xf32>
    %451 = arith.maximumf %449, %450 : vector<32x16xf32>
    %c0_176 = arith.constant 0 : index
    %c0_177 = arith.constant 0 : index
    %452 = vector.load %arg18[%c0_176, %c0_177] : memref<16x8xf32, #tpu.memory_space<vmem>>, vector<16x8xf32>
    %cst_178 = arith.constant dense<0.000000e+00> : vector<32x8xf32>
    %453 = tpu.matmul %451, %452, %cst_178 {dimension_numbers = #tpu.dot_dimension_numbers<[1], [0], [0], [1], [0, 0, 1, 1], [], []>} : vector<32x16xf32>, vector<16x8xf32>, vector<32x8xf32> -> vector<32x8xf32>
    %c0_179 = arith.constant 0 : index
    %c0_180 = arith.constant 0 : index
    %454 = vector.load %arg19[%c0_179, %c0_180] : memref<1x8xf32, #tpu.memory_space<vmem>>, vector<1x8xf32>
    %455 = vector.broadcast %454 : vector<1x8xf32> to vector<32x8xf32>
    %456 = arith.addf %453, %455 : vector<32x8xf32>
    %cst_181 = arith.constant 0.000000e+00 : f32
    %457 = vector.broadcast %cst_181 : f32 to vector<32x8xf32>
    %458 = arith.maximumf %456, %457 : vector<32x8xf32>
    %c0_182 = arith.constant 0 : index
    %c0_183 = arith.constant 0 : index
    %459 = vector.load %arg20[%c0_182, %c0_183] : memref<1x8xf32, #tpu.memory_space<vmem>>, vector<1x8xf32>
    %460 = vector.broadcast %459 : vector<1x8xf32> to vector<32x8xf32>
    %461 = arith.mulf %458, %460 : vector<32x8xf32>
    %cst_184 = arith.constant dense<0.000000e+00> : vector<32xf32>
    %462 = vector.multi_reduction <add>, %461, %cst_184 [1] : vector<32x8xf32> to vector<32xf32>
    %463 = vector.shape_cast %462 : vector<32xf32> to vector<32x1xf32>
    %c0_185 = arith.constant 0 : index
    %c0_186 = arith.constant 0 : index
    %464 = vector.load %arg21[%c0_185, %c0_186] : memref<1x1xf32, #tpu.memory_space<vmem>>, vector<1x1xf32>
    %465 = vector.broadcast %464 : vector<1x1xf32> to vector<32x1xf32>
    %466 = arith.addf %463, %465 : vector<32x1xf32>
    %c0_187 = arith.constant 0 : index
    %c0_188 = arith.constant 0 : index
    %467 = vector.load %arg22[%c0_187, %c0_188] : memref<32x1xf32, #tpu.memory_space<vmem>>, vector<32x1xf32>
    tpu.vector_store %arg22[%c0_187, %c0_188], %466 {strides = array<i32>} : memref<32x1xf32, #tpu.memory_space<vmem>>, vector<32x1xf32>,
    return
  }
  func.func @transform_0(%arg0: i32) -> (i32, i32) {
    %c0_i32 = arith.constant 0 : i32
    %c0_i32_0 = arith.constant 0 : i32
    return %arg0, %c0_i32 : i32, i32
  }
  func.func @transform_1(%arg0: i32) -> (i32, i32) {
    %c0_i32 = arith.constant 0 : i32
    %c0_i32_0 = arith.constant 0 : i32
    %c0_i32_1 = arith.constant 0 : i32
    return %c0_i32, %c0_i32_0 : i32, i32
  }
  func.func @transform_2(%arg0: i32) -> (i32, i32) {
    %c0_i32 = arith.constant 0 : i32
    %c0_i32_0 = arith.constant 0 : i32
    %c0_i32_1 = arith.constant 0 : i32
    return %c0_i32, %c0_i32_0 : i32, i32
  }
  func.func @transform_3(%arg0: i32) -> (i32, i32) {
    %c0_i32 = arith.constant 0 : i32
    %c0_i32_0 = arith.constant 0 : i32
    %c0_i32_1 = arith.constant 0 : i32
    return %c0_i32, %c0_i32_0 : i32, i32
  }
  func.func @transform_4(%arg0: i32) -> (i32, i32) {
    %c0_i32 = arith.constant 0 : i32
    %c0_i32_0 = arith.constant 0 : i32
    %c0_i32_1 = arith.constant 0 : i32
    return %c0_i32, %c0_i32_0 : i32, i32
  }
  func.func @transform_5(%arg0: i32) -> (i32, i32, i32) {
    %c0_i32 = arith.constant 0 : i32
    %c0_i32_0 = arith.constant 0 : i32
    %c0_i32_1 = arith.constant 0 : i32
    %c0_i32_2 = arith.constant 0 : i32
    return %c0_i32, %c0_i32_0, %c0_i32_1 : i32, i32, i32
  }
  func.func @transform_6(%arg0: i32) -> (i32, i32, i32) {
    %c0_i32 = arith.constant 0 : i32
    %c0_i32_0 = arith.constant 0 : i32
    %c0_i32_1 = arith.constant 0 : i32
    %c0_i32_2 = arith.constant 0 : i32
    return %c0_i32, %c0_i32_0, %c0_i32_1 : i32, i32, i32
  }
  func.func @transform_7(%arg0: i32) -> (i32, i32, i32) {
    %c0_i32 = arith.constant 0 : i32
    %c0_i32_0 = arith.constant 0 : i32
    %c0_i32_1 = arith.constant 0 : i32
    %c0_i32_2 = arith.constant 0 : i32
    return %c0_i32, %c0_i32_0, %c0_i32_1 : i32, i32, i32
  }
  func.func @transform_8(%arg0: i32) -> (i32, i32, i32) {
    %c0_i32 = arith.constant 0 : i32
    %c0_i32_0 = arith.constant 0 : i32
    %c0_i32_1 = arith.constant 0 : i32
    %c0_i32_2 = arith.constant 0 : i32
    return %c0_i32, %c0_i32_0, %c0_i32_1 : i32, i32, i32
  }
  func.func @transform_9(%arg0: i32) -> (i32, i32, i32) {
    %c0_i32 = arith.constant 0 : i32
    %c0_i32_0 = arith.constant 0 : i32
    %c0_i32_1 = arith.constant 0 : i32
    %c0_i32_2 = arith.constant 0 : i32
    return %c0_i32, %c0_i32_0, %c0_i32_1 : i32, i32, i32
  }
  func.func @transform_10(%arg0: i32) -> (i32, i32, i32) {
    %c0_i32 = arith.constant 0 : i32
    %c0_i32_0 = arith.constant 0 : i32
    %c0_i32_1 = arith.constant 0 : i32
    %c0_i32_2 = arith.constant 0 : i32
    return %c0_i32, %c0_i32_0, %c0_i32_1 : i32, i32, i32
  }
  func.func @transform_11(%arg0: i32) -> (i32, i32, i32) {
    %c0_i32 = arith.constant 0 : i32
    %c0_i32_0 = arith.constant 0 : i32
    %c0_i32_1 = arith.constant 0 : i32
    %c0_i32_2 = arith.constant 0 : i32
    return %c0_i32, %c0_i32_0, %c0_i32_1 : i32, i32, i32
  }
  func.func @transform_12(%arg0: i32) -> (i32, i32, i32) {
    %c0_i32 = arith.constant 0 : i32
    %c0_i32_0 = arith.constant 0 : i32
    %c0_i32_1 = arith.constant 0 : i32
    %c0_i32_2 = arith.constant 0 : i32
    return %c0_i32, %c0_i32_0, %c0_i32_1 : i32, i32, i32
  }
  func.func @transform_13(%arg0: i32) -> (i32, i32) {
    %c0_i32 = arith.constant 0 : i32
    %c0_i32_0 = arith.constant 0 : i32
    %c0_i32_1 = arith.constant 0 : i32
    return %c0_i32, %c0_i32_0 : i32, i32
  }
  func.func @transform_14(%arg0: i32) -> (i32, i32) {
    %c0_i32 = arith.constant 0 : i32
    %c0_i32_0 = arith.constant 0 : i32
    %c0_i32_1 = arith.constant 0 : i32
    return %c0_i32, %c0_i32_0 : i32, i32
  }
  func.func @transform_15(%arg0: i32) -> (i32, i32) {
    %c0_i32 = arith.constant 0 : i32
    %c0_i32_0 = arith.constant 0 : i32
    %c0_i32_1 = arith.constant 0 : i32
    return %c0_i32, %c0_i32_0 : i32, i32
  }
  func.func @transform_16(%arg0: i32) -> (i32, i32) {
    %c0_i32 = arith.constant 0 : i32
    %c0_i32_0 = arith.constant 0 : i32
    %c0_i32_1 = arith.constant 0 : i32
    return %c0_i32, %c0_i32_0 : i32, i32
  }
  func.func @transform_17(%arg0: i32) -> (i32, i32) {
    %c0_i32 = arith.constant 0 : i32
    %c0_i32_0 = arith.constant 0 : i32
    %c0_i32_1 = arith.constant 0 : i32
    return %c0_i32, %c0_i32_0 : i32, i32
  }
  func.func @transform_18(%arg0: i32) -> (i32, i32) {
    %c0_i32 = arith.constant 0 : i32
    %c0_i32_0 = arith.constant 0 : i32
    %c0_i32_1 = arith.constant 0 : i32
    return %c0_i32, %c0_i32_0 : i32, i32
  }
  func.func @transform_19(%arg0: i32) -> (i32, i32) {
    %c0_i32 = arith.constant 0 : i32
    %c0_i32_0 = arith.constant 0 : i32
    %c0_i32_1 = arith.constant 0 : i32
    return %c0_i32, %c0_i32_0 : i32, i32
  }
  func.func @transform_20(%arg0: i32) -> (i32, i32) {
    %c0_i32 = arith.constant 0 : i32
    %c0_i32_0 = arith.constant 0 : i32
    %c0_i32_1 = arith.constant 0 : i32
    return %c0_i32, %c0_i32_0 : i32, i32
  }
  func.func @transform_21(%arg0: i32) -> (i32, i32) {
    %c0_i32 = arith.constant 0 : i32
    %c0_i32_0 = arith.constant 0 : i32
    return %arg0, %c0_i32 : i32, i32
  }
}

</mosaic_0001>

<llo_original>
// kernel: rwkv_forward.1
$region0: #{rwkv_forward.1}
  #allocation0 [shape = 'u32[]', space=smem, size = 0x4, offset = 0x4, fixed_abs, tag = 'smem constant byte address 0x4 - core index']
  #allocation1 [shape = 'u32[144,128]{1,0:T(1,128)}', space=vmem, size = 0x12000, scoped, tag = 'internal scratch']
  #allocation2 [shape = 'f32[1,1]{1,0:T(1,128)S(1)}', space=vmem, size = 0x200, scoped, tag = 'scoped memory for rwkv_forward.1']
  %s0 = inlined_call_operand.vmem [shape: f32[32,7], index: 0, kind: input, shape index: {}]
  %s1 = inlined_call_operand.vmem [shape: f32[7,16], index: 1, kind: input, shape index: {}]
  %s2 = inlined_call_operand.vmem [shape: f32[1,16], index: 2, kind: input, shape index: {}]
  %s3 = inlined_call_operand.vmem [shape: f32[80,32], index: 3, kind: input, shape index: {}]
  %s4 = inlined_call_operand.vmem [shape: f32[1,32], index: 4, kind: input, shape index: {}]
  %s5 = inlined_call_operand.vmem [shape: f32[2,1,32], index: 5, kind: input, shape index: {}]
  %s6 = inlined_call_operand.vmem [shape: f32[2,1,32], index: 6, kind: input, shape index: {}]
  %s7 = inlined_call_operand.vmem [shape: f32[2,1,32], index: 7, kind: input, shape index: {}]
  %s8 = inlined_call_operand.vmem [shape: f32[2,1,32], index: 8, kind: input, shape index: {}]
  %s9 = inlined_call_operand.vmem [shape: f32[2,64,96], index: 9, kind: input, shape index: {}]
  %s10 = inlined_call_operand.vmem [shape: f32[2,32,32], index: 10, kind: input, shape index: {}]
  %s11 = inlined_call_operand.vmem [shape: f32[2,64,160], index: 11, kind: input, shape index: {}]
  %s12 = inlined_call_operand.vmem [shape: f32[2,128,32], index: 12, kind: input, shape index: {}]
  %s13 = inlined_call_operand.vmem [shape: f32[1,32], index: 13, kind: input, shape index: {}]
  %s14 = inlined_call_operand.vmem [shape: f32[1,32], index: 14, kind: input, shape index: {}]
  %s15 = inlined_call_operand.vmem [shape: f32[32,16], index: 15, kind: input, shape index: {}]
  %s16 = inlined_call_operand.vmem [shape: f32[1,16], index: 16, kind: input, shape index: {}]
  %s17 = inlined_call_operand.vmem [shape: f32[16,8], index: 17, kind: input, shape index: {}]
  %s18 = inlined_call_operand.vmem [shape: f32[1,8], index: 18, kind: input, shape index: {}]
  %s19 = inlined_call_operand.vmem [shape: f32[1,8], index: 19, kind: input, shape index: {}]
  %s20 = inlined_call_operand.<no memory space> [shape: f32[1,1], index: 20, kind: input, shape index: {}]
  %s21 = inlined_call_operand.vmem [shape: f32[32,1], index: 21, kind: output, shape index: {}]
  %s22 = sld [smem:[#allocation0]]
  $region94: #{rwkv_forward.1} parent=0
    _
  %s24 = ssub.s32 1, %s22
  %s25 = scalar_select 0, %s24, %s22
  %v26 = vstv %s20
  %27 = vst [vmem:[#allocation2] sm:$0x1] %v26
  // Predicated region
  $region2: #{rwkv_forward.1} parent=0 // pred_check
    _
  $region3: #{rwkv_forward.1} parent=0 // pred_check_branch
    %29 = sbr.rel (0) target = $region5
  $region4: #{rwkv_forward.1} parent=0 // pred_region
    _
  $region5: #{rwkv_forward.1} parent=0 // pred_fallthru
    _
  // Predicated region
  $region6: #{rwkv_forward.1} parent=0 // pred_check
    _
  $region7: #{rwkv_forward.1} parent=0 // pred_check_branch
    %31 = sbr.rel (0) target = $region9
  $region8: #{rwkv_forward.1} parent=0 // pred_region
    _
  $region9: #{rwkv_forward.1} parent=0 // pred_fallthru
    _
  // Predicated region
  $region10: #{rwkv_forward.1} parent=0 // pred_check
    _
  $region11: #{rwkv_forward.1} parent=0 // pred_check_branch
    %33 = sbr.rel (0) target = $region13
  $region12: #{rwkv_forward.1} parent=0 // pred_region
    _
  $region13: #{rwkv_forward.1} parent=0 // pred_fallthru
    _
  // Predicated region
  $region14: #{rwkv_forward.1} parent=0 // pred_check
    _
  $region15: #{rwkv_forward.1} parent=0 // pred_check_branch
    %35 = sbr.rel (0) target = $region17
  $region16: #{rwkv_forward.1} parent=0 // pred_region
    _
  $region17: #{rwkv_forward.1} parent=0 // pred_fallthru
    _
  // Predicated region
  $region18: #{rwkv_forward.1} parent=0 // pred_check
    _
  $region19: #{rwkv_forward.1} parent=0 // pred_check_branch
    %37 = sbr.rel (0) target = $region21
  $region20: #{rwkv_forward.1} parent=0 // pred_region
    _
  $region21: #{rwkv_forward.1} parent=0 // pred_fallthru
    _
  // Predicated region
  $region22: #{rwkv_forward.1} parent=0 // pred_check
    _
  $region23: #{rwkv_forward.1} parent=0 // pred_check_branch
    %39 = sbr.rel (0) target = $region25
  $region24: #{rwkv_forward.1} parent=0 // pred_region
    _
  $region25: #{rwkv_forward.1} parent=0 // pred_fallthru
    _
  // Predicated region
  $region26: #{rwkv_forward.1} parent=0 // pred_check
    _
  $region27: #{rwkv_forward.1} parent=0 // pred_check_branch
    %41 = sbr.rel (0) target = $region29
  $region28: #{rwkv_forward.1} parent=0 // pred_region
    _
  $region29: #{rwkv_forward.1} parent=0 // pred_fallthru
    _
  // Predicated region
  $region30: #{rwkv_forward.1} parent=0 // pred_check
    _
  $region31: #{rwkv_forward.1} parent=0 // pred_check_branch
    %43 = sbr.rel (0) target = $region33
  $region32: #{rwkv_forward.1} parent=0 // pred_region
    _
  $region33: #{rwkv_forward.1} parent=0 // pred_fallthru
    _
  // Predicated region
  $region34: #{rwkv_forward.1} parent=0 // pred_check
    _
  $region35: #{rwkv_forward.1} parent=0 // pred_check_branch
    %45 = sbr.rel (0) target = $region37
  $region36: #{rwkv_forward.1} parent=0 // pred_region
    _
  $region37: #{rwkv_forward.1} parent=0 // pred_fallthru
    _
  // Predicated region
  $region38: #{rwkv_forward.1} parent=0 // pred_check
    _
  $region39: #{rwkv_forward.1} parent=0 // pred_check_branch
    %47 = sbr.rel (0) target = $region41
  $region40: #{rwkv_forward.1} parent=0 // pred_region
    _
  $region41: #{rwkv_forward.1} parent=0 // pred_fallthru
    _
  // Predicated region
  $region42: #{rwkv_forward.1} parent=0 // pred_check
    _
  $region43: #{rwkv_forward.1} parent=0 // pred_check_branch
    %49 = sbr.rel (0) target = $region45
  $region44: #{rwkv_forward.1} parent=0 // pred_region
    _
  $region45: #{rwkv_forward.1} parent=0 // pred_fallthru
    _
  // Predicated region
  $region46: #{rwkv_forward.1} parent=0 // pred_check
    _
  $region47: #{rwkv_forward.1} parent=0 // pred_check_branch
    %51 = sbr.rel (0) target = $region49
  $region48: #{rwkv_forward.1} parent=0 // pred_region
    _
  $region49: #{rwkv_forward.1} parent=0 // pred_fallthru
    _
  // Predicated region
  $region50: #{rwkv_forward.1} parent=0 // pred_check
    _
  $region51: #{rwkv_forward.1} parent=0 // pred_check_branch
    %53 = sbr.rel (0) target = $region53
  $region52: #{rwkv_forward.1} parent=0 // pred_region
    _
  $region53: #{rwkv_forward.1} parent=0 // pred_fallthru
    _
  // Predicated region
  $region54: #{rwkv_forward.1} parent=0 // pred_check
    _
  $region55: #{rwkv_forward.1} parent=0 // pred_check_branch
    %55 = sbr.rel (0) target = $region57
  $region56: #{rwkv_forward.1} parent=0 // pred_region
    _
  $region57: #{rwkv_forward.1} parent=0 // pred_fallthru
    _
  // Predicated region
  $region58: #{rwkv_forward.1} parent=0 // pred_check
    _
  $region59: #{rwkv_forward.1} parent=0 // pred_check_branch
    %57 = sbr.rel (0) target = $region61
  $region60: #{rwkv_forward.1} parent=0 // pred_region
    _
  $region61: #{rwkv_forward.1} parent=0 // pred_fallthru
    _
  // Predicated region
  $region62: #{rwkv_forward.1} parent=0 // pred_check
    _
  $region63: #{rwkv_forward.1} parent=0 // pred_check_branch
    %59 = sbr.rel (0) target = $region65
  $region64: #{rwkv_forward.1} parent=0 // pred_region
    _
  $region65: #{rwkv_forward.1} parent=0 // pred_fallthru
    _
  // Predicated region
  $region66: #{rwkv_forward.1} parent=0 // pred_check
    _
  $region67: #{rwkv_forward.1} parent=0 // pred_check_branch
    %61 = sbr.rel (0) target = $region69
  $region68: #{rwkv_forward.1} parent=0 // pred_region
    _
  $region69: #{rwkv_forward.1} parent=0 // pred_fallthru
    _
  // Predicated region
  $region70: #{rwkv_forward.1} parent=0 // pred_check
    _
  $region71: #{rwkv_forward.1} parent=0 // pred_check_branch
    %63 = sbr.rel (0) target = $region73
  $region72: #{rwkv_forward.1} parent=0 // pred_region
    _
  $region73: #{rwkv_forward.1} parent=0 // pred_fallthru
    _
  // Predicated region
  $region74: #{rwkv_forward.1} parent=0 // pred_check
    _
  $region75: #{rwkv_forward.1} parent=0 // pred_check_branch
    %65 = sbr.rel (0) target = $region77
  $region76: #{rwkv_forward.1} parent=0 // pred_region
    _
  $region77: #{rwkv_forward.1} parent=0 // pred_fallthru
    _
  // Predicated region
  $region78: #{rwkv_forward.1} parent=0 // pred_check
    _
  $region79: #{rwkv_forward.1} parent=0 // pred_check_branch
    %67 = sbr.rel (0) target = $region81
  $region80: #{rwkv_forward.1} parent=0 // pred_region
    _
  $region81: #{rwkv_forward.1} parent=0 // pred_fallthru
    _
  // Predicated region
  $region82: #{rwkv_forward.1} parent=0 // pred_check
    _
  $region83: #{rwkv_forward.1} parent=0 // pred_check_branch
    %69 = sbr.rel (0) target = $region85
  $region84: #{rwkv_forward.1} parent=0 // pred_region
    _
  $region85: #{rwkv_forward.1} parent=0 // pred_fallthru
    _
  %v70 = vlaneseq
  %v71 = vshrl.u32 %v70, 7
  %v72 = vadd.s32 %v71, 8
  %v73 = vadd.s32 %v71, 16
  %v74 = vadd.s32 %v71, 24
  %v75 = vand.u32 %v71, 15
  %v76 = vand.u32 %v72, 15
  %v77 = vand.u32 %v73, 15
  %v78 = vand.u32 %v74, 15
  %vm79 = vcmp.eq.s32.totalorder %v75, 0
  %vm80 = vcmp.eq.s32.totalorder %v76, 0
  %vm81 = vcmp.eq.s32.totalorder %v77, 0
  %vm82 = vcmp.eq.s32.totalorder %v78, 0
  %v83 = vld [vmem:[%s0] sm:$0xff]
  %v84 = vld [vmem:[%s0 + $0x8] sm:$0xff]
  %v85 = vld [vmem:[%s0 + $0x10] sm:$0xff]
  %v86 = vld [vmem:[%s0 + $0x18] sm:$0xff]
  %v87 = vld [vmem:[%s1] sm:$0x7f]
  %v88 = vld [vmem:[%s2] sm:$0x1]
  %v90 = vlaneseq
  %v91 = vshrl.u32 %v90, 7
  %v92 = vsub.s32 0, %v91
  %v93 = vrot.slane %v88, %v92
  %vm95 = vcmask 56320
  %v97 = vsel %vm95, %v83, 0
  %v100 = vsel %vm95, %v84, 0
  %v103 = vsel %vm95, %v85, 0
  %v106 = vsel %vm95, %v86, 0
  %vm108 = vcmask 1046528
  %v110 = vsel %vm108, %v87, 0
  %112 = vmatprep.subr.mxu0 0.0
  %113 = vmatpush1.msra.mxu0 %v110
  %114 = vmatprep.subr.mxu0 0.0
  %115 = vmatpush1.msra.mxu0 0.0
  %116 = vmatprep.subr.mxu0 0.0
  %117 = vmatpush1.msra.mxu0 0.0
  %118 = vmatprep.subr.mxu0 0.0
  %119 = vmatpush1.msra.mxu0 0.0
  %120 = vmatprep.subr.mxu0 0.0
  %121 = vmatpush1.msra.mxu0 0.0
  %122 = vmatprep.subr.mxu0 0.0
  %123 = vmatpush1.msra.mxu0 0.0
  %124 = vmatprep.subr.mxu0 0.0
  %125 = vmatpush1.msra.mxu0 0.0
  %126 = vmatprep.subr.mxu0 0.0
  %127 = vmatpush1.msra.mxu0 0.0
  %128 = vmatprep.subr.mxu0 0.0
  %129 = vmatpush1.msra.mxu0 0.0
  %130 = vmatprep.subr.mxu0 0.0
  %131 = vmatpush1.msra.mxu0 0.0
  %132 = vmatprep.subr.mxu0 0.0
  %133 = vmatpush1.msra.mxu0 0.0
  %134 = vmatprep.subr.mxu0 0.0
  %135 = vmatpush1.msra.mxu0 0.0
  %136 = vmatprep.subr.mxu0 0.0
  %137 = vmatpush1.msra.mxu0 0.0
  %138 = vmatprep.subr.mxu0 0.0
  %139 = vmatpush1.msra.mxu0 0.0
  %140 = vmatprep.subr.mxu0 0.0
  %141 = vmatpush1.msra.mxu0 0.0
  %142 = vmatprep.subr.mxu0 0.0
  %143 = vmatpush1.msra.mxu0 0.0
  %144 = vmatprep.subr.mxu0 0.0
  %145 = vmatpush1.msra.mxu0 0.0
  %146 = vmatprep.subr.mxu0 0.0
  %147 = vmatpush1.msra.mxu0 0.0
  %148 = vmatprep.subr.mxu0 0.0
  %149 = vmatpush1.msra.mxu0 0.0
  %150 = vmatprep.subr.mxu0 0.0
  %151 = vmatpush1.msra.mxu0 0.0
  %152 = vmatprep.subr.mxu0 0.0
  %153 = vmatpush1.msra.mxu0 0.0
  %154 = vmatprep.subr.mxu0 0.0
  %155 = vmatpush1.msra.mxu0 0.0
  %156 = vmatprep.subr.mxu0 0.0
  %157 = vmatpush1.msra.mxu0 0.0
  %158 = vmatprep.subr.mxu0 0.0
  %159 = vmatpush1.msra.mxu0 0.0
  %160 = vmatprep.subr.mxu0 0.0
  %161 = vmatpush1.msra.mxu0 0.0
  %162 = vmatprep.subr.mxu0 0.0
  %163 = vmatpush1.msra.mxu0 0.0
  %164 = vmatprep.subr.mxu0 0.0
  %165 = vmatpush1.msra.mxu0 0.0
  %166 = vmatprep.subr.mxu0 0.0
  %167 = vmatpush1.msra.mxu0 0.0
  %168 = vmatprep.subr.mxu0 0.0
  %169 = vmatpush1.msra.mxu0 0.0
  %170 = vmatprep.subr.mxu0 0.0
  %171 = vmatpush1.msra.mxu0 0.0
  %172 = vmatprep.subr.mxu0 0.0
  %173 = vmatpush1.msra.mxu0 0.0
  %174 = vmatprep.subr.mxu0 0.0
  %175 = vmatpush1.msra.mxu0 0.0
  %176 = vmatprep.mubr.f32.mxu0 0.0
  %177 = vmatmul.mubr.f32.gmra.mrb[0].mxu0 %v97
  %v178 = vpop.f32.mrb[0].mxu0
  %v179 = vadd.f32 %v93, %v178
  %v180 = vpop.f32.mrb[0].mxu0
  %181 = vmatprep.mubr.f32.mxu0 0.0
  %182 = vmatmul.mubr.f32.gmra.mrb[0].mxu0 %v100
  %v183 = vpop.f32.mrb[0].mxu0
  %v184 = vadd.f32 %v93, %v183
  %v185 = vpop.f32.mrb[0].mxu0
  %186 = vmatprep.mubr.f32.mxu0 0.0
  %187 = vmatmul.mubr.f32.gmra.mrb[0].mxu0 %v103
  %v188 = vpop.f32.mrb[0].mxu0
  %v189 = vadd.f32 %v93, %v188
  %v190 = vpop.f32.mrb[0].mxu0
  %191 = vmatprep.mubr.f32.mxu0 0.0
  %192 = vmatmul.mubr.f32.gmra.mrb[0].mxu0 %v106
  %v193 = vpop.f32.mrb[0].mxu0
  %v194 = vadd.f32 %v93, %v193
  %v195 = vpop.f32.mrb[0].mxu0
  %196 = vdwg.mxu0
  %v197 = vmax.f32 %v179, 0.0
  %v198 = vmax.f32 %v184, 0.0
  %v199 = vmax.f32 %v189, 0.0
  %v200 = vmax.f32 %v194, 0.0
  %vm201 = vcmp.ge.s32.totalorder %v75, 2
  %vm202 = vcmp.ge.s32.totalorder %v76, 2
  %vm203 = vcmp.ge.s32.totalorder %v77, 2
  %vm204 = vcmp.ge.s32.totalorder %v78, 2
  %v205 = vrot.slane %v197, 6
  %v206 = vrot.slane %v198, 6
  %v207 = vrot.slane %v199, 6
  %v208 = vrot.slane %v200, 6
  %vm209 = vcmp.lt.s32.totalorder %v71, 2
  %v210 = vsel %vm209, %v207, %v208
  %v211 = vsel %vm209, %v206, %v207
  %v212 = vsel %vm209, %v205, %v206
  %v213 = vsel %vm209, %v208, %v205
  %v214 = vsel %vm201, 1, 0
  %v215 = vsel %vm202, 1, 0
  %v216 = vsel %vm203, 1, 0
  %v217 = vsel %vm204, 1, 0
  %vm218 = vcmp.eq.s32.totalorder %v214, 1
  %vm219 = vcmp.eq.s32.totalorder %v215, 1
  %vm220 = vcmp.eq.s32.totalorder %v216, 1
  %vm221 = vcmp.eq.s32.totalorder %v217, 1
  %v222 = vsel %vm218, %v213, 0.0
  %v223 = vsel %vm219, %v212, 0.0
  %v224 = vsel %vm220, %v211, 0.0
  %v225 = vsel %vm221, %v210, 0.0
  %vm226 = vcmp.ge.s32.totalorder %v75, 1
  %vm227 = vcmp.ge.s32.totalorder %v76, 1
  %vm228 = vcmp.ge.s32.totalorder %v77, 1
  %vm229 = vcmp.ge.s32.totalorder %v78, 1
  %v230 = vrot.slane %v197, 7
  %v231 = vrot.slane %v198, 7
  %v232 = vrot.slane %v199, 7
  %v233 = vrot.slane %v200, 7
  %vm234 = vcmp.lt.s32.totalorder %v71, 1
  %v235 = vsel %vm234, %v232, %v233
  %v236 = vsel %vm234, %v231, %v232
  %v237 = vsel %vm234, %v230, %v231
  %v238 = vsel %vm234, %v233, %v230
  %v239 = vsel %vm226, 1, 0
  %v240 = vsel %vm227, 1, 0
  %v241 = vsel %vm228, 1, 0
  %v242 = vsel %vm229, 1, 0
  %vm243 = vcmp.eq.s32.totalorder %v239, 1
  %vm244 = vcmp.eq.s32.totalorder %v240, 1
  %vm245 = vcmp.eq.s32.totalorder %v241, 1
  %vm246 = vcmp.eq.s32.totalorder %v242, 1
  %v247 = vsel %vm243, %v238, 0.0
  %v248 = vsel %vm244, %v237, 0.0
  %v249 = vsel %vm245, %v236, 0.0
  %v250 = vsel %vm246, %v235, 0.0
  %vm251 = vcmp.lt.s32.totalorder %v75, 15
  %vm252 = vcmp.lt.s32.totalorder %v76, 15
  %vm253 = vcmp.lt.s32.totalorder %v77, 15
  %vm254 = vcmp.lt.s32.totalorder %v78, 15
  %v255 = vrot.slane %v197, 1
  %v256 = vrot.slane %v198, 1
  %v257 = vrot.slane %v199, 1
  %v258 = vrot.slane %v200, 1
  %vm259 = vcmp.lt.s32.totalorder %v71, 7
  %v260 = vsel %vm259, %v257, %v258
  %v261 = vsel %vm259, %v256, %v257
  %v262 = vsel %vm259, %v255, %v256
  %v263 = vsel %vm259, %v258, %v255
  %v264 = vsel %vm251, 1, 0
  %v265 = vsel %vm252, 1, 0
  %v266 = vsel %vm253, 1, 0
  %v267 = vsel %vm254, 1, 0
  %vm268 = vcmp.eq.s32.totalorder %v264, 1
  %vm269 = vcmp.eq.s32.totalorder %v265, 1
  %vm270 = vcmp.eq.s32.totalorder %v266, 1
  %vm271 = vcmp.eq.s32.totalorder %v267, 1
  %v272 = vsel %vm268, %v262, 0.0
  %v273 = vsel %vm269, %v261, 0.0
  %v274 = vsel %vm270, %v260, 0.0
  %v275 = vsel %vm271, %v263, 0.0
  %vm276 = vcmp.lt.s32.totalorder %v75, 14
  %vm277 = vcmp.lt.s32.totalorder %v76, 14
  %vm278 = vcmp.lt.s32.totalorder %v77, 14
  %vm279 = vcmp.lt.s32.totalorder %v78, 14
  %v280 = vrot.slane %v197, 2
  %v281 = vrot.slane %v198, 2
  %v282 = vrot.slane %v199, 2
  %v283 = vrot.slane %v200, 2
  %vm284 = vcmp.lt.s32.totalorder %v71, 6
  %v285 = vsel %vm284, %v282, %v283
  %v286 = vsel %vm284, %v281, %v282
  %v287 = vsel %vm284, %v280, %v281
  %v288 = vsel %vm284, %v283, %v280
  %v289 = vsel %vm276, 1, 0
  %v290 = vsel %vm277, 1, 0
  %v291 = vsel %vm278, 1, 0
  %v292 = vsel %vm279, 1, 0
  %vm293 = vcmp.eq.s32.totalorder %v289, 1
  %vm294 = vcmp.eq.s32.totalorder %v290, 1
  %vm295 = vcmp.eq.s32.totalorder %v291, 1
  %vm296 = vcmp.eq.s32.totalorder %v292, 1
  %v297 = vsel %vm293, %v287, 0.0
  %v298 = vsel %vm294, %v286, 0.0
  %v299 = vsel %vm295, %v285, 0.0
  %v300 = vsel %vm296, %v288, 0.0
  %305 = vrot.lane.b32.xlu0 %v247, 16
  %v306 = vpop.permute.xlu0 %305
  %307 = vrot.lane.b32.xlu0 %v248, 16
  %v308 = vpop.permute.xlu0 %307
  %309 = vrot.lane.b32.xlu0 %v249, 16
  %v310 = vpop.permute.xlu0 %309
  %311 = vrot.lane.b32.xlu0 %v250, 16
  %v312 = vpop.permute.xlu0 %311
  %321 = vrot.lane.b32.xlu0 %v197, 32
  %v322 = vpop.permute.xlu0 %321
  %323 = vrot.lane.b32.xlu0 %v198, 32
  %v324 = vpop.permute.xlu0 %323
  %325 = vrot.lane.b32.xlu0 %v199, 32
  %v326 = vpop.permute.xlu0 %325
  %327 = vrot.lane.b32.xlu0 %v200, 32
  %v328 = vpop.permute.xlu0 %327
  %337 = vrot.lane.b32.xlu0 %v272, 48
  %v338 = vpop.permute.xlu0 %337
  %339 = vrot.lane.b32.xlu0 %v273, 48
  %v340 = vpop.permute.xlu0 %339
  %341 = vrot.lane.b32.xlu0 %v274, 48
  %v342 = vpop.permute.xlu0 %341
  %343 = vrot.lane.b32.xlu0 %v275, 48
  %v344 = vpop.permute.xlu0 %343
  %353 = vrot.lane.b32.xlu0 %v297, 64
  %v354 = vpop.permute.xlu0 %353
  %355 = vrot.lane.b32.xlu0 %v298, 64
  %v356 = vpop.permute.xlu0 %355
  %357 = vrot.lane.b32.xlu0 %v299, 64
  %v358 = vpop.permute.xlu0 %357
  %359 = vrot.lane.b32.xlu0 %v300, 64
  %v360 = vpop.permute.xlu0 %359
  %vm365 = vcmask 130048
  %v366 = vsel %vm365, %v222, %v306
  %v367 = vsel %vm365, %v223, %v308
  %v368 = vsel %vm365, %v224, %v310
  %v369 = vsel %vm365, %v225, %v312
  %vm370 = vcmask 261120
  %v371 = vsel %vm370, %v366, %v322
  %v372 = vsel %vm370, %v367, %v324
  %v373 = vsel %vm370, %v368, %v326
  %v374 = vsel %vm370, %v369, %v328
  %vm375 = vcmask 392192
  %v376 = vsel %vm375, %v371, %v338
  %v377 = vsel %vm375, %v372, %v340
  %v378 = vsel %vm375, %v373, %v342
  %v379 = vsel %vm375, %v374, %v344
  %vm380 = vcmask 523264
  %v381 = vsel %vm380, %v376, %v354
  %v382 = vsel %vm380, %v377, %v356
  %v383 = vsel %vm380, %v378, %v358
  %v384 = vsel %vm380, %v379, %v360
  %v385 = vld [vmem:[%s3] sm:$0xff]
  %v386 = vld [vmem:[%s3 + $0x8] sm:$0xff]
  %v387 = vld [vmem:[%s3 + $0x10] sm:$0xff]
  %v388 = vld [vmem:[%s3 + $0x18] sm:$0xff]
  %v389 = vld [vmem:[%s3 + $0x20] sm:$0xff]
  %v390 = vld [vmem:[%s3 + $0x28] sm:$0xff]
  %v391 = vld [vmem:[%s3 + $0x30] sm:$0xff]
  %v392 = vld [vmem:[%s3 + $0x38] sm:$0xff]
  %v393 = vld [vmem:[%s3 + $0x40] sm:$0xff]
  %v394 = vld [vmem:[%s3 + $0x48] sm:$0xff]
  %v395 = vld [vmem:[%s4] sm:$0x1]
  %v397 = vlaneseq
  %v398 = vshrl.u32 %v397, 7
  %v399 = vsub.s32 0, %v398
  %v400 = vrot.slane %v395, %v399
  %vm402 = vcmask 654336
  %v404 = vsel %vm402, %v381, 0
  %v407 = vsel %vm402, %v382, 0
  %v410 = vsel %vm402, %v383, 0
  %v413 = vsel %vm402, %v384, 0
  %415 = vmatprep.subr.mxu0 0.0
  %416 = vmatpush1.msra.mxu0 %v385
  %417 = vmatprep.subr.mxu0 0.0
  %418 = vmatpush1.msra.mxu0 %v386
  %419 = vmatprep.subr.mxu0 0.0
  %420 = vmatpush1.msra.mxu0 %v387
  %421 = vmatprep.subr.mxu0 0.0
  %422 = vmatpush1.msra.mxu0 %v388
  %423 = vmatprep.subr.mxu0 0.0
  %424 = vmatpush1.msra.mxu0 %v389
  %425 = vmatprep.subr.mxu0 0.0
  %426 = vmatpush1.msra.mxu0 %v390
  %427 = vmatprep.subr.mxu0 0.0
  %428 = vmatpush1.msra.mxu0 %v391
  %429 = vmatprep.subr.mxu0 0.0
  %430 = vmatpush1.msra.mxu0 %v392
  %431 = vmatprep.subr.mxu0 0.0
  %432 = vmatpush1.msra.mxu0 %v393
  %433 = vmatprep.subr.mxu0 0.0
  %434 = vmatpush1.msra.mxu0 %v394
  %435 = vmatprep.subr.mxu0 0.0
  %436 = vmatpush1.msra.mxu0 0.0
  %437 = vmatprep.subr.mxu0 0.0
  %438 = vmatpush1.msra.mxu0 0.0
  %439 = vmatprep.subr.mxu0 0.0
  %440 = vmatpush1.msra.mxu0 0.0
  %441 = vmatprep.subr.mxu0 0.0
  %442 = vmatpush1.msra.mxu0 0.0
  %443 = vmatprep.subr.mxu0 0.0
  %444 = vmatpush1.msra.mxu0 0.0
  %445 = vmatprep.subr.mxu0 0.0
  %446 = vmatpush1.msra.mxu0 0.0
  %447 = vmatprep.subr.mxu0 0.0
  %448 = vmatpush1.msra.mxu0 0.0
  %449 = vmatprep.subr.mxu0 0.0
  %450 = vmatpush1.msra.mxu0 0.0
  %451 = vmatprep.subr.mxu0 0.0
  %452 = vmatpush1.msra.mxu0 0.0
  %453 = vmatprep.subr.mxu0 0.0
  %454 = vmatpush1.msra.mxu0 0.0
  %455 = vmatprep.subr.mxu0 0.0
  %456 = vmatpush1.msra.mxu0 0.0
  %457 = vmatprep.subr.mxu0 0.0
  %458 = vmatpush1.msra.mxu0 0.0
  %459 = vmatprep.subr.mxu0 0.0
  %460 = vmatpush1.msra.mxu0 0.0
  %461 = vmatprep.subr.mxu0 0.0
  %462 = vmatpush1.msra.mxu0 0.0
  %463 = vmatprep.subr.mxu0 0.0
  %464 = vmatpush1.msra.mxu0 0.0
  %465 = vmatprep.subr.mxu0 0.0
  %466 = vmatpush1.msra.mxu0 0.0
  %467 = vmatprep.subr.mxu0 0.0
  %468 = vmatpush1.msra.mxu0 0.0
  %469 = vmatprep.subr.mxu0 0.0
  %470 = vmatpush1.msra.mxu0 0.0
  %471 = vmatprep.subr.mxu0 0.0
  %472 = vmatpush1.msra.mxu0 0.0
  %473 = vmatprep.subr.mxu0 0.0
  %474 = vmatpush1.msra.mxu0 0.0
  %475 = vmatprep.subr.mxu0 0.0
  %476 = vmatpush1.msra.mxu0 0.0
  %477 = vmatprep.subr.mxu0 0.0
  %478 = vmatpush1.msra.mxu0 0.0
  %479 = vmatprep.mubr.f32.mxu0 0.0
  %480 = vmatmul.mubr.f32.gmra.mrb[0].mxu0 %v404
  %v481 = vpop.f32.mrb[0].mxu0
  %v482 = vadd.f32 %v400, %v481
  %v483 = vpop.f32.mrb[0].mxu0
  %484 = vmatprep.mubr.f32.mxu0 0.0
  %485 = vmatmul.mubr.f32.gmra.mrb[0].mxu0 %v407
  %v486 = vpop.f32.mrb[0].mxu0
  %v487 = vadd.f32 %v400, %v486
  %v488 = vpop.f32.mrb[0].mxu0
  %489 = vmatprep.mubr.f32.mxu0 0.0
  %490 = vmatmul.mubr.f32.gmra.mrb[0].mxu0 %v410
  %v491 = vpop.f32.mrb[0].mxu0
  %v492 = vadd.f32 %v400, %v491
  %v493 = vpop.f32.mrb[0].mxu0
  %494 = vmatprep.mubr.f32.mxu0 0.0
  %495 = vmatmul.mubr.f32.gmra.mrb[0].mxu0 %v413
  %v496 = vpop.f32.mrb[0].mxu0
  %v497 = vadd.f32 %v400, %v496
  %v498 = vpop.f32.mrb[0].mxu0
  %499 = vdwg.mxu0
  %v500 = vmax.f32 %v482, 0.0
  %v501 = vmax.f32 %v487, 0.0
  %v502 = vmax.f32 %v492, 0.0
  %v503 = vmax.f32 %v497, 0.0
  %v504 = vld [vmem:[%s5] sm:$0x1]
  %v505 = vld [vmem:[%s6] sm:$0x1]
  %v506 = vsel %vm370, %v500, 0.0
  %507 = vadd.xlane.f32.xlu0 %v506
  %v508 = vpop.xlane.xlu0 %507
  %v509 = vsel %vm370, %v501, 0.0
  %510 = vadd.xlane.f32.xlu0 %v509
  %v511 = vpop.xlane.xlu0 %510
  %v512 = vsel %vm370, %v502, 0.0
  %513 = vadd.xlane.f32.xlu0 %v512
  %v514 = vpop.xlane.xlu0 %513
  %v515 = vsel %vm370, %v503, 0.0
  %516 = vadd.xlane.f32.xlu0 %v515
  %v517 = vpop.xlane.xlu0 %516
  %v518 = vrcp.pop 32.0
  %v519 = vmul.f32 %v508, %v518
  %v520 = vmul.f32 %v511, %v518
  %v521 = vmul.f32 %v514, %v518
  %v522 = vmul.f32 %v517, %v518
  %v523 = vsub.f32 %v500, %v519
  %v524 = vsub.f32 %v501, %v520
  %v525 = vsub.f32 %v502, %v521
  %v526 = vsub.f32 %v503, %v522
  %v527 = vmul.f32 %v523, %v523
  %v528 = vmul.f32 %v524, %v524
  %v529 = vmul.f32 %v525, %v525
  %v530 = vmul.f32 %v526, %v526
  %v531 = vsel %vm370, %v527, 0.0
  %532 = vadd.xlane.f32.xlu0 %v531
  %v533 = vpop.xlane.xlu0 %532
  %v534 = vsel %vm370, %v528, 0.0
  %535 = vadd.xlane.f32.xlu0 %v534
  %v536 = vpop.xlane.xlu0 %535
  %v537 = vsel %vm370, %v529, 0.0
  %538 = vadd.xlane.f32.xlu0 %v537
  %v539 = vpop.xlane.xlu0 %538
  %v540 = vsel %vm370, %v530, 0.0
  %541 = vadd.xlane.f32.xlu0 %v540
  %v542 = vpop.xlane.xlu0 %541
  %v543 = vmul.f32 %v533, %v518
  %v544 = vmul.f32 %v536, %v518
  %v545 = vmul.f32 %v539, %v518
  %v546 = vmul.f32 %v542, %v518
  %v547 = vadd.f32 %v543, 1e-05
  %v548 = vadd.f32 %v544, 1e-05
  %v549 = vadd.f32 %v545, 1e-05
  %v550 = vadd.f32 %v546, 1e-05
  %v551 = vrsqrt.pop %v547
  %v552 = vrsqrt.pop %v548
  %v553 = vrsqrt.pop %v549
  %v554 = vrsqrt.pop %v550
  %v555 = vmul.f32 %v523, %v551
  %v556 = vmul.f32 %v524, %v552
  %v557 = vmul.f32 %v525, %v553
  %v558 = vmul.f32 %v526, %v554
  %v560 = vlaneseq
  %v561 = vshrl.u32 %v560, 7
  %v562 = vsub.s32 0, %v561
  %v563 = vrot.slane %v504, %v562
  %v565 = vmul.f32 %v555, %v563
  %v566 = vmul.f32 %v556, %v563
  %v567 = vmul.f32 %v557, %v563
  %v568 = vmul.f32 %v558, %v563
  %v570 = vlaneseq
  %v571 = vshrl.u32 %v570, 7
  %v572 = vsub.s32 0, %v571
  %v573 = vrot.slane %v505, %v572
  %v575 = vadd.f32 %v565, %v573
  %v576 = vadd.f32 %v566, %v573
  %v577 = vadd.f32 %v567, %v573
  %v578 = vadd.f32 %v568, %v573
  %v579 = vrot.slane %v575, 7
  %v580 = vrot.slane %v576, 7
  %v581 = vrot.slane %v577, 7
  %v582 = vrot.slane %v578, 7
  %v583 = vsel %vm234, %v581, %v582
  %v584 = vsel %vm234, %v580, %v581
  %v585 = vsel %vm234, %v579, %v580
  %v586 = vsel %vm234, %v582, %v579
  %v587 = vsel %vm79, 1, 0
  %v588 = vsel %vm80, 1, 0
  %v589 = vsel %vm81, 1, 0
  %v590 = vsel %vm82, 1, 0
  %vm591 = vcmp.eq.s32.totalorder %v587, 1
  %vm592 = vcmp.eq.s32.totalorder %v588, 1
  %vm593 = vcmp.eq.s32.totalorder %v589, 1
  %vm594 = vcmp.eq.s32.totalorder %v590, 1
  %v595 = vsel %vm591, 0.0, %v586
  %v596 = vsel %vm592, 0.0, %v585
  %v597 = vsel %vm593, 0.0, %v584
  %v598 = vsel %vm594, 0.0, %v583
  %603 = vrot.lane.b32.xlu0 %v575, 32
  %v604 = vpop.permute.xlu0 %603
  %605 = vrot.lane.b32.xlu0 %v576, 32
  %v606 = vpop.permute.xlu0 %605
  %607 = vrot.lane.b32.xlu0 %v577, 32
  %v608 = vpop.permute.xlu0 %607
  %609 = vrot.lane.b32.xlu0 %v578, 32
  %v610 = vpop.permute.xlu0 %609
  %v615 = vsel %vm370, %v595, %v604
  %v616 = vsel %vm370, %v596, %v606
  %v617 = vsel %vm370, %v597, %v608
  %v618 = vsel %vm370, %v598, %v610
  %v619 = vld [vmem:[%s9] sm:$0xff]
  %v620 = vld [vmem:[%s9 + $0x8] sm:$0xff]
  %v621 = vld [vmem:[%s9 + $0x10] sm:$0xff]
  %v622 = vld [vmem:[%s9 + $0x18] sm:$0xff]
  %v623 = vld [vmem:[%s9 + $0x20] sm:$0xff]
  %v624 = vld [vmem:[%s9 + $0x28] sm:$0xff]
  %v625 = vld [vmem:[%s9 + $0x30] sm:$0xff]
  %v626 = vld [vmem:[%s9 + $0x38] sm:$0xff]
  %v628 = vsel %vm380, %v615, 0
  %v631 = vsel %vm380, %v616, 0
  %v634 = vsel %vm380, %v617, 0
  %v637 = vsel %vm380, %v618, 0
  %639 = vmatprep.subr.mxu0 0.0
  %640 = vmatpush1.msra.mxu0 %v619
  %641 = vmatprep.subr.mxu0 0.0
  %642 = vmatpush1.msra.mxu0 %v620
  %643 = vmatprep.subr.mxu0 0.0
  %644 = vmatpush1.msra.mxu0 %v621
  %645 = vmatprep.subr.mxu0 0.0
  %646 = vmatpush1.msra.mxu0 %v622
  %647 = vmatprep.subr.mxu0 0.0
  %648 = vmatpush1.msra.mxu0 %v623
  %649 = vmatprep.subr.mxu0 0.0
  %650 = vmatpush1.msra.mxu0 %v624
  %651 = vmatprep.subr.mxu0 0.0
  %652 = vmatpush1.msra.mxu0 %v625
  %653 = vmatprep.subr.mxu0 0.0
  %654 = vmatpush1.msra.mxu0 %v626
  %655 = vmatprep.subr.mxu0 0.0
  %656 = vmatpush1.msra.mxu0 0.0
  %657 = vmatprep.subr.mxu0 0.0
  %658 = vmatpush1.msra.mxu0 0.0
  %659 = vmatprep.subr.mxu0 0.0
  %660 = vmatpush1.msra.mxu0 0.0
  %661 = vmatprep.subr.mxu0 0.0
  %662 = vmatpush1.msra.mxu0 0.0
  %663 = vmatprep.subr.mxu0 0.0
  %664 = vmatpush1.msra.mxu0 0.0
  %665 = vmatprep.subr.mxu0 0.0
  %666 = vmatpush1.msra.mxu0 0.0
  %667 = vmatprep.subr.mxu0 0.0
  %668 = vmatpush1.msra.mxu0 0.0
  %669 = vmatprep.subr.mxu0 0.0
  %670 = vmatpush1.msra.mxu0 0.0
  %671 = vmatprep.subr.mxu0 0.0
  %672 = vmatpush1.msra.mxu0 0.0
  %673 = vmatprep.subr.mxu0 0.0
  %674 = vmatpush1.msra.mxu0 0.0
  %675 = vmatprep.subr.mxu0 0.0
  %676 = vmatpush1.msra.mxu0 0.0
  %677 = vmatprep.subr.mxu0 0.0
  %678 = vmatpush1.msra.mxu0 0.0
  %679 = vmatprep.subr.mxu0 0.0
  %680 = vmatpush1.msra.mxu0 0.0
  %681 = vmatprep.subr.mxu0 0.0
  %682 = vmatpush1.msra.mxu0 0.0
  %683 = vmatprep.subr.mxu0 0.0
  %684 = vmatpush1.msra.mxu0 0.0
  %685 = vmatprep.subr.mxu0 0.0
  %686 = vmatpush1.msra.mxu0 0.0
  %687 = vmatprep.subr.mxu0 0.0
  %688 = vmatpush1.msra.mxu0 0.0
  %689 = vmatprep.subr.mxu0 0.0
  %690 = vmatpush1.msra.mxu0 0.0
  %691 = vmatprep.subr.mxu0 0.0
  %692 = vmatpush1.msra.mxu0 0.0
  %693 = vmatprep.subr.mxu0 0.0
  %694 = vmatpush1.msra.mxu0 0.0
  %695 = vmatprep.subr.mxu0 0.0
  %696 = vmatpush1.msra.mxu0 0.0
  %697 = vmatprep.subr.mxu0 0.0
  %698 = vmatpush1.msra.mxu0 0.0
  %699 = vmatprep.subr.mxu0 0.0
  %700 = vmatpush1.msra.mxu0 0.0
  %701 = vmatprep.subr.mxu0 0.0
  %702 = vmatpush1.msra.mxu0 0.0
  %703 = vmatprep.mubr.f32.mxu0 0.0
  %704 = vmatmul.mubr.f32.gmra.mrb[0].mxu0 %v628
  %v705 = vpop.f32.mrb[0].mxu0
  %v706 = vadd.f32 0.0, %v705
  %v707 = vpop.f32.mrb[0].mxu0
  %708 = vmatprep.mubr.f32.mxu0 0.0
  %709 = vmatmul.mubr.f32.gmra.mrb[0].mxu0 %v631
  %v710 = vpop.f32.mrb[0].mxu0
  %v711 = vadd.f32 0.0, %v710
  %v712 = vpop.f32.mrb[0].mxu0
  %713 = vmatprep.mubr.f32.mxu0 0.0
  %714 = vmatmul.mubr.f32.gmra.mrb[0].mxu0 %v634
  %v715 = vpop.f32.mrb[0].mxu0
  %v716 = vadd.f32 0.0, %v715
  %v717 = vpop.f32.mrb[0].mxu0
  %718 = vmatprep.mubr.f32.mxu0 0.0
  %719 = vmatmul.mubr.f32.gmra.mrb[0].mxu0 %v637
  %v720 = vpop.f32.mrb[0].mxu0
  %v721 = vadd.f32 0.0, %v720
  %v722 = vpop.f32.mrb[0].mxu0
  %723 = vdwg.mxu0
  %v724 = vxor.u32 %v706, 2147483648
  %v725 = vxor.u32 %v711, 2147483648
  %v726 = vxor.u32 %v716, 2147483648
  %v727 = vxor.u32 %v721, 2147483648
  %v728 = vmul.f32 %v724, 1.442695
  %v729 = vpow.pop %v728
  %v730 = vmul.f32 %v725, 1.442695
  %v731 = vpow.pop %v730
  %v732 = vmul.f32 %v726, 1.442695
  %v733 = vpow.pop %v732
  %v734 = vmul.f32 %v727, 1.442695
  %v735 = vpow.pop %v734
  %v736 = vadd.f32 %v729, 1.0
  %v737 = vadd.f32 %v731, 1.0
  %v738 = vadd.f32 %v733, 1.0
  %v739 = vadd.f32 %v735, 1.0
  %v740 = vrcp.pop %v736
  %v741 = vmul.f32 1.0, %v740
  %v742 = vrcp.pop %v737
  %v743 = vmul.f32 1.0, %v742
  %v744 = vrcp.pop %v738
  %v745 = vmul.f32 1.0, %v744
  %v746 = vrcp.pop %v739
  %v747 = vmul.f32 1.0, %v746
  %v748 = vsub.f32 1.0, %v741
  %v749 = vsub.f32 1.0, %v743
  %v750 = vsub.f32 1.0, %v745
  %v751 = vsub.f32 1.0, %v747
  %756 = vrot.lane.b32.xlu0 %v706, 96
  %v757 = vpop.permute.xlu0 %756
  %758 = vrot.lane.b32.xlu0 %v711, 96
  %v759 = vpop.permute.xlu0 %758
  %760 = vrot.lane.b32.xlu0 %v716, 96
  %v761 = vpop.permute.xlu0 %760
  %762 = vrot.lane.b32.xlu0 %v721, 96
  %v763 = vpop.permute.xlu0 %762
  %v768 = vmul.f32 %v748, %v757
  %v769 = vmul.f32 %v749, %v759
  %v770 = vmul.f32 %v750, %v761
  %v771 = vmul.f32 %v751, %v763
  %v772 = vrot.slane %v768, 7
  %v773 = vrot.slane %v769, 7
  %v774 = vrot.slane %v770, 7
  %v775 = vrot.slane %v771, 7
  %v776 = vsel %vm234, %v774, %v775
  %v777 = vsel %vm234, %v773, %v774
  %v778 = vsel %vm234, %v772, %v773
  %v779 = vsel %vm234, %v775, %v772
  %v780 = vsel %vm243, %v779, 0.0
  %v781 = vsel %vm244, %v778, 0.0
  %v782 = vsel %vm245, %v777, 0.0
  %v783 = vsel %vm246, %v776, 0.0
  %v784 = vmul.f32 %v741, %v780
  %v785 = vmul.f32 %v743, %v781
  %v786 = vmul.f32 %v745, %v782
  %v787 = vmul.f32 %v747, %v783
  %v788 = vadd.f32 %v784, %v768
  %v789 = vadd.f32 %v785, %v769
  %v790 = vadd.f32 %v786, %v770
  %v791 = vadd.f32 %v787, %v771
  %v792 = vrot.slane %v741, 7
  %v793 = vrot.slane %v743, 7
  %v794 = vrot.slane %v745, 7
  %v795 = vrot.slane %v747, 7
  %v796 = vsel %vm234, %v794, %v795
  %v797 = vsel %vm234, %v793, %v794
  %v798 = vsel %vm234, %v792, %v793
  %v799 = vsel %vm234, %v795, %v792
  %v800 = vsel %vm243, %v799, 1.0
  %v801 = vsel %vm244, %v798, 1.0
  %v802 = vsel %vm245, %v797, 1.0
  %v803 = vsel %vm246, %v796, 1.0
  %v804 = vmul.f32 %v741, %v800
  %v805 = vmul.f32 %v743, %v801
  %v806 = vmul.f32 %v745, %v802
  %v807 = vmul.f32 %v747, %v803
  %v808 = vrot.slane %v788, 6
  %v809 = vrot.slane %v789, 6
  %v810 = vrot.slane %v790, 6
  %v811 = vrot.slane %v791, 6
  %v812 = vsel %vm209, %v810, %v811
  %v813 = vsel %vm209, %v809, %v810
  %v814 = vsel %vm209, %v808, %v809
  %v815 = vsel %vm209, %v811, %v808
  %v816 = vsel %vm218, %v815, 0.0
  %v817 = vsel %vm219, %v814, 0.0
  %v818 = vsel %vm220, %v813, 0.0
  %v819 = vsel %vm221, %v812, 0.0
  %v820 = vmul.f32 %v804, %v816
  %v821 = vmul.f32 %v805, %v817
  %v822 = vmul.f32 %v806, %v818
  %v823 = vmul.f32 %v807, %v819
  %v824 = vadd.f32 %v820, %v788
  %v825 = vadd.f32 %v821, %v789
  %v826 = vadd.f32 %v822, %v790
  %v827 = vadd.f32 %v823, %v791
  %v828 = vrot.slane %v804, 6
  %v829 = vrot.slane %v805, 6
  %v830 = vrot.slane %v806, 6
  %v831 = vrot.slane %v807, 6
  %v832 = vsel %vm209, %v830, %v831
  %v833 = vsel %vm209, %v829, %v830
  %v834 = vsel %vm209, %v828, %v829
  %v835 = vsel %vm209, %v831, %v828
  %v836 = vsel %vm218, %v835, 1.0
  %v837 = vsel %vm219, %v834, 1.0
  %v838 = vsel %vm220, %v833, 1.0
  %v839 = vsel %vm221, %v832, 1.0
  %v840 = vmul.f32 %v804, %v836
  %v841 = vmul.f32 %v805, %v837
  %v842 = vmul.f32 %v806, %v838
  %v843 = vmul.f32 %v807, %v839
  %vm844 = vcmp.ge.s32.totalorder %v75, 4
  %vm845 = vcmp.ge.s32.totalorder %v76, 4
  %vm846 = vcmp.ge.s32.totalorder %v77, 4
  %vm847 = vcmp.ge.s32.totalorder %v78, 4
  %v848 = vrot.slane %v824, 4
  %v849 = vrot.slane %v825, 4
  %v850 = vrot.slane %v826, 4
  %v851 = vrot.slane %v827, 4
  %vm852 = vcmp.lt.s32.totalorder %v71, 4
  %v853 = vsel %vm852, %v850, %v851
  %v854 = vsel %vm852, %v849, %v850
  %v855 = vsel %vm852, %v848, %v849
  %v856 = vsel %vm852, %v851, %v848
  %v857 = vsel %vm844, 1, 0
  %v858 = vsel %vm845, 1, 0
  %v859 = vsel %vm846, 1, 0
  %v860 = vsel %vm847, 1, 0
  %vm861 = vcmp.eq.s32.totalorder %v857, 1
  %vm862 = vcmp.eq.s32.totalorder %v858, 1
  %vm863 = vcmp.eq.s32.totalorder %v859, 1
  %vm864 = vcmp.eq.s32.totalorder %v860, 1
  %v865 = vsel %vm861, %v856, 0.0
  %v866 = vsel %vm862, %v855, 0.0
  %v867 = vsel %vm863, %v854, 0.0
  %v868 = vsel %vm864, %v853, 0.0
  %v869 = vmul.f32 %v840, %v865
  %v870 = vmul.f32 %v841, %v866
  %v871 = vmul.f32 %v842, %v867
  %v872 = vmul.f32 %v843, %v868
  %v873 = vadd.f32 %v869, %v824
  %v874 = vadd.f32 %v870, %v825
  %v875 = vadd.f32 %v871, %v826
  %v876 = vadd.f32 %v872, %v827
  %v877 = vrot.slane %v840, 4
  %v878 = vrot.slane %v841, 4
  %v879 = vrot.slane %v842, 4
  %v880 = vrot.slane %v843, 4
  %v881 = vsel %vm852, %v879, %v880
  %v882 = vsel %vm852, %v878, %v879
  %v883 = vsel %vm852, %v877, %v878
  %v884 = vsel %vm852, %v880, %v877
  %v885 = vsel %vm861, %v884, 1.0
  %v886 = vsel %vm862, %v883, 1.0
  %v887 = vsel %vm863, %v882, 1.0
  %v888 = vsel %vm864, %v881, 1.0
  %v889 = vmul.f32 %v840, %v885
  %v890 = vmul.f32 %v841, %v886
  %v891 = vmul.f32 %v842, %v887
  %v892 = vmul.f32 %v843, %v888
  %vm893 = vcmp.ge.s32.totalorder %v75, 8
  %vm894 = vcmp.ge.s32.totalorder %v76, 8
  %vm895 = vcmp.ge.s32.totalorder %v77, 8
  %vm896 = vcmp.ge.s32.totalorder %v78, 8
  %v897 = vsel %vm893, 1, 0
  %v898 = vsel %vm894, 1, 0
  %v899 = vsel %vm895, 1, 0
  %v900 = vsel %vm896, 1, 0
  %vm901 = vcmp.eq.s32.totalorder %v897, 1
  %vm902 = vcmp.eq.s32.totalorder %v898, 1
  %vm903 = vcmp.eq.s32.totalorder %v899, 1
  %vm904 = vcmp.eq.s32.totalorder %v900, 1
  %v905 = vsel %vm901, %v876, 0.0
  %v906 = vsel %vm902, %v873, 0.0
  %v907 = vsel %vm903, %v874, 0.0
  %v908 = vsel %vm904, %v875, 0.0
  %v909 = vmul.f32 %v889, %v905
  %v910 = vmul.f32 %v890, %v906
  %v911 = vmul.f32 %v891, %v907
  %v912 = vmul.f32 %v892, %v908
  %v913 = vadd.f32 %v909, %v873
  %v914 = vadd.f32 %v910, %v874
  %v915 = vadd.f32 %v911, %v875
  %v916 = vadd.f32 %v912, %v876
  %921 = vrot.lane.b32.xlu0 %v913, 64
  %v922 = vpop.permute.xlu0 %921
  %923 = vrot.lane.b32.xlu0 %v914, 64
  %v924 = vpop.permute.xlu0 %923
  %925 = vrot.lane.b32.xlu0 %v915, 64
  %v926 = vpop.permute.xlu0 %925
  %927 = vrot.lane.b32.xlu0 %v916, 64
  %v928 = vpop.permute.xlu0 %927
  %v933 = vmul.f32 %v741, %v922
  %v934 = vmul.f32 %v743, %v924
  %v935 = vmul.f32 %v745, %v926
  %v936 = vmul.f32 %v747, %v928
  %v937 = vmul.f32 %v706, 0.1
  %v938 = vmul.f32 %v711, 0.1
  %v939 = vmul.f32 %v716, 0.1
  %v940 = vmul.f32 %v721, 0.1
  %945 = vrot.lane.b32.xlu0 %v937, 32
  %v946 = vpop.permute.xlu0 %945
  %947 = vrot.lane.b32.xlu0 %v938, 32
  %v948 = vpop.permute.xlu0 %947
  %949 = vrot.lane.b32.xlu0 %v939, 32
  %v950 = vpop.permute.xlu0 %949
  %951 = vrot.lane.b32.xlu0 %v940, 32
  %v952 = vpop.permute.xlu0 %951
  %v957 = vadd.f32 %v933, %v946
  %v958 = vadd.f32 %v934, %v948
  %v959 = vadd.f32 %v935, %v950
  %v960 = vadd.f32 %v936, %v952
  %965 = vrot.lane.b32.xlu0 %v957, 64
  %v966 = vpop.permute.xlu0 %965
  %967 = vrot.lane.b32.xlu0 %v958, 64
  %v968 = vpop.permute.xlu0 %967
  %969 = vrot.lane.b32.xlu0 %v959, 64
  %v970 = vpop.permute.xlu0 %969
  %971 = vrot.lane.b32.xlu0 %v960, 64
  %v972 = vpop.permute.xlu0 %971
  %v977 = vsel %vm370, %v966, 0.0
  %978 = vadd.xlane.f32.xlu0 %v977
  %v979 = vpop.xlane.xlu0 %978
  %v980 = vsel %vm370, %v968, 0.0
  %981 = vadd.xlane.f32.xlu0 %v980
  %v982 = vpop.xlane.xlu0 %981
  %v983 = vsel %vm370, %v970, 0.0
  %984 = vadd.xlane.f32.xlu0 %v983
  %v985 = vpop.xlane.xlu0 %984
  %v986 = vsel %vm370, %v972, 0.0
  %987 = vadd.xlane.f32.xlu0 %v986
  %v988 = vpop.xlane.xlu0 %987
  %v989 = vmul.f32 %v979, %v518
  %v990 = vmul.f32 %v982, %v518
  %v991 = vmul.f32 %v985, %v518
  %v992 = vmul.f32 %v988, %v518
  %v993 = vsub.f32 %v957, %v989
  %v994 = vsub.f32 %v958, %v990
  %v995 = vsub.f32 %v959, %v991
  %v996 = vsub.f32 %v960, %v992
  %v997 = vmul.f32 %v993, %v993
  %v998 = vmul.f32 %v994, %v994
  %v999 = vmul.f32 %v995, %v995
  %v1000 = vmul.f32 %v996, %v996
  %1005 = vrot.lane.b32.xlu0 %v997, 64
  %v1006 = vpop.permute.xlu0 %1005
  %1007 = vrot.lane.b32.xlu0 %v998, 64
  %v1008 = vpop.permute.xlu0 %1007
  %1009 = vrot.lane.b32.xlu0 %v999, 64
  %v1010 = vpop.permute.xlu0 %1009
  %1011 = vrot.lane.b32.xlu0 %v1000, 64
  %v1012 = vpop.permute.xlu0 %1011
  %v1017 = vsel %vm370, %v1006, 0.0
  %1018 = vadd.xlane.f32.xlu0 %v1017
  %v1019 = vpop.xlane.xlu0 %1018
  %v1020 = vsel %vm370, %v1008, 0.0
  %1021 = vadd.xlane.f32.xlu0 %v1020
  %v1022 = vpop.xlane.xlu0 %1021
  %v1023 = vsel %vm370, %v1010, 0.0
  %1024 = vadd.xlane.f32.xlu0 %v1023
  %v1025 = vpop.xlane.xlu0 %1024
  %v1026 = vsel %vm370, %v1012, 0.0
  %1027 = vadd.xlane.f32.xlu0 %v1026
  %v1028 = vpop.xlane.xlu0 %1027
  %v1029 = vmul.f32 %v1019, %v518
  %v1030 = vmul.f32 %v1022, %v518
  %v1031 = vmul.f32 %v1025, %v518
  %v1032 = vmul.f32 %v1028, %v518
  %v1033 = vadd.f32 %v1029, 1e-05
  %v1034 = vadd.f32 %v1030, 1e-05
  %v1035 = vadd.f32 %v1031, 1e-05
  %v1036 = vadd.f32 %v1032, 1e-05
  %v1037 = vrsqrt.pop %v1033
  %v1038 = vrsqrt.pop %v1034
  %v1039 = vrsqrt.pop %v1035
  %v1040 = vrsqrt.pop %v1036
  %v1041 = vmul.f32 %v993, %v1037
  %v1042 = vmul.f32 %v994, %v1038
  %v1043 = vmul.f32 %v995, %v1039
  %v1044 = vmul.f32 %v996, %v1040
  %v1045 = vld [vmem:[%s10] sm:$0xff]
  %v1046 = vld [vmem:[%s10 + $0x8] sm:$0xff]
  %v1047 = vld [vmem:[%s10 + $0x10] sm:$0xff]
  %v1048 = vld [vmem:[%s10 + $0x18] sm:$0xff]
  %1053 = vrot.lane.b32.xlu0 %v1041, 64
  %v1054 = vpop.permute.xlu0 %1053
  %1055 = vrot.lane.b32.xlu0 %v1042, 64
  %v1056 = vpop.permute.xlu0 %1055
  %1057 = vrot.lane.b32.xlu0 %v1043, 64
  %v1058 = vpop.permute.xlu0 %1057
  %1059 = vrot.lane.b32.xlu0 %v1044, 64
  %v1060 = vpop.permute.xlu0 %1059
  %v1061 = vsel %vm370, %v1054, 0
  %v1063 = vsel %vm370, %v1056, 0
  %v1065 = vsel %vm370, %v1058, 0
  %v1067 = vsel %vm370, %v1060, 0
  %1069 = vmatprep.subr.mxu0 0.0
  %1070 = vmatpush1.msra.mxu0 %v1045
  %1071 = vmatprep.subr.mxu0 0.0
  %1072 = vmatpush1.msra.mxu0 %v1046
  %1073 = vmatprep.subr.mxu0 0.0
  %1074 = vmatpush1.msra.mxu0 %v1047
  %1075 = vmatprep.subr.mxu0 0.0
  %1076 = vmatpush1.msra.mxu0 %v1048
  %1077 = vmatprep.subr.mxu0 0.0
  %1078 = vmatpush1.msra.mxu0 0.0
  %1079 = vmatprep.subr.mxu0 0.0
  %1080 = vmatpush1.msra.mxu0 0.0
  %1081 = vmatprep.subr.mxu0 0.0
  %1082 = vmatpush1.msra.mxu0 0.0
  %1083 = vmatprep.subr.mxu0 0.0
  %1084 = vmatpush1.msra.mxu0 0.0
  %1085 = vmatprep.subr.mxu0 0.0
  %1086 = vmatpush1.msra.mxu0 0.0
  %1087 = vmatprep.subr.mxu0 0.0
  %1088 = vmatpush1.msra.mxu0 0.0
  %1089 = vmatprep.subr.mxu0 0.0
  %1090 = vmatpush1.msra.mxu0 0.0
  %1091 = vmatprep.subr.mxu0 0.0
  %1092 = vmatpush1.msra.mxu0 0.0
  %1093 = vmatprep.subr.mxu0 0.0
  %1094 = vmatpush1.msra.mxu0 0.0
  %1095 = vmatprep.subr.mxu0 0.0
  %1096 = vmatpush1.msra.mxu0 0.0
  %1097 = vmatprep.subr.mxu0 0.0
  %1098 = vmatpush1.msra.mxu0 0.0
  %1099 = vmatprep.subr.mxu0 0.0
  %1100 = vmatpush1.msra.mxu0 0.0
  %1101 = vmatprep.subr.mxu0 0.0
  %1102 = vmatpush1.msra.mxu0 0.0
  %1103 = vmatprep.subr.mxu0 0.0
  %1104 = vmatpush1.msra.mxu0 0.0
  %1105 = vmatprep.subr.mxu0 0.0
  %1106 = vmatpush1.msra.mxu0 0.0
  %1107 = vmatprep.subr.mxu0 0.0
  %1108 = vmatpush1.msra.mxu0 0.0
  %1109 = vmatprep.subr.mxu0 0.0
  %1110 = vmatpush1.msra.mxu0 0.0
  %1111 = vmatprep.subr.mxu0 0.0
  %1112 = vmatpush1.msra.mxu0 0.0
  %1113 = vmatprep.subr.mxu0 0.0
  %1114 = vmatpush1.msra.mxu0 0.0
  %1115 = vmatprep.subr.mxu0 0.0
  %1116 = vmatpush1.msra.mxu0 0.0
  %1117 = vmatprep.subr.mxu0 0.0
  %1118 = vmatpush1.msra.mxu0 0.0
  %1119 = vmatprep.subr.mxu0 0.0
  %1120 = vmatpush1.msra.mxu0 0.0
  %1121 = vmatprep.subr.mxu0 0.0
  %1122 = vmatpush1.msra.mxu0 0.0
  %1123 = vmatprep.subr.mxu0 0.0
  %1124 = vmatpush1.msra.mxu0 0.0
  %1125 = vmatprep.subr.mxu0 0.0
  %1126 = vmatpush1.msra.mxu0 0.0
  %1127 = vmatprep.subr.mxu0 0.0
  %1128 = vmatpush1.msra.mxu0 0.0
  %1129 = vmatprep.subr.mxu0 0.0
  %1130 = vmatpush1.msra.mxu0 0.0
  %1131 = vmatprep.subr.mxu0 0.0
  %1132 = vmatpush1.msra.mxu0 0.0
  %1133 = vmatprep.mubr.f32.mxu0 0.0
  %1134 = vmatmul.mubr.f32.gmra.mrb[0].mxu0 %v1061
  %v1135 = vpop.f32.mrb[0].mxu0
  %v1136 = vadd.f32 0.0, %v1135
  %v1137 = vpop.f32.mrb[0].mxu0
  %1138 = vmatprep.mubr.f32.mxu0 0.0
  %1139 = vmatmul.mubr.f32.gmra.mrb[0].mxu0 %v1063
  %v1140 = vpop.f32.mrb[0].mxu0
  %v1141 = vadd.f32 0.0, %v1140
  %v1142 = vpop.f32.mrb[0].mxu0
  %1143 = vmatprep.mubr.f32.mxu0 0.0
  %1144 = vmatmul.mubr.f32.gmra.mrb[0].mxu0 %v1065
  %v1145 = vpop.f32.mrb[0].mxu0
  %v1146 = vadd.f32 0.0, %v1145
  %v1147 = vpop.f32.mrb[0].mxu0
  %1148 = vmatprep.mubr.f32.mxu0 0.0
  %1149 = vmatmul.mubr.f32.gmra.mrb[0].mxu0 %v1067
  %v1150 = vpop.f32.mrb[0].mxu0
  %v1151 = vadd.f32 0.0, %v1150
  %v1152 = vpop.f32.mrb[0].mxu0
  %1153 = vdwg.mxu0
  %v1154 = vadd.f32 %v500, %v1136
  %v1155 = vadd.f32 %v501, %v1141
  %v1156 = vadd.f32 %v502, %v1146
  %v1157 = vadd.f32 %v503, %v1151
  %v1158 = vld [vmem:[%s7] sm:$0x1]
  %v1159 = vld [vmem:[%s8] sm:$0x1]
  %v1160 = vsel %vm370, %v1154, 0.0
  %1161 = vadd.xlane.f32.xlu0 %v1160
  %v1162 = vpop.xlane.xlu0 %1161
  %v1163 = vsel %vm370, %v1155, 0.0
  %1164 = vadd.xlane.f32.xlu0 %v1163
  %v1165 = vpop.xlane.xlu0 %1164
  %v1166 = vsel %vm370, %v1156, 0.0
  %1167 = vadd.xlane.f32.xlu0 %v1166
  %v1168 = vpop.xlane.xlu0 %1167
  %v1169 = vsel %vm370, %v1157, 0.0
  %1170 = vadd.xlane.f32.xlu0 %v1169
  %v1171 = vpop.xlane.xlu0 %1170
  %v1172 = vmul.f32 %v1162, %v518
  %v1173 = vmul.f32 %v1165, %v518
  %v1174 = vmul.f32 %v1168, %v518
  %v1175 = vmul.f32 %v1171, %v518
  %v1176 = vsub.f32 %v1154, %v1172
  %v1177 = vsub.f32 %v1155, %v1173
  %v1178 = vsub.f32 %v1156, %v1174
  %v1179 = vsub.f32 %v1157, %v1175
  %v1180 = vmul.f32 %v1176, %v1176
  %v1181 = vmul.f32 %v1177, %v1177
  %v1182 = vmul.f32 %v1178, %v1178
  %v1183 = vmul.f32 %v1179, %v1179
  %v1184 = vsel %vm370, %v1180, 0.0
  %1185 = vadd.xlane.f32.xlu0 %v1184
  %v1186 = vpop.xlane.xlu0 %1185
  %v1187 = vsel %vm370, %v1181, 0.0
  %1188 = vadd.xlane.f32.xlu0 %v1187
  %v1189 = vpop.xlane.xlu0 %1188
  %v1190 = vsel %vm370, %v1182, 0.0
  %1191 = vadd.xlane.f32.xlu0 %v1190
  %v1192 = vpop.xlane.xlu0 %1191
  %v1193 = vsel %vm370, %v1183, 0.0
  %1194 = vadd.xlane.f32.xlu0 %v1193
  %v1195 = vpop.xlane.xlu0 %1194
  %v1196 = vmul.f32 %v1186, %v518
  %v1197 = vmul.f32 %v1189, %v518
  %v1198 = vmul.f32 %v1192, %v518
  %v1199 = vmul.f32 %v1195, %v518
  %v1200 = vadd.f32 %v1196, 1e-05
  %v1201 = vadd.f32 %v1197, 1e-05
  %v1202 = vadd.f32 %v1198, 1e-05
  %v1203 = vadd.f32 %v1199, 1e-05
  %v1204 = vrsqrt.pop %v1200
  %v1205 = vrsqrt.pop %v1201
  %v1206 = vrsqrt.pop %v1202
  %v1207 = vrsqrt.pop %v1203
  %v1208 = vmul.f32 %v1176, %v1204
  %v1209 = vmul.f32 %v1177, %v1205
  %v1210 = vmul.f32 %v1178, %v1206
  %v1211 = vmul.f32 %v1179, %v1207
  %v1213 = vlaneseq
  %v1214 = vshrl.u32 %v1213, 7
  %v1215 = vsub.s32 0, %v1214
  %v1216 = vrot.slane %v1158, %v1215
  %v1218 = vmul.f32 %v1208, %v1216
  %v1219 = vmul.f32 %v1209, %v1216
  %v1220 = vmul.f32 %v1210, %v1216
  %v1221 = vmul.f32 %v1211, %v1216
  %v1223 = vlaneseq
  %v1224 = vshrl.u32 %v1223, 7
  %v1225 = vsub.s32 0, %v1224
  %v1226 = vrot.slane %v1159, %v1225
  %v1228 = vadd.f32 %v1218, %v1226
  %v1229 = vadd.f32 %v1219, %v1226
  %v1230 = vadd.f32 %v1220, %v1226
  %v1231 = vadd.f32 %v1221, %v1226
  %v1232 = vrot.slane %v1228, 7
  %v1233 = vrot.slane %v1229, 7
  %v1234 = vrot.slane %v1230, 7
  %v1235 = vrot.slane %v1231, 7
  %v1236 = vsel %vm234, %v1234, %v1235
  %v1237 = vsel %vm234, %v1233, %v1234
  %v1238 = vsel %vm234, %v1232, %v1233
  %v1239 = vsel %vm234, %v1235, %v1232
  %v1240 = vsel %vm591, 0.0, %v1239
  %v1241 = vsel %vm592, 0.0, %v1238
  %v1242 = vsel %vm593, 0.0, %v1237
  %v1243 = vsel %vm594, 0.0, %v1236
  %1248 = vrot.lane.b32.xlu0 %v1228, 32
  %v1249 = vpop.permute.xlu0 %1248
  %1250 = vrot.lane.b32.xlu0 %v1229, 32
  %v1251 = vpop.permute.xlu0 %1250
  %1252 = vrot.lane.b32.xlu0 %v1230, 32
  %v1253 = vpop.permute.xlu0 %1252
  %1254 = vrot.lane.b32.xlu0 %v1231, 32
  %v1255 = vpop.permute.xlu0 %1254
  %v1260 = vsel %vm370, %v1240, %v1249
  %v1261 = vsel %vm370, %v1241, %v1251
  %v1262 = vsel %vm370, %v1242, %v1253
  %v1263 = vsel %vm370, %v1243, %v1255
  %v1264 = vld [vmem:[%s11] sm:$0xff]
  %v1265 = vld [vmem:[%s11 + $0x8] sm:$0xff]
  %v1266 = vld [vmem:[%s11 + $0x10] sm:$0xff]
  %v1267 = vld [vmem:[%s11 + $0x18] sm:$0xff]
  %v1268 = vld [vmem:[%s11 + $0x20] sm:$0xff]
  %v1269 = vld [vmem:[%s11 + $0x28] sm:$0xff]
  %v1270 = vld [vmem:[%s11 + $0x30] sm:$0xff]
  %v1271 = vld [vmem:[%s11 + $0x38] sm:$0xff]
  %v1272 = vld [vmem:[%s11 + $0x40] sm:$0xff]
  %v1273 = vld [vmem:[%s11 + $0x48] sm:$0xff]
  %v1274 = vld [vmem:[%s11 + $0x50] sm:$0xff]
  %v1275 = vld [vmem:[%s11 + $0x58] sm:$0xff]
  %v1276 = vld [vmem:[%s11 + $0x60] sm:$0xff]
  %v1277 = vld [vmem:[%s11 + $0x68] sm:$0xff]
  %v1278 = vld [vmem:[%s11 + $0x70] sm:$0xff]
  %v1279 = vld [vmem:[%s11 + $0x78] sm:$0xff]
  %v1281 = vsel %vm380, %v1260, 0
  %v1284 = vsel %vm380, %v1261, 0
  %v1287 = vsel %vm380, %v1262, 0
  %v1290 = vsel %vm380, %v1263, 0
  %1292 = vmatprep.subr.mxu0 %v1265
  %1293 = vmatpush1.msra.mxu0 %v1264
  %1294 = vmatprep.subr.mxu0 %v1267
  %1295 = vmatpush1.msra.mxu0 %v1266
  %1296 = vmatprep.subr.mxu0 %v1269
  %1297 = vmatpush1.msra.mxu0 %v1268
  %1298 = vmatprep.subr.mxu0 %v1271
  %1299 = vmatpush1.msra.mxu0 %v1270
  %1300 = vmatprep.subr.mxu0 %v1273
  %1301 = vmatpush1.msra.mxu0 %v1272
  %1302 = vmatprep.subr.mxu0 %v1275
  %1303 = vmatpush1.msra.mxu0 %v1274
  %1304 = vmatprep.subr.mxu0 %v1277
  %1305 = vmatpush1.msra.mxu0 %v1276
  %1306 = vmatprep.subr.mxu0 %v1279
  %1307 = vmatpush1.msra.mxu0 %v1278
  %1308 = vmatprep.subr.mxu0 0.0
  %1309 = vmatpush1.msra.mxu0 0.0
  %1310 = vmatprep.subr.mxu0 0.0
  %1311 = vmatpush1.msra.mxu0 0.0
  %1312 = vmatprep.subr.mxu0 0.0
  %1313 = vmatpush1.msra.mxu0 0.0
  %1314 = vmatprep.subr.mxu0 0.0
  %1315 = vmatpush1.msra.mxu0 0.0
  %1316 = vmatprep.subr.mxu0 0.0
  %1317 = vmatpush1.msra.mxu0 0.0
  %1318 = vmatprep.subr.mxu0 0.0
  %1319 = vmatpush1.msra.mxu0 0.0
  %1320 = vmatprep.subr.mxu0 0.0
  %1321 = vmatpush1.msra.mxu0 0.0
  %1322 = vmatprep.subr.mxu0 0.0
  %1323 = vmatpush1.msra.mxu0 0.0
  %1324 = vmatprep.subr.mxu0 0.0
  %1325 = vmatpush1.msra.mxu0 0.0
  %1326 = vmatprep.subr.mxu0 0.0
  %1327 = vmatpush1.msra.mxu0 0.0
  %1328 = vmatprep.subr.mxu0 0.0
  %1329 = vmatpush1.msra.mxu0 0.0
  %1330 = vmatprep.subr.mxu0 0.0
  %1331 = vmatpush1.msra.mxu0 0.0
  %1332 = vmatprep.subr.mxu0 0.0
  %1333 = vmatpush1.msra.mxu0 0.0
  %1334 = vmatprep.subr.mxu0 0.0
  %1335 = vmatpush1.msra.mxu0 0.0
  %1336 = vmatprep.subr.mxu0 0.0
  %1337 = vmatpush1.msra.mxu0 0.0
  %1338 = vmatprep.subr.mxu0 0.0
  %1339 = vmatpush1.msra.mxu0 0.0
  %1340 = vmatprep.subr.mxu0 0.0
  %1341 = vmatpush1.msra.mxu0 0.0
  %1342 = vmatprep.subr.mxu0 0.0
  %1343 = vmatpush1.msra.mxu0 0.0
  %1344 = vmatprep.subr.mxu0 0.0
  %1345 = vmatpush1.msra.mxu0 0.0
  %1346 = vmatprep.subr.mxu0 0.0
  %1347 = vmatpush1.msra.mxu0 0.0
  %1348 = vmatprep.subr.mxu0 0.0
  %1349 = vmatpush1.msra.mxu0 0.0
  %1350 = vmatprep.subr.mxu0 0.0
  %1351 = vmatpush1.msra.mxu0 0.0
  %1352 = vmatprep.subr.mxu0 0.0
  %1353 = vmatpush1.msra.mxu0 0.0
  %1354 = vmatprep.subr.mxu0 0.0
  %1355 = vmatpush1.msra.mxu0 0.0
  %1356 = vmatprep.mubr.f32.mxu0 0.0
  %1357 = vmatmul.mubr.f32.gmra.mrb[0].mxu0 %v1281
  %v1358 = vpop.f32.mrb[0].mxu0
  %v1359 = vadd.f32 0.0, %v1358
  %v1360 = vpop.f32.mrb[0].mxu0
  %v1361 = vadd.f32 0.0, %v1360
  %1362 = vmatprep.mubr.f32.mxu0 0.0
  %1363 = vmatmul.mubr.f32.gmra.mrb[0].mxu0 %v1284
  %v1364 = vpop.f32.mrb[0].mxu0
  %v1365 = vadd.f32 0.0, %v1364
  %v1366 = vpop.f32.mrb[0].mxu0
  %v1367 = vadd.f32 0.0, %v1366
  %1368 = vmatprep.mubr.f32.mxu0 0.0
  %1369 = vmatmul.mubr.f32.gmra.mrb[0].mxu0 %v1287
  %v1370 = vpop.f32.mrb[0].mxu0
  %v1371 = vadd.f32 0.0, %v1370
  %v1372 = vpop.f32.mrb[0].mxu0
  %v1373 = vadd.f32 0.0, %v1372
  %1374 = vmatprep.mubr.f32.mxu0 0.0
  %1375 = vmatmul.mubr.f32.gmra.mrb[0].mxu0 %v1290
  %v1376 = vpop.f32.mrb[0].mxu0
  %v1377 = vadd.f32 0.0, %v1376
  %v1378 = vpop.f32.mrb[0].mxu0
  %v1379 = vadd.f32 0.0, %v1378
  %1380 = vdwg.mxu0
  %v1381 = vmax.f32 %v1359, 0.0
  %v1382 = vmax.f32 %v1365, 0.0
  %v1383 = vmax.f32 %v1371, 0.0
  %v1384 = vmax.f32 %v1377, 0.0
  %v1385 = vmul.f32 %v1381, %v1381
  %v1386 = vmul.f32 %v1382, %v1382
  %v1387 = vmul.f32 %v1383, %v1383
  %v1388 = vmul.f32 %v1384, %v1384
  %v1389 = vld [vmem:[%s12] sm:$0xff]
  %v1390 = vld [vmem:[%s12 + $0x8] sm:$0xff]
  %v1391 = vld [vmem:[%s12 + $0x10] sm:$0xff]
  %v1392 = vld [vmem:[%s12 + $0x18] sm:$0xff]
  %v1393 = vld [vmem:[%s12 + $0x20] sm:$0xff]
  %v1394 = vld [vmem:[%s12 + $0x28] sm:$0xff]
  %v1395 = vld [vmem:[%s12 + $0x30] sm:$0xff]
  %v1396 = vld [vmem:[%s12 + $0x38] sm:$0xff]
  %v1397 = vld [vmem:[%s12 + $0x40] sm:$0xff]
  %v1398 = vld [vmem:[%s12 + $0x48] sm:$0xff]
  %v1399 = vld [vmem:[%s12 + $0x50] sm:$0xff]
  %v1400 = vld [vmem:[%s12 + $0x58] sm:$0xff]
  %v1401 = vld [vmem:[%s12 + $0x60] sm:$0xff]
  %v1402 = vld [vmem:[%s12 + $0x68] sm:$0xff]
  %v1403 = vld [vmem:[%s12 + $0x70] sm:$0xff]
  %v1404 = vld [vmem:[%s12 + $0x78] sm:$0xff]
  %1405 = vmatprep.subr.mxu0 0.0
  %1406 = vmatpush1.msra.mxu0 %v1389
  %1407 = vmatprep.subr.mxu0 0.0
  %1408 = vmatpush1.msra.mxu0 %v1390
  %1409 = vmatprep.subr.mxu0 0.0
  %1410 = vmatpush1.msra.mxu0 %v1391
  %1411 = vmatprep.subr.mxu0 0.0
  %1412 = vmatpush1.msra.mxu0 %v1392
  %1413 = vmatprep.subr.mxu0 0.0
  %1414 = vmatpush1.msra.mxu0 %v1393
  %1415 = vmatprep.subr.mxu0 0.0
  %1416 = vmatpush1.msra.mxu0 %v1394
  %1417 = vmatprep.subr.mxu0 0.0
  %1418 = vmatpush1.msra.mxu0 %v1395
  %1419 = vmatprep.subr.mxu0 0.0
  %1420 = vmatpush1.msra.mxu0 %v1396
  %1421 = vmatprep.subr.mxu0 0.0
  %1422 = vmatpush1.msra.mxu0 %v1397
  %1423 = vmatprep.subr.mxu0 0.0
  %1424 = vmatpush1.msra.mxu0 %v1398
  %1425 = vmatprep.subr.mxu0 0.0
  %1426 = vmatpush1.msra.mxu0 %v1399
  %1427 = vmatprep.subr.mxu0 0.0
  %1428 = vmatpush1.msra.mxu0 %v1400
  %1429 = vmatprep.subr.mxu0 0.0
  %1430 = vmatpush1.msra.mxu0 %v1401
  %1431 = vmatprep.subr.mxu0 0.0
  %1432 = vmatpush1.msra.mxu0 %v1402
  %1433 = vmatprep.subr.mxu0 0.0
  %1434 = vmatpush1.msra.mxu0 %v1403
  %1435 = vmatprep.subr.mxu0 0.0
  %1436 = vmatpush1.msra.mxu0 %v1404
  %1437 = vmatprep.subr.mxu0 0.0
  %1438 = vmatpush1.msra.mxu0 0.0
  %1439 = vmatprep.subr.mxu0 0.0
  %1440 = vmatpush1.msra.mxu0 0.0
  %1441 = vmatprep.subr.mxu0 0.0
  %1442 = vmatpush1.msra.mxu0 0.0
  %1443 = vmatprep.subr.mxu0 0.0
  %1444 = vmatpush1.msra.mxu0 0.0
  %1445 = vmatprep.subr.mxu0 0.0
  %1446 = vmatpush1.msra.mxu0 0.0
  %1447 = vmatprep.subr.mxu0 0.0
  %1448 = vmatpush1.msra.mxu0 0.0
  %1449 = vmatprep.subr.mxu0 0.0
  %1450 = vmatpush1.msra.mxu0 0.0
  %1451 = vmatprep.subr.mxu0 0.0
  %1452 = vmatpush1.msra.mxu0 0.0
  %1453 = vmatprep.subr.mxu0 0.0
  %1454 = vmatpush1.msra.mxu0 0.0
  %1455 = vmatprep.subr.mxu0 0.0
  %1456 = vmatpush1.msra.mxu0 0.0
  %1457 = vmatprep.subr.mxu0 0.0
  %1458 = vmatpush1.msra.mxu0 0.0
  %1459 = vmatprep.subr.mxu0 0.0
  %1460 = vmatpush1.msra.mxu0 0.0
  %1461 = vmatprep.subr.mxu0 0.0
  %1462 = vmatpush1.msra.mxu0 0.0
  %1463 = vmatprep.subr.mxu0 0.0
  %1464 = vmatpush1.msra.mxu0 0.0
  %1465 = vmatprep.subr.mxu0 0.0
  %1466 = vmatpush1.msra.mxu0 0.0
  %1467 = vmatprep.subr.mxu0 0.0
  %1468 = vmatpush1.msra.mxu0 0.0
  %1469 = vmatprep.mubr.f32.mxu0 0.0
  %1470 = vmatmul.mubr.f32.gmra.mrb[0].mxu0 %v1385
  %v1471 = vpop.f32.mrb[0].mxu0
  %v1472 = vadd.f32 0.0, %v1471
  %v1473 = vpop.f32.mrb[0].mxu0
  %1474 = vmatprep.mubr.f32.mxu0 0.0
  %1475 = vmatmul.mubr.f32.gmra.mrb[0].mxu0 %v1386
  %v1476 = vpop.f32.mrb[0].mxu0
  %v1477 = vadd.f32 0.0, %v1476
  %v1478 = vpop.f32.mrb[0].mxu0
  %1479 = vmatprep.mubr.f32.mxu0 0.0
  %1480 = vmatmul.mubr.f32.gmra.mrb[0].mxu0 %v1387
  %v1481 = vpop.f32.mrb[0].mxu0
  %v1482 = vadd.f32 0.0, %v1481
  %v1483 = vpop.f32.mrb[0].mxu0
  %1484 = vmatprep.mubr.f32.mxu0 0.0
  %1485 = vmatmul.mubr.f32.gmra.mrb[0].mxu0 %v1388
  %v1486 = vpop.f32.mrb[0].mxu0
  %v1487 = vadd.f32 0.0, %v1486
  %v1488 = vpop.f32.mrb[0].mxu0
  %1489 = vdwg.mxu0
  %v1490 = vxor.u32 %v1361, 2147483648
  %v1491 = vxor.u32 %v1367, 2147483648
  %v1492 = vxor.u32 %v1373, 2147483648
  %v1493 = vxor.u32 %v1379, 2147483648
  %v1494 = vmul.f32 %v1490, 1.442695
  %v1495 = vpow.pop %v1494
  %v1496 = vmul.f32 %v1491, 1.442695
  %v1497 = vpow.pop %v1496
  %v1498 = vmul.f32 %v1492, 1.442695
  %v1499 = vpow.pop %v1498
  %v1500 = vmul.f32 %v1493, 1.442695
  %v1501 = vpow.pop %v1500
  %v1502 = vadd.f32 %v1495, 1.0
  %v1503 = vadd.f32 %v1497, 1.0
  %v1504 = vadd.f32 %v1499, 1.0
  %v1505 = vadd.f32 %v1501, 1.0
  %v1506 = vrcp.pop %v1502
  %v1507 = vmul.f32 1.0, %v1506
  %v1508 = vrcp.pop %v1503
  %v1509 = vmul.f32 1.0, %v1508
  %v1510 = vrcp.pop %v1504
  %v1511 = vmul.f32 1.0, %v1510
  %v1512 = vrcp.pop %v1505
  %v1513 = vmul.f32 1.0, %v1512
  %v1514 = vmul.f32 %v1507, %v1472
  %v1515 = vmul.f32 %v1509, %v1477
  %v1516 = vmul.f32 %v1511, %v1482
  %v1517 = vmul.f32 %v1513, %v1487
  %v1518 = vadd.f32 %v1154, %v1514
  %v1519 = vadd.f32 %v1155, %v1515
  %v1520 = vadd.f32 %v1156, %v1516
  %v1521 = vadd.f32 %v1157, %v1517
  %v1522 = vrot.slane %v1518, 7
  %v1523 = vrot.slane %v1519, 7
  %v1524 = vrot.slane %v1520, 7
  %v1525 = vrot.slane %v1521, 7
  %v1526 = vsel %vm234, %v1524, %v1525
  %v1527 = vsel %vm234, %v1523, %v1524
  %v1528 = vsel %vm234, %v1522, %v1523
  %v1529 = vsel %vm234, %v1525, %v1522
  %s1530 = scalar_lea.vmem %s5, 1
  %v1531 = vld [vmem:[%s1530] sm:$0x1]
  %s1532 = scalar_lea.vmem %s6, 1
  %v1533 = vld [vmem:[%s1532] sm:$0x1]
  %v1534 = vsel %vm370, %v1518, 0.0
  %1535 = vadd.xlane.f32.xlu0 %v1534
  %v1536 = vpop.xlane.xlu0 %1535
  %v1537 = vsel %vm370, %v1519, 0.0
  %1538 = vadd.xlane.f32.xlu0 %v1537
  %v1539 = vpop.xlane.xlu0 %1538
  %v1540 = vsel %vm370, %v1520, 0.0
  %1541 = vadd.xlane.f32.xlu0 %v1540
  %v1542 = vpop.xlane.xlu0 %1541
  %v1543 = vsel %vm370, %v1521, 0.0
  %1544 = vadd.xlane.f32.xlu0 %v1543
  %v1545 = vpop.xlane.xlu0 %1544
  %v1546 = vmul.f32 %v1536, %v518
  %v1547 = vmul.f32 %v1539, %v518
  %v1548 = vmul.f32 %v1542, %v518
  %v1549 = vmul.f32 %v1545, %v518
  %v1550 = vsub.f32 %v1518, %v1546
  %v1551 = vsub.f32 %v1519, %v1547
  %v1552 = vsub.f32 %v1520, %v1548
  %v1553 = vsub.f32 %v1521, %v1549
  %v1554 = vmul.f32 %v1550, %v1550
  %v1555 = vmul.f32 %v1551, %v1551
  %v1556 = vmul.f32 %v1552, %v1552
  %v1557 = vmul.f32 %v1553, %v1553
  %v1558 = vsel %vm370, %v1554, 0.0
  %1559 = vadd.xlane.f32.xlu0 %v1558
  %v1560 = vpop.xlane.xlu0 %1559
  %v1561 = vsel %vm370, %v1555, 0.0
  %1562 = vadd.xlane.f32.xlu0 %v1561
  %v1563 = vpop.xlane.xlu0 %1562
  %v1564 = vsel %vm370, %v1556, 0.0
  %1565 = vadd.xlane.f32.xlu0 %v1564
  %v1566 = vpop.xlane.xlu0 %1565
  %v1567 = vsel %vm370, %v1557, 0.0
  %1568 = vadd.xlane.f32.xlu0 %v1567
  %v1569 = vpop.xlane.xlu0 %1568
  %v1570 = vmul.f32 %v1560, %v518
  %v1571 = vmul.f32 %v1563, %v518
  %v1572 = vmul.f32 %v1566, %v518
  %v1573 = vmul.f32 %v1569, %v518
  %v1574 = vadd.f32 %v1570, 1e-05
  %v1575 = vadd.f32 %v1571, 1e-05
  %v1576 = vadd.f32 %v1572, 1e-05
  %v1577 = vadd.f32 %v1573, 1e-05
  %v1578 = vrsqrt.pop %v1574
  %v1579 = vrsqrt.pop %v1575
  %v1580 = vrsqrt.pop %v1576
  %v1581 = vrsqrt.pop %v1577
  %v1582 = vmul.f32 %v1550, %v1578
  %v1583 = vmul.f32 %v1551, %v1579
  %v1584 = vmul.f32 %v1552, %v1580
  %v1585 = vmul.f32 %v1553, %v1581
  %v1587 = vlaneseq
  %v1588 = vshrl.u32 %v1587, 7
  %v1589 = vsub.s32 0, %v1588
  %v1590 = vrot.slane %v1531, %v1589
  %v1592 = vmul.f32 %v1582, %v1590
  %v1593 = vmul.f32 %v1583, %v1590
  %v1594 = vmul.f32 %v1584, %v1590
  %v1595 = vmul.f32 %v1585, %v1590
  %v1597 = vlaneseq
  %v1598 = vshrl.u32 %v1597, 7
  %v1599 = vsub.s32 0, %v1598
  %v1600 = vrot.slane %v1533, %v1599
  %v1602 = vadd.f32 %v1592, %v1600
  %v1603 = vadd.f32 %v1593, %v1600
  %v1604 = vadd.f32 %v1594, %v1600
  %v1605 = vadd.f32 %v1595, %v1600
  %v1606 = vrot.slane %v1602, 7
  %v1607 = vrot.slane %v1603, 7
  %v1608 = vrot.slane %v1604, 7
  %v1609 = vrot.slane %v1605, 7
  %v1610 = vsel %vm234, %v1608, %v1609
  %v1611 = vsel %vm234, %v1607, %v1608
  %v1612 = vsel %vm234, %v1606, %v1607
  %v1613 = vsel %vm234, %v1609, %v1606
  %v1614 = vsel %vm591, %v1527, %v1613
  %v1615 = vsel %vm592, %v1526, %v1612
  %v1616 = vsel %vm593, %v1529, %v1611
  %v1617 = vsel %vm594, %v1528, %v1610
  %1622 = vrot.lane.b32.xlu0 %v1602, 32
  %v1623 = vpop.permute.xlu0 %1622
  %1624 = vrot.lane.b32.xlu0 %v1603, 32
  %v1625 = vpop.permute.xlu0 %1624
  %1626 = vrot.lane.b32.xlu0 %v1604, 32
  %v1627 = vpop.permute.xlu0 %1626
  %1628 = vrot.lane.b32.xlu0 %v1605, 32
  %v1629 = vpop.permute.xlu0 %1628
  %v1634 = vsel %vm370, %v1614, %v1623
  %v1635 = vsel %vm370, %v1615, %v1625
  %v1636 = vsel %vm370, %v1616, %v1627
  %v1637 = vsel %vm370, %v1617, %v1629
  %s1638 = scalar_lea.vmem %s9, 64
  %v1639 = vld [vmem:[%s1638] sm:$0xff]
  %v1640 = vld [vmem:[%s1638 + $0x8] sm:$0xff]
  %v1641 = vld [vmem:[%s1638 + $0x10] sm:$0xff]
  %v1642 = vld [vmem:[%s1638 + $0x18] sm:$0xff]
  %v1643 = vld [vmem:[%s1638 + $0x20] sm:$0xff]
  %v1644 = vld [vmem:[%s1638 + $0x28] sm:$0xff]
  %v1645 = vld [vmem:[%s1638 + $0x30] sm:$0xff]
  %v1646 = vld [vmem:[%s1638 + $0x38] sm:$0xff]
  %v1648 = vsel %vm380, %v1634, 0
  %v1651 = vsel %vm380, %v1635, 0
  %v1654 = vsel %vm380, %v1636, 0
  %v1657 = vsel %vm380, %v1637, 0
  %1659 = vmatprep.subr.mxu0 0.0
  %1660 = vmatpush1.msra.mxu0 %v1639
  %1661 = vmatprep.subr.mxu0 0.0
  %1662 = vmatpush1.msra.mxu0 %v1640
  %1663 = vmatprep.subr.mxu0 0.0
  %1664 = vmatpush1.msra.mxu0 %v1641
  %1665 = vmatprep.subr.mxu0 0.0
  %1666 = vmatpush1.msra.mxu0 %v1642
  %1667 = vmatprep.subr.mxu0 0.0
  %1668 = vmatpush1.msra.mxu0 %v1643
  %1669 = vmatprep.subr.mxu0 0.0
  %1670 = vmatpush1.msra.mxu0 %v1644
  %1671 = vmatprep.subr.mxu0 0.0
  %1672 = vmatpush1.msra.mxu0 %v1645
  %1673 = vmatprep.subr.mxu0 0.0
  %1674 = vmatpush1.msra.mxu0 %v1646
  %1675 = vmatprep.subr.mxu0 0.0
  %1676 = vmatpush1.msra.mxu0 0.0
  %1677 = vmatprep.subr.mxu0 0.0
  %1678 = vmatpush1.msra.mxu0 0.0
  %1679 = vmatprep.subr.mxu0 0.0
  %1680 = vmatpush1.msra.mxu0 0.0
  %1681 = vmatprep.subr.mxu0 0.0
  %1682 = vmatpush1.msra.mxu0 0.0
  %1683 = vmatprep.subr.mxu0 0.0
  %1684 = vmatpush1.msra.mxu0 0.0
  %1685 = vmatprep.subr.mxu0 0.0
  %1686 = vmatpush1.msra.mxu0 0.0
  %1687 = vmatprep.subr.mxu0 0.0
  %1688 = vmatpush1.msra.mxu0 0.0
  %1689 = vmatprep.subr.mxu0 0.0
  %1690 = vmatpush1.msra.mxu0 0.0
  %1691 = vmatprep.subr.mxu0 0.0
  %1692 = vmatpush1.msra.mxu0 0.0
  %1693 = vmatprep.subr.mxu0 0.0
  %1694 = vmatpush1.msra.mxu0 0.0
  %1695 = vmatprep.subr.mxu0 0.0
  %1696 = vmatpush1.msra.mxu0 0.0
  %1697 = vmatprep.subr.mxu0 0.0
  %1698 = vmatpush1.msra.mxu0 0.0
  %1699 = vmatprep.subr.mxu0 0.0
  %1700 = vmatpush1.msra.mxu0 0.0
  %1701 = vmatprep.subr.mxu0 0.0
  %1702 = vmatpush1.msra.mxu0 0.0
  %1703 = vmatprep.subr.mxu0 0.0
  %1704 = vmatpush1.msra.mxu0 0.0
  %1705 = vmatprep.subr.mxu0 0.0
  %1706 = vmatpush1.msra.mxu0 0.0
  %1707 = vmatprep.subr.mxu0 0.0
  %1708 = vmatpush1.msra.mxu0 0.0
  %1709 = vmatprep.subr.mxu0 0.0
  %1710 = vmatpush1.msra.mxu0 0.0
  %1711 = vmatprep.subr.mxu0 0.0
  %1712 = vmatpush1.msra.mxu0 0.0
  %1713 = vmatprep.subr.mxu0 0.0
  %1714 = vmatpush1.msra.mxu0 0.0
  %1715 = vmatprep.subr.mxu0 0.0
  %1716 = vmatpush1.msra.mxu0 0.0
  %1717 = vmatprep.subr.mxu0 0.0
  %1718 = vmatpush1.msra.mxu0 0.0
  %1719 = vmatprep.subr.mxu0 0.0
  %1720 = vmatpush1.msra.mxu0 0.0
  %1721 = vmatprep.subr.mxu0 0.0
  %1722 = vmatpush1.msra.mxu0 0.0
  %1723 = vmatprep.mubr.f32.mxu0 0.0
  %1724 = vmatmul.mubr.f32.gmra.mrb[0].mxu0 %v1648
  %v1725 = vpop.f32.mrb[0].mxu0
  %v1726 = vadd.f32 0.0, %v1725
  %v1727 = vpop.f32.mrb[0].mxu0
  %1728 = vmatprep.mubr.f32.mxu0 0.0
  %1729 = vmatmul.mubr.f32.gmra.mrb[0].mxu0 %v1651
  %v1730 = vpop.f32.mrb[0].mxu0
  %v1731 = vadd.f32 0.0, %v1730
  %v1732 = vpop.f32.mrb[0].mxu0
  %1733 = vmatprep.mubr.f32.mxu0 0.0
  %1734 = vmatmul.mubr.f32.gmra.mrb[0].mxu0 %v1654
  %v1735 = vpop.f32.mrb[0].mxu0
  %v1736 = vadd.f32 0.0, %v1735
  %v1737 = vpop.f32.mrb[0].mxu0
  %1738 = vmatprep.mubr.f32.mxu0 0.0
  %1739 = vmatmul.mubr.f32.gmra.mrb[0].mxu0 %v1657
  %v1740 = vpop.f32.mrb[0].mxu0
  %v1741 = vadd.f32 0.0, %v1740
  %v1742 = vpop.f32.mrb[0].mxu0
  %1743 = vdwg.mxu0
  %v1744 = vxor.u32 %v1726, 2147483648
  %v1745 = vxor.u32 %v1731, 2147483648
  %v1746 = vxor.u32 %v1736, 2147483648
  %v1747 = vxor.u32 %v1741, 2147483648
  %v1748 = vmul.f32 %v1744, 1.442695
  %v1749 = vpow.pop %v1748
  %v1750 = vmul.f32 %v1745, 1.442695
  %v1751 = vpow.pop %v1750
  %v1752 = vmul.f32 %v1746, 1.442695
  %v1753 = vpow.pop %v1752
  %v1754 = vmul.f32 %v1747, 1.442695
  %v1755 = vpow.pop %v1754
  %v1756 = vadd.f32 %v1749, 1.0
  %v1757 = vadd.f32 %v1751, 1.0
  %v1758 = vadd.f32 %v1753, 1.0
  %v1759 = vadd.f32 %v1755, 1.0
  %v1760 = vrcp.pop %v1756
  %v1761 = vmul.f32 1.0, %v1760
  %v1762 = vrcp.pop %v1757
  %v1763 = vmul.f32 1.0, %v1762
  %v1764 = vrcp.pop %v1758
  %v1765 = vmul.f32 1.0, %v1764
  %v1766 = vrcp.pop %v1759
  %v1767 = vmul.f32 1.0, %v1766
  %v1768 = vsub.f32 1.0, %v1761
  %v1769 = vsub.f32 1.0, %v1763
  %v1770 = vsub.f32 1.0, %v1765
  %v1771 = vsub.f32 1.0, %v1767
  %1776 = vrot.lane.b32.xlu0 %v1726, 96
  %v1777 = vpop.permute.xlu0 %1776
  %1778 = vrot.lane.b32.xlu0 %v1731, 96
  %v1779 = vpop.permute.xlu0 %1778
  %1780 = vrot.lane.b32.xlu0 %v1736, 96
  %v1781 = vpop.permute.xlu0 %1780
  %1782 = vrot.lane.b32.xlu0 %v1741, 96
  %v1783 = vpop.permute.xlu0 %1782
  %v1788 = vmul.f32 %v1768, %v1777
  %v1789 = vmul.f32 %v1769, %v1779
  %v1790 = vmul.f32 %v1770, %v1781
  %v1791 = vmul.f32 %v1771, %v1783
  %v1792 = vrot.slane %v1788, 7
  %v1793 = vrot.slane %v1789, 7
  %v1794 = vrot.slane %v1790, 7
  %v1795 = vrot.slane %v1791, 7
  %v1796 = vsel %vm234, %v1794, %v1795
  %v1797 = vsel %vm234, %v1793, %v1794
  %v1798 = vsel %vm234, %v1792, %v1793
  %v1799 = vsel %vm234, %v1795, %v1792
  %v1800 = vsel %vm243, %v1799, 0.0
  %v1801 = vsel %vm244, %v1798, 0.0
  %v1802 = vsel %vm245, %v1797, 0.0
  %v1803 = vsel %vm246, %v1796, 0.0
  %v1804 = vmul.f32 %v1761, %v1800
  %v1805 = vmul.f32 %v1763, %v1801
  %v1806 = vmul.f32 %v1765, %v1802
  %v1807 = vmul.f32 %v1767, %v1803
  %v1808 = vadd.f32 %v1804, %v1788
  %v1809 = vadd.f32 %v1805, %v1789
  %v1810 = vadd.f32 %v1806, %v1790
  %v1811 = vadd.f32 %v1807, %v1791
  %v1812 = vrot.slane %v1761, 7
  %v1813 = vrot.slane %v1763, 7
  %v1814 = vrot.slane %v1765, 7
  %v1815 = vrot.slane %v1767, 7
  %v1816 = vsel %vm234, %v1814, %v1815
  %v1817 = vsel %vm234, %v1813, %v1814
  %v1818 = vsel %vm234, %v1812, %v1813
  %v1819 = vsel %vm234, %v1815, %v1812
  %v1820 = vsel %vm243, %v1819, 1.0
  %v1821 = vsel %vm244, %v1818, 1.0
  %v1822 = vsel %vm245, %v1817, 1.0
  %v1823 = vsel %vm246, %v1816, 1.0
  %v1824 = vmul.f32 %v1761, %v1820
  %v1825 = vmul.f32 %v1763, %v1821
  %v1826 = vmul.f32 %v1765, %v1822
  %v1827 = vmul.f32 %v1767, %v1823
  %v1828 = vrot.slane %v1808, 6
  %v1829 = vrot.slane %v1809, 6
  %v1830 = vrot.slane %v1810, 6
  %v1831 = vrot.slane %v1811, 6
  %v1832 = vsel %vm209, %v1830, %v1831
  %v1833 = vsel %vm209, %v1829, %v1830
  %v1834 = vsel %vm209, %v1828, %v1829
  %v1835 = vsel %vm209, %v1831, %v1828
  %v1836 = vsel %vm218, %v1835, 0.0
  %v1837 = vsel %vm219, %v1834, 0.0
  %v1838 = vsel %vm220, %v1833, 0.0
  %v1839 = vsel %vm221, %v1832, 0.0
  %v1840 = vmul.f32 %v1824, %v1836
  %v1841 = vmul.f32 %v1825, %v1837
  %v1842 = vmul.f32 %v1826, %v1838
  %v1843 = vmul.f32 %v1827, %v1839
  %v1844 = vadd.f32 %v1840, %v1808
  %v1845 = vadd.f32 %v1841, %v1809
  %v1846 = vadd.f32 %v1842, %v1810
  %v1847 = vadd.f32 %v1843, %v1811
  %v1848 = vrot.slane %v1824, 6
  %v1849 = vrot.slane %v1825, 6
  %v1850 = vrot.slane %v1826, 6
  %v1851 = vrot.slane %v1827, 6
  %v1852 = vsel %vm209, %v1850, %v1851
  %v1853 = vsel %vm209, %v1849, %v1850
  %v1854 = vsel %vm209, %v1848, %v1849
  %v1855 = vsel %vm209, %v1851, %v1848
  %v1856 = vsel %vm218, %v1855, 1.0
  %v1857 = vsel %vm219, %v1854, 1.0
  %v1858 = vsel %vm220, %v1853, 1.0
  %v1859 = vsel %vm221, %v1852, 1.0
  %v1860 = vmul.f32 %v1824, %v1856
  %v1861 = vmul.f32 %v1825, %v1857
  %v1862 = vmul.f32 %v1826, %v1858
  %v1863 = vmul.f32 %v1827, %v1859
  %v1864 = vrot.slane %v1844, 4
  %v1865 = vrot.slane %v1845, 4
  %v1866 = vrot.slane %v1846, 4
  %v1867 = vrot.slane %v1847, 4
  %v1868 = vsel %vm852, %v1866, %v1867
  %v1869 = vsel %vm852, %v1865, %v1866
  %v1870 = vsel %vm852, %v1864, %v1865
  %v1871 = vsel %vm852, %v1867, %v1864
  %v1872 = vsel %vm861, %v1871, 0.0
  %v1873 = vsel %vm862, %v1870, 0.0
  %v1874 = vsel %vm863, %v1869, 0.0
  %v1875 = vsel %vm864, %v1868, 0.0
  %v1876 = vmul.f32 %v1860, %v1872
  %v1877 = vmul.f32 %v1861, %v1873
  %v1878 = vmul.f32 %v1862, %v1874
  %v1879 = vmul.f32 %v1863, %v1875
  %v1880 = vadd.f32 %v1876, %v1844
  %v1881 = vadd.f32 %v1877, %v1845
  %v1882 = vadd.f32 %v1878, %v1846
  %v1883 = vadd.f32 %v1879, %v1847
  %v1884 = vrot.slane %v1860, 4
  %v1885 = vrot.slane %v1861, 4
  %v1886 = vrot.slane %v1862, 4
  %v1887 = vrot.slane %v1863, 4
  %v1888 = vsel %vm852, %v1886, %v1887
  %v1889 = vsel %vm852, %v1885, %v1886
  %v1890 = vsel %vm852, %v1884, %v1885
  %v1891 = vsel %vm852, %v1887, %v1884
  %v1892 = vsel %vm861, %v1891, 1.0
  %v1893 = vsel %vm862, %v1890, 1.0
  %v1894 = vsel %vm863, %v1889, 1.0
  %v1895 = vsel %vm864, %v1888, 1.0
  %v1896 = vmul.f32 %v1860, %v1892
  %v1897 = vmul.f32 %v1861, %v1893
  %v1898 = vmul.f32 %v1862, %v1894
  %v1899 = vmul.f32 %v1863, %v1895
  %v1900 = vsel %vm901, %v1883, 0.0
  %v1901 = vsel %vm902, %v1880, 0.0
  %v1902 = vsel %vm903, %v1881, 0.0
  %v1903 = vsel %vm904, %v1882, 0.0
  %v1904 = vmul.f32 %v1896, %v1900
  %v1905 = vmul.f32 %v1897, %v1901
  %v1906 = vmul.f32 %v1898, %v1902
  %v1907 = vmul.f32 %v1899, %v1903
  %v1908 = vadd.f32 %v1904, %v1880
  %v1909 = vadd.f32 %v1905, %v1881
  %v1910 = vadd.f32 %v1906, %v1882
  %v1911 = vadd.f32 %v1907, %v1883
  %1916 = vrot.lane.b32.xlu0 %v1908, 64
  %v1917 = vpop.permute.xlu0 %1916
  %1918 = vrot.lane.b32.xlu0 %v1909, 64
  %v1919 = vpop.permute.xlu0 %1918
  %1920 = vrot.lane.b32.xlu0 %v1910, 64
  %v1921 = vpop.permute.xlu0 %1920
  %1922 = vrot.lane.b32.xlu0 %v1911, 64
  %v1923 = vpop.permute.xlu0 %1922
  %v1928 = vmul.f32 %v1761, %v1917
  %v1929 = vmul.f32 %v1763, %v1919
  %v1930 = vmul.f32 %v1765, %v1921
  %v1931 = vmul.f32 %v1767, %v1923
  %v1932 = vmul.f32 %v1726, 0.1
  %v1933 = vmul.f32 %v1731, 0.1
  %v1934 = vmul.f32 %v1736, 0.1
  %v1935 = vmul.f32 %v1741, 0.1
  %1940 = vrot.lane.b32.xlu0 %v1932, 32
  %v1941 = vpop.permute.xlu0 %1940
  %1942 = vrot.lane.b32.xlu0 %v1933, 32
  %v1943 = vpop.permute.xlu0 %1942
  %1944 = vrot.lane.b32.xlu0 %v1934, 32
  %v1945 = vpop.permute.xlu0 %1944
  %1946 = vrot.lane.b32.xlu0 %v1935, 32
  %v1947 = vpop.permute.xlu0 %1946
  %v1952 = vadd.f32 %v1928, %v1941
  %v1953 = vadd.f32 %v1929, %v1943
  %v1954 = vadd.f32 %v1930, %v1945
  %v1955 = vadd.f32 %v1931, %v1947
  %1960 = vrot.lane.b32.xlu0 %v1952, 64
  %v1961 = vpop.permute.xlu0 %1960
  %1962 = vrot.lane.b32.xlu0 %v1953, 64
  %v1963 = vpop.permute.xlu0 %1962
  %1964 = vrot.lane.b32.xlu0 %v1954, 64
  %v1965 = vpop.permute.xlu0 %1964
  %1966 = vrot.lane.b32.xlu0 %v1955, 64
  %v1967 = vpop.permute.xlu0 %1966
  %v1972 = vsel %vm370, %v1961, 0.0
  %1973 = vadd.xlane.f32.xlu0 %v1972
  %v1974 = vpop.xlane.xlu0 %1973
  %v1975 = vsel %vm370, %v1963, 0.0
  %1976 = vadd.xlane.f32.xlu0 %v1975
  %v1977 = vpop.xlane.xlu0 %1976
  %v1978 = vsel %vm370, %v1965, 0.0
  %1979 = vadd.xlane.f32.xlu0 %v1978
  %v1980 = vpop.xlane.xlu0 %1979
  %v1981 = vsel %vm370, %v1967, 0.0
  %1982 = vadd.xlane.f32.xlu0 %v1981
  %v1983 = vpop.xlane.xlu0 %1982
  %v1984 = vmul.f32 %v1974, %v518
  %v1985 = vmul.f32 %v1977, %v518
  %v1986 = vmul.f32 %v1980, %v518
  %v1987 = vmul.f32 %v1983, %v518
  %v1988 = vsub.f32 %v1952, %v1984
  %v1989 = vsub.f32 %v1953, %v1985
  %v1990 = vsub.f32 %v1954, %v1986
  %v1991 = vsub.f32 %v1955, %v1987
  %v1992 = vmul.f32 %v1988, %v1988
  %v1993 = vmul.f32 %v1989, %v1989
  %v1994 = vmul.f32 %v1990, %v1990
  %v1995 = vmul.f32 %v1991, %v1991
  %2000 = vrot.lane.b32.xlu0 %v1992, 64
  %v2001 = vpop.permute.xlu0 %2000
  %2002 = vrot.lane.b32.xlu0 %v1993, 64
  %v2003 = vpop.permute.xlu0 %2002
  %2004 = vrot.lane.b32.xlu0 %v1994, 64
  %v2005 = vpop.permute.xlu0 %2004
  %2006 = vrot.lane.b32.xlu0 %v1995, 64
  %v2007 = vpop.permute.xlu0 %2006
  %v2012 = vsel %vm370, %v2001, 0.0
  %2013 = vadd.xlane.f32.xlu0 %v2012
  %v2014 = vpop.xlane.xlu0 %2013
  %v2015 = vsel %vm370, %v2003, 0.0
  %2016 = vadd.xlane.f32.xlu0 %v2015
  %v2017 = vpop.xlane.xlu0 %2016
  %v2018 = vsel %vm370, %v2005, 0.0
  %2019 = vadd.xlane.f32.xlu0 %v2018
  %v2020 = vpop.xlane.xlu0 %2019
  %v2021 = vsel %vm370, %v2007, 0.0
  %2022 = vadd.xlane.f32.xlu0 %v2021
  %v2023 = vpop.xlane.xlu0 %2022
  %v2024 = vmul.f32 %v2014, %v518
  %v2025 = vmul.f32 %v2017, %v518
  %v2026 = vmul.f32 %v2020, %v518
  %v2027 = vmul.f32 %v2023, %v518
  %v2028 = vadd.f32 %v2024, 1e-05
  %v2029 = vadd.f32 %v2025, 1e-05
  %v2030 = vadd.f32 %v2026, 1e-05
  %v2031 = vadd.f32 %v2027, 1e-05
  %v2032 = vrsqrt.pop %v2028
  %v2033 = vrsqrt.pop %v2029
  %v2034 = vrsqrt.pop %v2030
  %v2035 = vrsqrt.pop %v2031
  %v2036 = vmul.f32 %v1988, %v2032
  %v2037 = vmul.f32 %v1989, %v2033
  %v2038 = vmul.f32 %v1990, %v2034
  %v2039 = vmul.f32 %v1991, %v2035
  %s2040 = scalar_lea.vmem %s10, 32
  %v2041 = vld [vmem:[%s2040] sm:$0xff]
  %v2042 = vld [vmem:[%s2040 + $0x8] sm:$0xff]
  %v2043 = vld [vmem:[%s2040 + $0x10] sm:$0xff]
  %v2044 = vld [vmem:[%s2040 + $0x18] sm:$0xff]
  %2049 = vrot.lane.b32.xlu0 %v2036, 64
  %v2050 = vpop.permute.xlu0 %2049
  %2051 = vrot.lane.b32.xlu0 %v2037, 64
  %v2052 = vpop.permute.xlu0 %2051
  %2053 = vrot.lane.b32.xlu0 %v2038, 64
  %v2054 = vpop.permute.xlu0 %2053
  %2055 = vrot.lane.b32.xlu0 %v2039, 64
  %v2056 = vpop.permute.xlu0 %2055
  %v2057 = vsel %vm370, %v2050, 0
  %v2059 = vsel %vm370, %v2052, 0
  %v2061 = vsel %vm370, %v2054, 0
  %v2063 = vsel %vm370, %v2056, 0
  %2065 = vmatprep.subr.mxu0 0.0
  %2066 = vmatpush1.msra.mxu0 %v2041
  %2067 = vmatprep.subr.mxu0 0.0
  %2068 = vmatpush1.msra.mxu0 %v2042
  %2069 = vmatprep.subr.mxu0 0.0
  %2070 = vmatpush1.msra.mxu0 %v2043
  %2071 = vmatprep.subr.mxu0 0.0
  %2072 = vmatpush1.msra.mxu0 %v2044
  %2073 = vmatprep.subr.mxu0 0.0
  %2074 = vmatpush1.msra.mxu0 0.0
  %2075 = vmatprep.subr.mxu0 0.0
  %2076 = vmatpush1.msra.mxu0 0.0
  %2077 = vmatprep.subr.mxu0 0.0
  %2078 = vmatpush1.msra.mxu0 0.0
  %2079 = vmatprep.subr.mxu0 0.0
  %2080 = vmatpush1.msra.mxu0 0.0
  %2081 = vmatprep.subr.mxu0 0.0
  %2082 = vmatpush1.msra.mxu0 0.0
  %2083 = vmatprep.subr.mxu0 0.0
  %2084 = vmatpush1.msra.mxu0 0.0
  %2085 = vmatprep.subr.mxu0 0.0
  %2086 = vmatpush1.msra.mxu0 0.0
  %2087 = vmatprep.subr.mxu0 0.0
  %2088 = vmatpush1.msra.mxu0 0.0
  %2089 = vmatprep.subr.mxu0 0.0
  %2090 = vmatpush1.msra.mxu0 0.0
  %2091 = vmatprep.subr.mxu0 0.0
  %2092 = vmatpush1.msra.mxu0 0.0
  %2093 = vmatprep.subr.mxu0 0.0
  %2094 = vmatpush1.msra.mxu0 0.0
  %2095 = vmatprep.subr.mxu0 0.0
  %2096 = vmatpush1.msra.mxu0 0.0
  %2097 = vmatprep.subr.mxu0 0.0
  %2098 = vmatpush1.msra.mxu0 0.0
  %2099 = vmatprep.subr.mxu0 0.0
  %2100 = vmatpush1.msra.mxu0 0.0
  %2101 = vmatprep.subr.mxu0 0.0
  %2102 = vmatpush1.msra.mxu0 0.0
  %2103 = vmatprep.subr.mxu0 0.0
  %2104 = vmatpush1.msra.mxu0 0.0
  %2105 = vmatprep.subr.mxu0 0.0
  %2106 = vmatpush1.msra.mxu0 0.0
  %2107 = vmatprep.subr.mxu0 0.0
  %2108 = vmatpush1.msra.mxu0 0.0
  %2109 = vmatprep.subr.mxu0 0.0
  %2110 = vmatpush1.msra.mxu0 0.0
  %2111 = vmatprep.subr.mxu0 0.0
  %2112 = vmatpush1.msra.mxu0 0.0
  %2113 = vmatprep.subr.mxu0 0.0
  %2114 = vmatpush1.msra.mxu0 0.0
  %2115 = vmatprep.subr.mxu0 0.0
  %2116 = vmatpush1.msra.mxu0 0.0
  %2117 = vmatprep.subr.mxu0 0.0
  %2118 = vmatpush1.msra.mxu0 0.0
  %2119 = vmatprep.subr.mxu0 0.0
  %2120 = vmatpush1.msra.mxu0 0.0
  %2121 = vmatprep.subr.mxu0 0.0
  %2122 = vmatpush1.msra.mxu0 0.0
  %2123 = vmatprep.subr.mxu0 0.0
  %2124 = vmatpush1.msra.mxu0 0.0
  %2125 = vmatprep.subr.mxu0 0.0
  %2126 = vmatpush1.msra.mxu0 0.0
  %2127 = vmatprep.subr.mxu0 0.0
  %2128 = vmatpush1.msra.mxu0 0.0
  %2129 = vmatprep.mubr.f32.mxu0 0.0
  %2130 = vmatmul.mubr.f32.gmra.mrb[0].mxu0 %v2057
  %v2131 = vpop.f32.mrb[0].mxu0
  %v2132 = vadd.f32 0.0, %v2131
  %v2133 = vpop.f32.mrb[0].mxu0
  %2134 = vmatprep.mubr.f32.mxu0 0.0
  %2135 = vmatmul.mubr.f32.gmra.mrb[0].mxu0 %v2059
  %v2136 = vpop.f32.mrb[0].mxu0
  %v2137 = vadd.f32 0.0, %v2136
  %v2138 = vpop.f32.mrb[0].mxu0
  %2139 = vmatprep.mubr.f32.mxu0 0.0
  %2140 = vmatmul.mubr.f32.gmra.mrb[0].mxu0 %v2061
  %v2141 = vpop.f32.mrb[0].mxu0
  %v2142 = vadd.f32 0.0, %v2141
  %v2143 = vpop.f32.mrb[0].mxu0
  %2144 = vmatprep.mubr.f32.mxu0 0.0
  %2145 = vmatmul.mubr.f32.gmra.mrb[0].mxu0 %v2063
  %v2146 = vpop.f32.mrb[0].mxu0
  %v2147 = vadd.f32 0.0, %v2146
  %v2148 = vpop.f32.mrb[0].mxu0
  %2149 = vdwg.mxu0
  %v2150 = vadd.f32 %v1518, %v2132
  %v2151 = vadd.f32 %v1519, %v2137
  %v2152 = vadd.f32 %v1520, %v2142
  %v2153 = vadd.f32 %v1521, %v2147
  %s2154 = scalar_lea.vmem %s7, 1
  %v2155 = vld [vmem:[%s2154] sm:$0x1]
  %s2156 = scalar_lea.vmem %s8, 1
  %v2157 = vld [vmem:[%s2156] sm:$0x1]
  %v2158 = vsel %vm370, %v2150, 0.0
  %2159 = vadd.xlane.f32.xlu0 %v2158
  %v2160 = vpop.xlane.xlu0 %2159
  %v2161 = vsel %vm370, %v2151, 0.0
  %2162 = vadd.xlane.f32.xlu0 %v2161
  %v2163 = vpop.xlane.xlu0 %2162
  %v2164 = vsel %vm370, %v2152, 0.0
  %2165 = vadd.xlane.f32.xlu0 %v2164
  %v2166 = vpop.xlane.xlu0 %2165
  %v2167 = vsel %vm370, %v2153, 0.0
  %2168 = vadd.xlane.f32.xlu0 %v2167
  %v2169 = vpop.xlane.xlu0 %2168
  %v2170 = vmul.f32 %v2160, %v518
  %v2171 = vmul.f32 %v2163, %v518
  %v2172 = vmul.f32 %v2166, %v518
  %v2173 = vmul.f32 %v2169, %v518
  %v2174 = vsub.f32 %v2150, %v2170
  %v2175 = vsub.f32 %v2151, %v2171
  %v2176 = vsub.f32 %v2152, %v2172
  %v2177 = vsub.f32 %v2153, %v2173
  %v2178 = vmul.f32 %v2174, %v2174
  %v2179 = vmul.f32 %v2175, %v2175
  %v2180 = vmul.f32 %v2176, %v2176
  %v2181 = vmul.f32 %v2177, %v2177
  %v2182 = vsel %vm370, %v2178, 0.0
  %2183 = vadd.xlane.f32.xlu0 %v2182
  %v2184 = vpop.xlane.xlu0 %2183
  %v2185 = vsel %vm370, %v2179, 0.0
  %2186 = vadd.xlane.f32.xlu0 %v2185
  %v2187 = vpop.xlane.xlu0 %2186
  %v2188 = vsel %vm370, %v2180, 0.0
  %2189 = vadd.xlane.f32.xlu0 %v2188
  %v2190 = vpop.xlane.xlu0 %2189
  %v2191 = vsel %vm370, %v2181, 0.0
  %2192 = vadd.xlane.f32.xlu0 %v2191
  %v2193 = vpop.xlane.xlu0 %2192
  %v2194 = vmul.f32 %v2184, %v518
  %v2195 = vmul.f32 %v2187, %v518
  %v2196 = vmul.f32 %v2190, %v518
  %v2197 = vmul.f32 %v2193, %v518
  %v2198 = vadd.f32 %v2194, 1e-05
  %v2199 = vadd.f32 %v2195, 1e-05
  %v2200 = vadd.f32 %v2196, 1e-05
  %v2201 = vadd.f32 %v2197, 1e-05
  %v2202 = vrsqrt.pop %v2198
  %v2203 = vrsqrt.pop %v2199
  %v2204 = vrsqrt.pop %v2200
  %v2205 = vrsqrt.pop %v2201
  %v2206 = vmul.f32 %v2174, %v2202
  %v2207 = vmul.f32 %v2175, %v2203
  %v2208 = vmul.f32 %v2176, %v2204
  %v2209 = vmul.f32 %v2177, %v2205
  %v2211 = vlaneseq
  %v2212 = vshrl.u32 %v2211, 7
  %v2213 = vsub.s32 0, %v2212
  %v2214 = vrot.slane %v2155, %v2213
  %v2216 = vmul.f32 %v2206, %v2214
  %v2217 = vmul.f32 %v2207, %v2214
  %v2218 = vmul.f32 %v2208, %v2214
  %v2219 = vmul.f32 %v2209, %v2214
  %v2221 = vlaneseq
  %v2222 = vshrl.u32 %v2221, 7
  %v2223 = vsub.s32 0, %v2222
  %v2224 = vrot.slane %v2157, %v2223
  %v2226 = vadd.f32 %v2216, %v2224
  %v2227 = vadd.f32 %v2217, %v2224
  %v2228 = vadd.f32 %v2218, %v2224
  %v2229 = vadd.f32 %v2219, %v2224
  %v2230 = vrot.slane %v2226, 7
  %v2231 = vrot.slane %v2227, 7
  %v2232 = vrot.slane %v2228, 7
  %v2233 = vrot.slane %v2229, 7
  %v2234 = vsel %vm234, %v2232, %v2233
  %v2235 = vsel %vm234, %v2231, %v2232
  %v2236 = vsel %vm234, %v2230, %v2231
  %v2237 = vsel %vm234, %v2233, %v2230
  %v2238 = vsel %vm591, %v1527, %v2237
  %v2239 = vsel %vm592, %v1526, %v2236
  %v2240 = vsel %vm593, %v1529, %v2235
  %v2241 = vsel %vm594, %v1528, %v2234
  %2246 = vrot.lane.b32.xlu0 %v2226, 32
  %v2247 = vpop.permute.xlu0 %2246
  %2248 = vrot.lane.b32.xlu0 %v2227, 32
  %v2249 = vpop.permute.xlu0 %2248
  %2250 = vrot.lane.b32.xlu0 %v2228, 32
  %v2251 = vpop.permute.xlu0 %2250
  %2252 = vrot.lane.b32.xlu0 %v2229, 32
  %v2253 = vpop.permute.xlu0 %2252
  %v2258 = vsel %vm370, %v2238, %v2247
  %v2259 = vsel %vm370, %v2239, %v2249
  %v2260 = vsel %vm370, %v2240, %v2251
  %v2261 = vsel %vm370, %v2241, %v2253
  %s2262 = scalar_lea.vmem %s11, 128
  %v2263 = vld [vmem:[%s2262] sm:$0xff]
  %v2264 = vld [vmem:[%s2262 + $0x8] sm:$0xff]
  %v2265 = vld [vmem:[%s2262 + $0x10] sm:$0xff]
  %v2266 = vld [vmem:[%s2262 + $0x18] sm:$0xff]
  %v2267 = vld [vmem:[%s2262 + $0x20] sm:$0xff]
  %v2268 = vld [vmem:[%s2262 + $0x28] sm:$0xff]
  %v2269 = vld [vmem:[%s2262 + $0x30] sm:$0xff]
  %v2270 = vld [vmem:[%s2262 + $0x38] sm:$0xff]
  %v2271 = vld [vmem:[%s2262 + $0x40] sm:$0xff]
  %v2272 = vld [vmem:[%s2262 + $0x48] sm:$0xff]
  %v2273 = vld [vmem:[%s2262 + $0x50] sm:$0xff]
  %v2274 = vld [vmem:[%s2262 + $0x58] sm:$0xff]
  %v2275 = vld [vmem:[%s2262 + $0x60] sm:$0xff]
  %v2276 = vld [vmem:[%s2262 + $0x68] sm:$0xff]
  %v2277 = vld [vmem:[%s2262 + $0x70] sm:$0xff]
  %v2278 = vld [vmem:[%s2262 + $0x78] sm:$0xff]
  %v2280 = vsel %vm380, %v2258, 0
  %v2283 = vsel %vm380, %v2259, 0
  %v2286 = vsel %vm380, %v2260, 0
  %v2289 = vsel %vm380, %v2261, 0
  %2291 = vmatprep.subr.mxu0 %v2264
  %2292 = vmatpush1.msra.mxu0 %v2263
  %2293 = vmatprep.subr.mxu0 %v2266
  %2294 = vmatpush1.msra.mxu0 %v2265
  %2295 = vmatprep.subr.mxu0 %v2268
  %2296 = vmatpush1.msra.mxu0 %v2267
  %2297 = vmatprep.subr.mxu0 %v2270
  %2298 = vmatpush1.msra.mxu0 %v2269
  %2299 = vmatprep.subr.mxu0 %v2272
  %2300 = vmatpush1.msra.mxu0 %v2271
  %2301 = vmatprep.subr.mxu0 %v2274
  %2302 = vmatpush1.msra.mxu0 %v2273
  %2303 = vmatprep.subr.mxu0 %v2276
  %2304 = vmatpush1.msra.mxu0 %v2275
  %2305 = vmatprep.subr.mxu0 %v2278
  %2306 = vmatpush1.msra.mxu0 %v2277
  %2307 = vmatprep.subr.mxu0 0.0
  %2308 = vmatpush1.msra.mxu0 0.0
  %2309 = vmatprep.subr.mxu0 0.0
  %2310 = vmatpush1.msra.mxu0 0.0
  %2311 = vmatprep.subr.mxu0 0.0
  %2312 = vmatpush1.msra.mxu0 0.0
  %2313 = vmatprep.subr.mxu0 0.0
  %2314 = vmatpush1.msra.mxu0 0.0
  %2315 = vmatprep.subr.mxu0 0.0
  %2316 = vmatpush1.msra.mxu0 0.0
  %2317 = vmatprep.subr.mxu0 0.0
  %2318 = vmatpush1.msra.mxu0 0.0
  %2319 = vmatprep.subr.mxu0 0.0
  %2320 = vmatpush1.msra.mxu0 0.0
  %2321 = vmatprep.subr.mxu0 0.0
  %2322 = vmatpush1.msra.mxu0 0.0
  %2323 = vmatprep.subr.mxu0 0.0
  %2324 = vmatpush1.msra.mxu0 0.0
  %2325 = vmatprep.subr.mxu0 0.0
  %2326 = vmatpush1.msra.mxu0 0.0
  %2327 = vmatprep.subr.mxu0 0.0
  %2328 = vmatpush1.msra.mxu0 0.0
  %2329 = vmatprep.subr.mxu0 0.0
  %2330 = vmatpush1.msra.mxu0 0.0
  %2331 = vmatprep.subr.mxu0 0.0
  %2332 = vmatpush1.msra.mxu0 0.0
  %2333 = vmatprep.subr.mxu0 0.0
  %2334 = vmatpush1.msra.mxu0 0.0
  %2335 = vmatprep.subr.mxu0 0.0
  %2336 = vmatpush1.msra.mxu0 0.0
  %2337 = vmatprep.subr.mxu0 0.0
  %2338 = vmatpush1.msra.mxu0 0.0
  %2339 = vmatprep.subr.mxu0 0.0
  %2340 = vmatpush1.msra.mxu0 0.0
  %2341 = vmatprep.subr.mxu0 0.0
  %2342 = vmatpush1.msra.mxu0 0.0
  %2343 = vmatprep.subr.mxu0 0.0
  %2344 = vmatpush1.msra.mxu0 0.0
  %2345 = vmatprep.subr.mxu0 0.0
  %2346 = vmatpush1.msra.mxu0 0.0
  %2347 = vmatprep.subr.mxu0 0.0
  %2348 = vmatpush1.msra.mxu0 0.0
  %2349 = vmatprep.subr.mxu0 0.0
  %2350 = vmatpush1.msra.mxu0 0.0
  %2351 = vmatprep.subr.mxu0 0.0
  %2352 = vmatpush1.msra.mxu0 0.0
  %2353 = vmatprep.subr.mxu0 0.0
  %2354 = vmatpush1.msra.mxu0 0.0
  %2355 = vmatprep.mubr.f32.mxu0 0.0
  %2356 = vmatmul.mubr.f32.gmra.mrb[0].mxu0 %v2280
  %v2357 = vpop.f32.mrb[0].mxu0
  %v2358 = vadd.f32 0.0, %v2357
  %v2359 = vpop.f32.mrb[0].mxu0
  %v2360 = vadd.f32 0.0, %v2359
  %2361 = vmatprep.mubr.f32.mxu0 0.0
  %2362 = vmatmul.mubr.f32.gmra.mrb[0].mxu0 %v2283
  %v2363 = vpop.f32.mrb[0].mxu0
  %v2364 = vadd.f32 0.0, %v2363
  %v2365 = vpop.f32.mrb[0].mxu0
  %v2366 = vadd.f32 0.0, %v2365
  %2367 = vmatprep.mubr.f32.mxu0 0.0
  %2368 = vmatmul.mubr.f32.gmra.mrb[0].mxu0 %v2286
  %v2369 = vpop.f32.mrb[0].mxu0
  %v2370 = vadd.f32 0.0, %v2369
  %v2371 = vpop.f32.mrb[0].mxu0
  %v2372 = vadd.f32 0.0, %v2371
  %2373 = vmatprep.mubr.f32.mxu0 0.0
  %2374 = vmatmul.mubr.f32.gmra.mrb[0].mxu0 %v2289
  %v2375 = vpop.f32.mrb[0].mxu0
  %v2376 = vadd.f32 0.0, %v2375
  %v2377 = vpop.f32.mrb[0].mxu0
  %v2378 = vadd.f32 0.0, %v2377
  %2379 = vdwg.mxu0
  %v2380 = vmax.f32 %v2358, 0.0
  %v2381 = vmax.f32 %v2364, 0.0
  %v2382 = vmax.f32 %v2370, 0.0
  %v2383 = vmax.f32 %v2376, 0.0
  %v2384 = vmul.f32 %v2380, %v2380
  %v2385 = vmul.f32 %v2381, %v2381
  %v2386 = vmul.f32 %v2382, %v2382
  %v2387 = vmul.f32 %v2383, %v2383
  %s2388 = scalar_lea.vmem %s12, 128
  %v2389 = vld [vmem:[%s2388] sm:$0xff]
  %v2390 = vld [vmem:[%s2388 + $0x8] sm:$0xff]
  %v2391 = vld [vmem:[%s2388 + $0x10] sm:$0xff]
  %v2392 = vld [vmem:[%s2388 + $0x18] sm:$0xff]
  %v2393 = vld [vmem:[%s2388 + $0x20] sm:$0xff]
  %v2394 = vld [vmem:[%s2388 + $0x28] sm:$0xff]
  %v2395 = vld [vmem:[%s2388 + $0x30] sm:$0xff]
  %v2396 = vld [vmem:[%s2388 + $0x38] sm:$0xff]
  %v2397 = vld [vmem:[%s2388 + $0x40] sm:$0xff]
  %v2398 = vld [vmem:[%s2388 + $0x48] sm:$0xff]
  %v2399 = vld [vmem:[%s2388 + $0x50] sm:$0xff]
  %v2400 = vld [vmem:[%s2388 + $0x58] sm:$0xff]
  %v2401 = vld [vmem:[%s2388 + $0x60] sm:$0xff]
  %v2402 = vld [vmem:[%s2388 + $0x68] sm:$0xff]
  %v2403 = vld [vmem:[%s2388 + $0x70] sm:$0xff]
  %v2404 = vld [vmem:[%s2388 + $0x78] sm:$0xff]
  %2405 = vmatprep.subr.mxu0 0.0
  %2406 = vmatpush1.msra.mxu0 %v2389
  %2407 = vmatprep.subr.mxu0 0.0
  %2408 = vmatpush1.msra.mxu0 %v2390
  %2409 = vmatprep.subr.mxu0 0.0
  %2410 = vmatpush1.msra.mxu0 %v2391
  %2411 = vmatprep.subr.mxu0 0.0
  %2412 = vmatpush1.msra.mxu0 %v2392
  %2413 = vmatprep.subr.mxu0 0.0
  %2414 = vmatpush1.msra.mxu0 %v2393
  %2415 = vmatprep.subr.mxu0 0.0
  %2416 = vmatpush1.msra.mxu0 %v2394
  %2417 = vmatprep.subr.mxu0 0.0
  %2418 = vmatpush1.msra.mxu0 %v2395
  %2419 = vmatprep.subr.mxu0 0.0
  %2420 = vmatpush1.msra.mxu0 %v2396
  %2421 = vmatprep.subr.mxu0 0.0
  %2422 = vmatpush1.msra.mxu0 %v2397
  %2423 = vmatprep.subr.mxu0 0.0
  %2424 = vmatpush1.msra.mxu0 %v2398
  %2425 = vmatprep.subr.mxu0 0.0
  %2426 = vmatpush1.msra.mxu0 %v2399
  %2427 = vmatprep.subr.mxu0 0.0
  %2428 = vmatpush1.msra.mxu0 %v2400
  %2429 = vmatprep.subr.mxu0 0.0
  %2430 = vmatpush1.msra.mxu0 %v2401
  %2431 = vmatprep.subr.mxu0 0.0
  %2432 = vmatpush1.msra.mxu0 %v2402
  %2433 = vmatprep.subr.mxu0 0.0
  %2434 = vmatpush1.msra.mxu0 %v2403
  %2435 = vmatprep.subr.mxu0 0.0
  %2436 = vmatpush1.msra.mxu0 %v2404
  %2437 = vmatprep.subr.mxu0 0.0
  %2438 = vmatpush1.msra.mxu0 0.0
  %2439 = vmatprep.subr.mxu0 0.0
  %2440 = vmatpush1.msra.mxu0 0.0
  %2441 = vmatprep.subr.mxu0 0.0
  %2442 = vmatpush1.msra.mxu0 0.0
  %2443 = vmatprep.subr.mxu0 0.0
  %2444 = vmatpush1.msra.mxu0 0.0
  %2445 = vmatprep.subr.mxu0 0.0
  %2446 = vmatpush1.msra.mxu0 0.0
  %2447 = vmatprep.subr.mxu0 0.0
  %2448 = vmatpush1.msra.mxu0 0.0
  %2449 = vmatprep.subr.mxu0 0.0
  %2450 = vmatpush1.msra.mxu0 0.0
  %2451 = vmatprep.subr.mxu0 0.0
  %2452 = vmatpush1.msra.mxu0 0.0
  %2453 = vmatprep.subr.mxu0 0.0
  %2454 = vmatpush1.msra.mxu0 0.0
  %2455 = vmatprep.subr.mxu0 0.0
  %2456 = vmatpush1.msra.mxu0 0.0
  %2457 = vmatprep.subr.mxu0 0.0
  %2458 = vmatpush1.msra.mxu0 0.0
  %2459 = vmatprep.subr.mxu0 0.0
  %2460 = vmatpush1.msra.mxu0 0.0
  %2461 = vmatprep.subr.mxu0 0.0
  %2462 = vmatpush1.msra.mxu0 0.0
  %2463 = vmatprep.subr.mxu0 0.0
  %2464 = vmatpush1.msra.mxu0 0.0
  %2465 = vmatprep.subr.mxu0 0.0
  %2466 = vmatpush1.msra.mxu0 0.0
  %2467 = vmatprep.subr.mxu0 0.0
  %2468 = vmatpush1.msra.mxu0 0.0
  %2469 = vmatprep.mubr.f32.mxu0 0.0
  %2470 = vmatmul.mubr.f32.gmra.mrb[0].mxu0 %v2384
  %v2471 = vpop.f32.mrb[0].mxu0
  %v2472 = vadd.f32 0.0, %v2471
  %v2473 = vpop.f32.mrb[0].mxu0
  %2474 = vmatprep.mubr.f32.mxu0 0.0
  %2475 = vmatmul.mubr.f32.gmra.mrb[0].mxu0 %v2385
  %v2476 = vpop.f32.mrb[0].mxu0
  %v2477 = vadd.f32 0.0, %v2476
  %v2478 = vpop.f32.mrb[0].mxu0
  %2479 = vmatprep.mubr.f32.mxu0 0.0
  %2480 = vmatmul.mubr.f32.gmra.mrb[0].mxu0 %v2386
  %v2481 = vpop.f32.mrb[0].mxu0
  %v2482 = vadd.f32 0.0, %v2481
  %v2483 = vpop.f32.mrb[0].mxu0
  %2484 = vmatprep.mubr.f32.mxu0 0.0
  %2485 = vmatmul.mubr.f32.gmra.mrb[0].mxu0 %v2387
  %v2486 = vpop.f32.mrb[0].mxu0
  %v2487 = vadd.f32 0.0, %v2486
  %v2488 = vpop.f32.mrb[0].mxu0
  %2489 = vdwg.mxu0
  %v2490 = vxor.u32 %v2360, 2147483648
  %v2491 = vxor.u32 %v2366, 2147483648
  %v2492 = vxor.u32 %v2372, 2147483648
  %v2493 = vxor.u32 %v2378, 2147483648
  %v2494 = vmul.f32 %v2490, 1.442695
  %v2495 = vpow.pop %v2494
  %v2496 = vmul.f32 %v2491, 1.442695
  %v2497 = vpow.pop %v2496
  %v2498 = vmul.f32 %v2492, 1.442695
  %v2499 = vpow.pop %v2498
  %v2500 = vmul.f32 %v2493, 1.442695
  %v2501 = vpow.pop %v2500
  %v2502 = vadd.f32 %v2495, 1.0
  %v2503 = vadd.f32 %v2497, 1.0
  %v2504 = vadd.f32 %v2499, 1.0
  %v2505 = vadd.f32 %v2501, 1.0
  %v2506 = vrcp.pop %v2502
  %v2507 = vmul.f32 1.0, %v2506
  %v2508 = vrcp.pop %v2503
  %v2509 = vmul.f32 1.0, %v2508
  %v2510 = vrcp.pop %v2504
  %v2511 = vmul.f32 1.0, %v2510
  %v2512 = vrcp.pop %v2505
  %v2513 = vmul.f32 1.0, %v2512
  %v2514 = vmul.f32 %v2507, %v2472
  %v2515 = vmul.f32 %v2509, %v2477
  %v2516 = vmul.f32 %v2511, %v2482
  %v2517 = vmul.f32 %v2513, %v2487
  %v2518 = vadd.f32 %v2150, %v2514
  %v2519 = vadd.f32 %v2151, %v2515
  %v2520 = vadd.f32 %v2152, %v2516
  %v2521 = vadd.f32 %v2153, %v2517
  %v2522 = vld [vmem:[%s13] sm:$0x1]
  %v2523 = vld [vmem:[%s14] sm:$0x1]
  %v2524 = vsel %vm370, %v2518, 0.0
  %2525 = vadd.xlane.f32.xlu0 %v2524
  %v2526 = vpop.xlane.xlu0 %2525
  %v2527 = vsel %vm370, %v2519, 0.0
  %2528 = vadd.xlane.f32.xlu0 %v2527
  %v2529 = vpop.xlane.xlu0 %2528
  %v2530 = vsel %vm370, %v2520, 0.0
  %2531 = vadd.xlane.f32.xlu0 %v2530
  %v2532 = vpop.xlane.xlu0 %2531
  %v2533 = vsel %vm370, %v2521, 0.0
  %2534 = vadd.xlane.f32.xlu0 %v2533
  %v2535 = vpop.xlane.xlu0 %2534
  %v2536 = vmul.f32 %v2526, %v518
  %v2537 = vmul.f32 %v2529, %v518
  %v2538 = vmul.f32 %v2532, %v518
  %v2539 = vmul.f32 %v2535, %v518
  %v2540 = vsub.f32 %v2518, %v2536
  %v2541 = vsub.f32 %v2519, %v2537
  %v2542 = vsub.f32 %v2520, %v2538
  %v2543 = vsub.f32 %v2521, %v2539
  %v2544 = vmul.f32 %v2540, %v2540
  %v2545 = vmul.f32 %v2541, %v2541
  %v2546 = vmul.f32 %v2542, %v2542
  %v2547 = vmul.f32 %v2543, %v2543
  %v2548 = vsel %vm370, %v2544, 0.0
  %2549 = vadd.xlane.f32.xlu0 %v2548
  %v2550 = vpop.xlane.xlu0 %2549
  %v2551 = vsel %vm370, %v2545, 0.0
  %2552 = vadd.xlane.f32.xlu0 %v2551
  %v2553 = vpop.xlane.xlu0 %2552
  %v2554 = vsel %vm370, %v2546, 0.0
  %2555 = vadd.xlane.f32.xlu0 %v2554
  %v2556 = vpop.xlane.xlu0 %2555
  %v2557 = vsel %vm370, %v2547, 0.0
  %2558 = vadd.xlane.f32.xlu0 %v2557
  %v2559 = vpop.xlane.xlu0 %2558
  %v2560 = vmul.f32 %v2550, %v518
  %v2561 = vmul.f32 %v2553, %v518
  %v2562 = vmul.f32 %v2556, %v518
  %v2563 = vmul.f32 %v2559, %v518
  %v2564 = vadd.f32 %v2560, 1e-05
  %v2565 = vadd.f32 %v2561, 1e-05
  %v2566 = vadd.f32 %v2562, 1e-05
  %v2567 = vadd.f32 %v2563, 1e-05
  %v2568 = vrsqrt.pop %v2564
  %v2569 = vrsqrt.pop %v2565
  %v2570 = vrsqrt.pop %v2566
  %v2571 = vrsqrt.pop %v2567
  %v2572 = vmul.f32 %v2540, %v2568
  %v2573 = vmul.f32 %v2541, %v2569
  %v2574 = vmul.f32 %v2542, %v2570
  %v2575 = vmul.f32 %v2543, %v2571
  %v2577 = vlaneseq
  %v2578 = vshrl.u32 %v2577, 7
  %v2579 = vsub.s32 0, %v2578
  %v2580 = vrot.slane %v2522, %v2579
  %v2582 = vmul.f32 %v2572, %v2580
  %v2583 = vmul.f32 %v2573, %v2580
  %v2584 = vmul.f32 %v2574, %v2580
  %v2585 = vmul.f32 %v2575, %v2580
  %v2587 = vlaneseq
  %v2588 = vshrl.u32 %v2587, 7
  %v2589 = vsub.s32 0, %v2588
  %v2590 = vrot.slane %v2523, %v2589
  %v2592 = vadd.f32 %v2582, %v2590
  %v2593 = vadd.f32 %v2583, %v2590
  %v2594 = vadd.f32 %v2584, %v2590
  %v2595 = vadd.f32 %v2585, %v2590
  %v2596 = vld [vmem:[%s15] sm:$0xff]
  %v2597 = vld [vmem:[%s15 + $0x8] sm:$0xff]
  %v2598 = vld [vmem:[%s15 + $0x10] sm:$0xff]
  %v2599 = vld [vmem:[%s15 + $0x18] sm:$0xff]
  %v2600 = vld [vmem:[%s16] sm:$0x1]
  %v2602 = vlaneseq
  %v2603 = vshrl.u32 %v2602, 7
  %v2604 = vsub.s32 0, %v2603
  %v2605 = vrot.slane %v2600, %v2604
  %v2608 = vsel %vm370, %v2592, 0
  %v2611 = vsel %vm370, %v2593, 0
  %v2614 = vsel %vm370, %v2594, 0
  %v2617 = vsel %vm370, %v2595, 0
  %2619 = vmatprep.subr.mxu0 0.0
  %2620 = vmatpush1.msra.mxu0 %v2596
  %2621 = vmatprep.subr.mxu0 0.0
  %2622 = vmatpush1.msra.mxu0 %v2597
  %2623 = vmatprep.subr.mxu0 0.0
  %2624 = vmatpush1.msra.mxu0 %v2598
  %2625 = vmatprep.subr.mxu0 0.0
  %2626 = vmatpush1.msra.mxu0 %v2599
  %2627 = vmatprep.subr.mxu0 0.0
  %2628 = vmatpush1.msra.mxu0 0.0
  %2629 = vmatprep.subr.mxu0 0.0
  %2630 = vmatpush1.msra.mxu0 0.0
  %2631 = vmatprep.subr.mxu0 0.0
  %2632 = vmatpush1.msra.mxu0 0.0
  %2633 = vmatprep.subr.mxu0 0.0
  %2634 = vmatpush1.msra.mxu0 0.0
  %2635 = vmatprep.subr.mxu0 0.0
  %2636 = vmatpush1.msra.mxu0 0.0
  %2637 = vmatprep.subr.mxu0 0.0
  %2638 = vmatpush1.msra.mxu0 0.0
  %2639 = vmatprep.subr.mxu0 0.0
  %2640 = vmatpush1.msra.mxu0 0.0
  %2641 = vmatprep.subr.mxu0 0.0
  %2642 = vmatpush1.msra.mxu0 0.0
  %2643 = vmatprep.subr.mxu0 0.0
  %2644 = vmatpush1.msra.mxu0 0.0
  %2645 = vmatprep.subr.mxu0 0.0
  %2646 = vmatpush1.msra.mxu0 0.0
  %2647 = vmatprep.subr.mxu0 0.0
  %2648 = vmatpush1.msra.mxu0 0.0
  %2649 = vmatprep.subr.mxu0 0.0
  %2650 = vmatpush1.msra.mxu0 0.0
  %2651 = vmatprep.subr.mxu0 0.0
  %2652 = vmatpush1.msra.mxu0 0.0
  %2653 = vmatprep.subr.mxu0 0.0
  %2654 = vmatpush1.msra.mxu0 0.0
  %2655 = vmatprep.subr.mxu0 0.0
  %2656 = vmatpush1.msra.mxu0 0.0
  %2657 = vmatprep.subr.mxu0 0.0
  %2658 = vmatpush1.msra.mxu0 0.0
  %2659 = vmatprep.subr.mxu0 0.0
  %2660 = vmatpush1.msra.mxu0 0.0
  %2661 = vmatprep.subr.mxu0 0.0
  %2662 = vmatpush1.msra.mxu0 0.0
  %2663 = vmatprep.subr.mxu0 0.0
  %2664 = vmatpush1.msra.mxu0 0.0
  %2665 = vmatprep.subr.mxu0 0.0
  %2666 = vmatpush1.msra.mxu0 0.0
  %2667 = vmatprep.subr.mxu0 0.0
  %2668 = vmatpush1.msra.mxu0 0.0
  %2669 = vmatprep.subr.mxu0 0.0
  %2670 = vmatpush1.msra.mxu0 0.0
  %2671 = vmatprep.subr.mxu0 0.0
  %2672 = vmatpush1.msra.mxu0 0.0
  %2673 = vmatprep.subr.mxu0 0.0
  %2674 = vmatpush1.msra.mxu0 0.0
  %2675 = vmatprep.subr.mxu0 0.0
  %2676 = vmatpush1.msra.mxu0 0.0
  %2677 = vmatprep.subr.mxu0 0.0
  %2678 = vmatpush1.msra.mxu0 0.0
  %2679 = vmatprep.subr.mxu0 0.0
  %2680 = vmatpush1.msra.mxu0 0.0
  %2681 = vmatprep.subr.mxu0 0.0
  %2682 = vmatpush1.msra.mxu0 0.0
  %2683 = vmatprep.mubr.f32.mxu0 0.0
  %2684 = vmatmul.mubr.f32.gmra.mrb[0].mxu0 %v2608
  %v2685 = vpop.f32.mrb[0].mxu0
  %v2686 = vadd.f32 %v2605, %v2685
  %v2687 = vpop.f32.mrb[0].mxu0
  %2688 = vmatprep.mubr.f32.mxu0 0.0
  %2689 = vmatmul.mubr.f32.gmra.mrb[0].mxu0 %v2611
  %v2690 = vpop.f32.mrb[0].mxu0
  %v2691 = vadd.f32 %v2605, %v2690
  %v2692 = vpop.f32.mrb[0].mxu0
  %2693 = vmatprep.mubr.f32.mxu0 0.0
  %2694 = vmatmul.mubr.f32.gmra.mrb[0].mxu0 %v2614
  %v2695 = vpop.f32.mrb[0].mxu0
  %v2696 = vadd.f32 %v2605, %v2695
  %v2697 = vpop.f32.mrb[0].mxu0
  %2698 = vmatprep.mubr.f32.mxu0 0.0
  %2699 = vmatmul.mubr.f32.gmra.mrb[0].mxu0 %v2617
  %v2700 = vpop.f32.mrb[0].mxu0
  %v2701 = vadd.f32 %v2605, %v2700
  %v2702 = vpop.f32.mrb[0].mxu0
  %2703 = vdwg.mxu0
  %v2704 = vmax.f32 %v2686, 0.0
  %v2705 = vmax.f32 %v2691, 0.0
  %v2706 = vmax.f32 %v2696, 0.0
  %v2707 = vmax.f32 %v2701, 0.0
  %v2708 = vld [vmem:[%s17] sm:$0xff]
  %v2709 = vld [vmem:[%s17 + $0x8] sm:$0xff]
  %v2710 = vld [vmem:[%s18] sm:$0x1]
  %v2712 = vlaneseq
  %v2713 = vshrl.u32 %v2712, 7
  %v2714 = vsub.s32 0, %v2713
  %v2715 = vrot.slane %v2710, %v2714
  %v2718 = vsel %vm365, %v2704, 0
  %v2721 = vsel %vm365, %v2705, 0
  %v2724 = vsel %vm365, %v2706, 0
  %v2727 = vsel %vm365, %v2707, 0
  %2729 = vmatprep.subr.mxu0 0.0
  %2730 = vmatpush1.msra.mxu0 %v2708
  %2731 = vmatprep.subr.mxu0 0.0
  %2732 = vmatpush1.msra.mxu0 %v2709
  %2733 = vmatprep.subr.mxu0 0.0
  %2734 = vmatpush1.msra.mxu0 0.0
  %2735 = vmatprep.subr.mxu0 0.0
  %2736 = vmatpush1.msra.mxu0 0.0
  %2737 = vmatprep.subr.mxu0 0.0
  %2738 = vmatpush1.msra.mxu0 0.0
  %2739 = vmatprep.subr.mxu0 0.0
  %2740 = vmatpush1.msra.mxu0 0.0
  %2741 = vmatprep.subr.mxu0 0.0
  %2742 = vmatpush1.msra.mxu0 0.0
  %2743 = vmatprep.subr.mxu0 0.0
  %2744 = vmatpush1.msra.mxu0 0.0
  %2745 = vmatprep.subr.mxu0 0.0
  %2746 = vmatpush1.msra.mxu0 0.0
  %2747 = vmatprep.subr.mxu0 0.0
  %2748 = vmatpush1.msra.mxu0 0.0
  %2749 = vmatprep.subr.mxu0 0.0
  %2750 = vmatpush1.msra.mxu0 0.0
  %2751 = vmatprep.subr.mxu0 0.0
  %2752 = vmatpush1.msra.mxu0 0.0
  %2753 = vmatprep.subr.mxu0 0.0
  %2754 = vmatpush1.msra.mxu0 0.0
  %2755 = vmatprep.subr.mxu0 0.0
  %2756 = vmatpush1.msra.mxu0 0.0
  %2757 = vmatprep.subr.mxu0 0.0
  %2758 = vmatpush1.msra.mxu0 0.0
  %2759 = vmatprep.subr.mxu0 0.0
  %2760 = vmatpush1.msra.mxu0 0.0
  %2761 = vmatprep.subr.mxu0 0.0
  %2762 = vmatpush1.msra.mxu0 0.0
  %2763 = vmatprep.subr.mxu0 0.0
  %2764 = vmatpush1.msra.mxu0 0.0
  %2765 = vmatprep.subr.mxu0 0.0
  %2766 = vmatpush1.msra.mxu0 0.0
  %2767 = vmatprep.subr.mxu0 0.0
  %2768 = vmatpush1.msra.mxu0 0.0
  %2769 = vmatprep.subr.mxu0 0.0
  %2770 = vmatpush1.msra.mxu0 0.0
  %2771 = vmatprep.subr.mxu0 0.0
  %2772 = vmatpush1.msra.mxu0 0.0
  %2773 = vmatprep.subr.mxu0 0.0
  %2774 = vmatpush1.msra.mxu0 0.0
  %2775 = vmatprep.subr.mxu0 0.0
  %2776 = vmatpush1.msra.mxu0 0.0
  %2777 = vmatprep.subr.mxu0 0.0
  %2778 = vmatpush1.msra.mxu0 0.0
  %2779 = vmatprep.subr.mxu0 0.0
  %2780 = vmatpush1.msra.mxu0 0.0
  %2781 = vmatprep.subr.mxu0 0.0
  %2782 = vmatpush1.msra.mxu0 0.0
  %2783 = vmatprep.subr.mxu0 0.0
  %2784 = vmatpush1.msra.mxu0 0.0
  %2785 = vmatprep.subr.mxu0 0.0
  %2786 = vmatpush1.msra.mxu0 0.0
  %2787 = vmatprep.subr.mxu0 0.0
  %2788 = vmatpush1.msra.mxu0 0.0
  %2789 = vmatprep.subr.mxu0 0.0
  %2790 = vmatpush1.msra.mxu0 0.0
  %2791 = vmatprep.subr.mxu0 0.0
  %2792 = vmatpush1.msra.mxu0 0.0
  %2793 = vmatprep.mubr.f32.mxu0 0.0
  %2794 = vmatmul.mubr.f32.gmra.mrb[0].mxu0 %v2718
  %v2795 = vpop.f32.mrb[0].mxu0
  %v2796 = vadd.f32 %v2715, %v2795
  %v2797 = vpop.f32.mrb[0].mxu0
  %2798 = vmatprep.mubr.f32.mxu0 0.0
  %2799 = vmatmul.mubr.f32.gmra.mrb[0].mxu0 %v2721
  %v2800 = vpop.f32.mrb[0].mxu0
  %v2801 = vadd.f32 %v2715, %v2800
  %v2802 = vpop.f32.mrb[0].mxu0
  %2803 = vmatprep.mubr.f32.mxu0 0.0
  %2804 = vmatmul.mubr.f32.gmra.mrb[0].mxu0 %v2724
  %v2805 = vpop.f32.mrb[0].mxu0
  %v2806 = vadd.f32 %v2715, %v2805
  %v2807 = vpop.f32.mrb[0].mxu0
  %2808 = vmatprep.mubr.f32.mxu0 0.0
  %2809 = vmatmul.mubr.f32.gmra.mrb[0].mxu0 %v2727
  %v2810 = vpop.f32.mrb[0].mxu0
  %v2811 = vadd.f32 %v2715, %v2810
  %v2812 = vpop.f32.mrb[0].mxu0
  %2813 = vdwg.mxu0
  %v2814 = vmax.f32 %v2796, 0.0
  %v2815 = vmax.f32 %v2801, 0.0
  %v2816 = vmax.f32 %v2806, 0.0
  %v2817 = vmax.f32 %v2811, 0.0
  %v2818 = vld [vmem:[%s19] sm:$0x1]
  %v2820 = vlaneseq
  %v2821 = vshrl.u32 %v2820, 7
  %v2822 = vsub.s32 0, %v2821
  %v2823 = vrot.slane %v2818, %v2822
  %v2825 = vmul.f32 %v2814, %v2823
  %v2826 = vmul.f32 %v2815, %v2823
  %v2827 = vmul.f32 %v2816, %v2823
  %v2828 = vmul.f32 %v2817, %v2823
  %vm2829 = vcmask 64512
  %v2830 = vsel %vm2829, %v2825, 0.0
  %2831 = vadd.xlane.f32.xlu0 %v2830
  %v2832 = vpop.xlane.xlu0 %2831
  %v2833 = vsel %vm2829, %v2826, 0.0
  %2834 = vadd.xlane.f32.xlu0 %v2833
  %v2835 = vpop.xlane.xlu0 %2834
  %v2836 = vsel %vm2829, %v2827, 0.0
  %2837 = vadd.xlane.f32.xlu0 %v2836
  %v2838 = vpop.xlane.xlu0 %2837
  %v2839 = vsel %vm2829, %v2828, 0.0
  %2840 = vadd.xlane.f32.xlu0 %v2839
  %v2841 = vpop.xlane.xlu0 %2840
  %v2842 = vld [vmem:[#allocation2] sm:$0x1]
  %v2844 = vlaneseq
  %v2845 = vshrl.u32 %v2844, 7
  %v2846 = vsub.s32 0, %v2845
  %v2847 = vrot.slane %v2842, %v2846
  %v2849 = vadd.f32 %v2832, %v2847
  %v2850 = vadd.f32 %v2835, %v2847
  %v2851 = vadd.f32 %v2838, %v2847
  %v2852 = vadd.f32 %v2841, %v2847
  %vm2853 = vcmask 7168
  %2854 = vst.msk [vmem:[%s21] sm:$0xff] %vm2853, %v2849
  %2855 = vst.msk [vmem:[%s21 + $0x8] sm:$0xff] %vm2853, %v2850
  %2856 = vst.msk [vmem:[%s21 + $0x10] sm:$0xff] %vm2853, %v2851
  %2857 = vst.msk [vmem:[%s21 + $0x18] sm:$0xff] %vm2853, %v2852
  // Predicated region
  $region86: #{rwkv_forward.1} parent=0 // pred_check
    _
  $region87: #{rwkv_forward.1} parent=0 // pred_check_branch
    %2859 = sbr.rel (0) target = $region89
  $region88: #{rwkv_forward.1} parent=0 // pred_region
    _
  $region89: #{rwkv_forward.1} parent=0 // pred_fallthru
    _
  // Predicated region
  $region90: #{rwkv_forward.1} parent=0 // pred_check
    _
  $region91: #{rwkv_forward.1} parent=0 // pred_check_branch
    %2861 = sbr.rel (0) target = $region93
  $region92: #{rwkv_forward.1} parent=0 // pred_region
    _
  $region93: #{rwkv_forward.1} parent=0 // pred_fallthru
    _

</llo_original>
